<compile_context>
chip_gen: v6e
topology: v6e:2x2x1
jax: 0.10.0
libtpu: 0.0.40
codegen_flags: <defaults>
</compile_context>

<pallas_src>
import jax
import jax.numpy as jnp
from jax.experimental import pallas as pl
from jax.experimental.pallas import tpu as pltpu

IMAGE_SIZE = 784
HID1 = 256
H_DIM = 512
Z_DIM = 2


def _round_up(n, m):
    return ((n + m - 1) // m) * m


def vae_kernel(
    x_ref, eps_ref,
    w1_ref, b1_ref,        # fc1:       784 -> 256   (bf16 weight, f32 bias)
    w1h_ref, b1h_ref,      # fc1_hiden: 256 -> 512
    w23_ref, b23_ref,      # fc2|fc3 fused: 512 -> 4 (mu | log_var)
    w4_ref, b4_ref,        # fc4:       2   -> 512   (f32, VPU outer product)
    w5_ref, b5_ref,        # fc5:       512 -> 784
    xr_ref, mu_ref, lv_ref,
):
    f32 = jnp.float32
    bf16 = jnp.bfloat16

    x = x_ref[...].astype(bf16)

    # ---- encode ----
    h = jnp.dot(x, w1_ref[...], preferred_element_type=f32) + b1_ref[...]
    h = jnp.maximum(h, 0.0).astype(bf16)                       # relu
    t = jnp.dot(h, w1h_ref[...], preferred_element_type=f32) + b1h_ref[...]
    t = jnp.tanh(t).astype(bf16)

    # fused mu / log_var heads: one (512 -> 4) matmul, then lane slices
    mulv = jnp.dot(t, w23_ref[...], preferred_element_type=f32) + b23_ref[...]
    mu = mulv[:, 0:Z_DIM]
    lv = mulv[:, Z_DIM:2 * Z_DIM]

    # ---- reparameterize (f32) ----
    z = mu + eps_ref[...] * jnp.exp(lv * 0.5)

    # ---- decode ----
    # K=2 contraction as a VPU outer product; keeps the MXU free for fc5.
    w4 = w4_ref[...]                                            # (2, 512) f32
    h2 = z[:, 0:1] * w4[0:1, :] + z[:, 1:2] * w4[1:2, :] + b4_ref[...]
    h2 = jnp.maximum(h2, 0.0).astype(bf16)                      # relu

    logits = jnp.dot(h2, w5_ref[...], preferred_element_type=f32) + b5_ref[...]
    xr_ref[...] = jax.nn.sigmoid(logits)
    mu_ref[...] = mu
    lv_ref[...] = lv


def vae_forward(x, eps, params, *, batch_tile=256):
    """x: (B, 784) f32, eps: (B, 2) f32 reparameterization noise."""
    B = x.shape[0]
    tile_b = min(batch_tile, _round_up(B, 8))
    b_pad = _round_up(B, tile_b)
    if b_pad != B:
        x = jnp.pad(x, ((0, b_pad - B), (0, 0)))
        eps = jnp.pad(eps, ((0, b_pad - B), (0, 0)))
    grid = (b_pad // tile_b,)

    def resident(shape):
        # constant block index -> stays resident in VMEM across grid steps
        return pl.BlockSpec(shape, lambda i: (0, 0))

    in_specs = [
        pl.BlockSpec((tile_b, IMAGE_SIZE), lambda i: (i, 0)),   # x tile (pipelined)
        pl.BlockSpec((tile_b, Z_DIM), lambda i: (i, 0)),        # eps tile
        resident((IMAGE_SIZE, HID1)), resident((1, HID1)),
        resident((HID1, H_DIM)), resident((1, H_DIM)),
        resident((H_DIM, 2 * Z_DIM)), resident((1, 2 * Z_DIM)),
        resident((Z_DIM, H_DIM)), resident((1, H_DIM)),
        resident((H_DIM, IMAGE_SIZE)), resident((1, IMAGE_SIZE)),
    ]
    out_specs = (
        pl.BlockSpec((tile_b, IMAGE_SIZE), lambda i: (i, 0)),
        pl.BlockSpec((tile_b, Z_DIM), lambda i: (i, 0)),
        pl.BlockSpec((tile_b, Z_DIM), lambda i: (i, 0)),
    )

    xr, mu, lv = pl.pallas_call(
        vae_kernel,
        grid=grid,
        in_specs=in_specs,
        out_specs=out_specs,
        out_shape=(
            jax.ShapeDtypeStruct((b_pad, IMAGE_SIZE), jnp.float32),  # x_reconst
            jax.ShapeDtypeStruct((b_pad, Z_DIM), jnp.float32),       # mu
            jax.ShapeDtypeStruct((b_pad, Z_DIM), jnp.float32),       # log_var
        ),
        compiler_params=pltpu.CompilerParams(
            dimension_semantics=("parallel",),   # shard batch tiles across TCs (v7x)
        ),
    )(x, eps,
      params["w1"], params["b1"], params["w1h"], params["b1h"],
      params["w23"], params["b23"], params["w4"], params["b4"],
      params["w5"], params["b5"])

    if b_pad != B:
        xr, mu, lv = xr[:B], mu[:B], lv[:B]
    return xr, mu, lv


def init_params(key):
    """Deterministic synthetic init; weights stored (in_features, out_features)
    so the kernel computes y = x @ W + b. Big matmul weights in bf16."""
    layer_dims = [("1", IMAGE_SIZE, HID1), ("1h", HID1, H_DIM),
                  ("2", H_DIM, Z_DIM), ("3", H_DIM, Z_DIM),
                  ("4", Z_DIM, H_DIM), ("5", H_DIM, IMAGE_SIZE)]
    raw = {}
    keys = jax.random.split(key, len(layer_dims))
    for k, (name, din, dout) in zip(keys, layer_dims):
        wk, bk = jax.random.split(k)
        scale = 1.0 / jnp.sqrt(jnp.float32(din))
        raw[f"w{name}"] = jax.random.uniform(wk, (din, dout), jnp.float32, -scale, scale)
        raw[f"b{name}"] = jax.random.uniform(bk, (1, dout), jnp.float32, -scale, scale)

    bf16 = jnp.bfloat16
    return {
        "w1": raw["w1"].astype(bf16), "b1": raw["b1"],
        "w1h": raw["w1h"].astype(bf16), "b1h": raw["b1h"],
        # fused mu / log_var head: (512, 4), (1, 4)
        "w23": jnp.concatenate([raw["w2"], raw["w3"]], axis=1).astype(bf16),
        "b23": jnp.concatenate([raw["b2"], raw["b3"]], axis=1),
        # tiny decode-in weight kept f32 (used as a VPU outer product)
        "w4": raw["w4"], "b4": raw["b4"],
        "w5": raw["w5"].astype(bf16), "b5": raw["b5"],
    }


def vae_reference(x, eps, p):
    """Pure-JAX reference mirroring the kernel's bf16 matmul / f32 elementwise mix."""
    f32, bf16 = jnp.float32, jnp.bfloat16
    h = jnp.maximum(jnp.dot(x.astype(bf16), p["w1"], preferred_element_type=f32) + p["b1"], 0.0)
    t = jnp.tanh(jnp.dot(h.astype(bf16), p["w1h"], preferred_element_type=f32) + p["b1h"])
    mulv = jnp.dot(t.astype(bf16), p["w23"], preferred_element_type=f32) + p["b23"]
    mu, lv = mulv[:, :Z_DIM], mulv[:, Z_DIM:]
    z = mu + eps * jnp.exp(lv * 0.5)
    h2 = jnp.maximum(jnp.dot(z, p["w4"], preferred_element_type=f32) + p["b4"], 0.0)
    xr = jax.nn.sigmoid(jnp.dot(h2.astype(bf16), p["w5"], preferred_element_type=f32) + p["b5"])
    return xr, mu, lv


if __name__ == "__main__":
    key = jax.random.PRNGKey(0)
    pkey, xkey, ekey = jax.random.split(key, 3)
    params = init_params(pkey)

    # B not a multiple of the batch tile -> exercises padding + 2-step grid.
    B = 250
    x = jax.random.uniform(xkey, (B, IMAGE_SIZE), jnp.float32)   # "images" in [0,1)
    eps = jax.random.normal(ekey, (B, Z_DIM), jnp.float32)       # reparam noise

    fwd = jax.jit(lambda x, eps: vae_forward(x, eps, params, batch_tile=128))
    x_reconst, mu, log_var = jax.block_until_ready(fwd(x, eps))

    # sanity check against a pure-JAX reference with matching bf16 casts
    xr_ref, mu_ref, lv_ref = vae_reference(x, eps, params)
    assert x_reconst.shape == (B, IMAGE_SIZE)
    assert mu.shape == (B, Z_DIM) and log_var.shape == (B, Z_DIM)
    assert jnp.allclose(x_reconst, xr_ref, atol=5e-3, rtol=5e-3), \
        float(jnp.max(jnp.abs(x_reconst - xr_ref)))
    assert jnp.allclose(mu, mu_ref, atol=5e-3, rtol=5e-3), \
        float(jnp.max(jnp.abs(mu - mu_ref)))
    assert jnp.allclose(log_var, lv_ref, atol=5e-3, rtol=5e-3), \
        float(jnp.max(jnp.abs(log_var - lv_ref)))

    print("KERNEL_OK")
</pallas_src>

<mosaic_0001>
module attributes {stable_mosaic.version = 11 : i64} {
  func.func @vae_kernel(%arg0: i32, %arg1: memref<128x784xf32, #tpu.memory_space<vmem>>, %arg2: memref<128x2xf32, #tpu.memory_space<vmem>>, %arg3: memref<784x256xbf16, #tpu.memory_space<vmem>>, %arg4: memref<1x256xf32, #tpu.memory_space<vmem>>, %arg5: memref<256x512xbf16, #tpu.memory_space<vmem>>, %arg6: memref<1x512xf32, #tpu.memory_space<vmem>>, %arg7: memref<512x4xbf16, #tpu.memory_space<vmem>>, %arg8: memref<1x4xf32, #tpu.memory_space<vmem>>, %arg9: memref<2x512xf32, #tpu.memory_space<vmem>>, %arg10: memref<1x512xf32, #tpu.memory_space<vmem>>, %arg11: memref<512x784xbf16, #tpu.memory_space<vmem>>, %arg12: memref<1x784xf32, #tpu.memory_space<vmem>>, %arg13: memref<128x784xf32, #tpu.memory_space<vmem>>, %arg14: memref<128x2xf32, #tpu.memory_space<vmem>>, %arg15: memref<128x2xf32, #tpu.memory_space<vmem>>) attributes {dimension_semantics = [#tpu.dimension_semantics<parallel>], iteration_bounds = array<i64: 2>, scalar_prefetch = 0 : i64, scratch_operands = 0 : i64, tpu.core_type = #tpu.core_type<tc>, window_params = [{transform_indices = @transform_0, window_bounds = array<i64: 128, 784>}, {transform_indices = @transform_1, window_bounds = array<i64: 128, 2>}, {pipeline_mode = #tpu.pipeline_mode<synchronous>, transform_indices = @transform_2, window_bounds = array<i64: 784, 256>}, {pipeline_mode = #tpu.pipeline_mode<synchronous>, transform_indices = @transform_3, window_bounds = array<i64: 1, 256>}, {pipeline_mode = #tpu.pipeline_mode<synchronous>, transform_indices = @transform_4, window_bounds = array<i64: 256, 512>}, {pipeline_mode = #tpu.pipeline_mode<synchronous>, transform_indices = @transform_5, window_bounds = array<i64: 1, 512>}, {pipeline_mode = #tpu.pipeline_mode<synchronous>, transform_indices = @transform_6, window_bounds = array<i64: 512, 4>}, {pipeline_mode = #tpu.pipeline_mode<synchronous>, transform_indices = @transform_7, window_bounds = array<i64: 1, 4>}, {pipeline_mode = #tpu.pipeline_mode<synchronous>, transform_indices = @transform_8, window_bounds = array<i64: 2, 512>}, {pipeline_mode = #tpu.pipeline_mode<synchronous>, transform_indices = @transform_9, window_bounds = array<i64: 1, 512>}, {pipeline_mode = #tpu.pipeline_mode<synchronous>, transform_indices = @transform_10, window_bounds = array<i64: 512, 784>}, {pipeline_mode = #tpu.pipeline_mode<synchronous>, transform_indices = @transform_11, window_bounds = array<i64: 1, 784>}, {transform_indices = @transform_12, window_bounds = array<i64: 128, 784>}, {transform_indices = @transform_13, window_bounds = array<i64: 128, 2>}, {transform_indices = @transform_14, window_bounds = array<i64: 128, 2>}]} {
    %c0 = arith.constant 0 : index
    %c0_0 = arith.constant 0 : index
    %0 = vector.load %arg1[%c0, %c0_0] : memref<128x784xf32, #tpu.memory_space<vmem>>, vector<128x784xf32>
    %1 = arith.truncf %0 : vector<128x784xf32> to vector<128x784xbf16>
    %c0_1 = arith.constant 0 : index
    %c0_2 = arith.constant 0 : index
    %2 = vector.load %arg3[%c0_1, %c0_2] : memref<784x256xbf16, #tpu.memory_space<vmem>>, vector<784x256xbf16>
    %cst = arith.constant dense<0.000000e+00> : vector<128x256xf32>
    %3 = tpu.matmul %1, %2, %cst {dimension_numbers = #tpu.dot_dimension_numbers<[1], [0], [0], [1], [0, 0, 1, 1], [], []>} : vector<128x784xbf16>, vector<784x256xbf16>, vector<128x256xf32> -> vector<128x256xf32>
    %c0_3 = arith.constant 0 : index
    %c0_4 = arith.constant 0 : index
    %4 = vector.load %arg4[%c0_3, %c0_4] : memref<1x256xf32, #tpu.memory_space<vmem>>, vector<1x256xf32>
    %5 = vector.broadcast %4 : vector<1x256xf32> to vector<128x256xf32>
    %6 = arith.addf %3, %5 : vector<128x256xf32>
    %cst_5 = arith.constant 0.000000e+00 : f32
    %7 = vector.broadcast %cst_5 : f32 to vector<128x256xf32>
    %8 = arith.maximumf %6, %7 : vector<128x256xf32>
    %9 = arith.truncf %8 : vector<128x256xf32> to vector<128x256xbf16>
    %c0_6 = arith.constant 0 : index
    %c0_7 = arith.constant 0 : index
    %10 = vector.load %arg5[%c0_6, %c0_7] : memref<256x512xbf16, #tpu.memory_space<vmem>>, vector<256x512xbf16>
    %cst_8 = arith.constant dense<0.000000e+00> : vector<128x512xf32>
    %11 = tpu.matmul %9, %10, %cst_8 {dimension_numbers = #tpu.dot_dimension_numbers<[1], [0], [0], [1], [0, 0, 1, 1], [], []>} : vector<128x256xbf16>, vector<256x512xbf16>, vector<128x512xf32> -> vector<128x512xf32>
    %c0_9 = arith.constant 0 : index
    %c0_10 = arith.constant 0 : index
    %12 = vector.load %arg6[%c0_9, %c0_10] : memref<1x512xf32, #tpu.memory_space<vmem>>, vector<1x512xf32>
    %13 = vector.broadcast %12 : vector<1x512xf32> to vector<128x512xf32>
    %14 = arith.addf %11, %13 : vector<128x512xf32>
    %15 = math.tanh %14 : vector<128x512xf32>
    %16 = arith.truncf %15 : vector<128x512xf32> to vector<128x512xbf16>
    %c0_11 = arith.constant 0 : index
    %c0_12 = arith.constant 0 : index
    %17 = vector.load %arg7[%c0_11, %c0_12] : memref<512x4xbf16, #tpu.memory_space<vmem>>, vector<512x4xbf16>
    %cst_13 = arith.constant dense<0.000000e+00> : vector<128x4xf32>
    %18 = tpu.matmul %16, %17, %cst_13 {dimension_numbers = #tpu.dot_dimension_numbers<[1], [0], [0], [1], [0, 0, 1, 1], [], []>} : vector<128x512xbf16>, vector<512x4xbf16>, vector<128x4xf32> -> vector<128x4xf32>
    %c0_14 = arith.constant 0 : index
    %c0_15 = arith.constant 0 : index
    %19 = vector.load %arg8[%c0_14, %c0_15] : memref<1x4xf32, #tpu.memory_space<vmem>>, vector<1x4xf32>
    %20 = vector.broadcast %19 : vector<1x4xf32> to vector<128x4xf32>
    %21 = arith.addf %18, %20 : vector<128x4xf32>
    %22 = vector.extract_strided_slice %21 {offsets = [0, 0], sizes = [128, 2], strides = [1, 1]} : vector<128x4xf32> to vector<128x2xf32>
    %23 = vector.extract_strided_slice %21 {offsets = [0, 2], sizes = [128, 2], strides = [1, 1]} : vector<128x4xf32> to vector<128x2xf32>
    %c0_16 = arith.constant 0 : index
    %c0_17 = arith.constant 0 : index
    %24 = vector.load %arg2[%c0_16, %c0_17] : memref<128x2xf32, #tpu.memory_space<vmem>>, vector<128x2xf32>
    %cst_18 = arith.constant 5.000000e-01 : f32
    %25 = vector.broadcast %cst_18 : f32 to vector<128x2xf32>
    %26 = arith.mulf %23, %25 : vector<128x2xf32>
    %27 = math.exp %26 : vector<128x2xf32>
    %28 = arith.mulf %24, %27 : vector<128x2xf32>
    %29 = arith.addf %22, %28 : vector<128x2xf32>
    %c0_19 = arith.constant 0 : index
    %c0_20 = arith.constant 0 : index
    %30 = vector.load %arg9[%c0_19, %c0_20] : memref<2x512xf32, #tpu.memory_space<vmem>>, vector<2x512xf32>
    %31 = vector.extract_strided_slice %29 {offsets = [0, 0], sizes = [128, 1], strides = [1, 1]} : vector<128x2xf32> to vector<128x1xf32>
    %32 = vector.extract_strided_slice %30 {offsets = [0, 0], sizes = [1, 512], strides = [1, 1]} : vector<2x512xf32> to vector<1x512xf32>
    %33 = vector.broadcast %31 : vector<128x1xf32> to vector<128x512xf32>
    %34 = vector.broadcast %32 : vector<1x512xf32> to vector<128x512xf32>
    %35 = arith.mulf %33, %34 : vector<128x512xf32>
    %36 = vector.extract_strided_slice %29 {offsets = [0, 1], sizes = [128, 1], strides = [1, 1]} : vector<128x2xf32> to vector<128x1xf32>
    %37 = vector.extract_strided_slice %30 {offsets = [1, 0], sizes = [1, 512], strides = [1, 1]} : vector<2x512xf32> to vector<1x512xf32>
    %38 = vector.broadcast %36 : vector<128x1xf32> to vector<128x512xf32>
    %39 = vector.broadcast %37 : vector<1x512xf32> to vector<128x512xf32>
    %40 = arith.mulf %38, %39 : vector<128x512xf32>
    %41 = arith.addf %35, %40 : vector<128x512xf32>
    %c0_21 = arith.constant 0 : index
    %c0_22 = arith.constant 0 : index
    %42 = vector.load %arg10[%c0_21, %c0_22] : memref<1x512xf32, #tpu.memory_space<vmem>>, vector<1x512xf32>
    %43 = vector.broadcast %42 : vector<1x512xf32> to vector<128x512xf32>
    %44 = arith.addf %41, %43 : vector<128x512xf32>
    %cst_23 = arith.constant 0.000000e+00 : f32
    %45 = vector.broadcast %cst_23 : f32 to vector<128x512xf32>
    %46 = arith.maximumf %44, %45 : vector<128x512xf32>
    %47 = arith.truncf %46 : vector<128x512xf32> to vector<128x512xbf16>
    %c0_24 = arith.constant 0 : index
    %c0_25 = arith.constant 0 : index
    %48 = vector.load %arg11[%c0_24, %c0_25] : memref<512x784xbf16, #tpu.memory_space<vmem>>, vector<512x784xbf16>
    %cst_26 = arith.constant dense<0.000000e+00> : vector<128x784xf32>
    %49 = tpu.matmul %47, %48, %cst_26 {dimension_numbers = #tpu.dot_dimension_numbers<[1], [0], [0], [1], [0, 0, 1, 1], [], []>} : vector<128x512xbf16>, vector<512x784xbf16>, vector<128x784xf32> -> vector<128x784xf32>
    %c0_27 = arith.constant 0 : index
    %c0_28 = arith.constant 0 : index
    %50 = vector.load %arg12[%c0_27, %c0_28] : memref<1x784xf32, #tpu.memory_space<vmem>>, vector<1x784xf32>
    %51 = vector.broadcast %50 : vector<1x784xf32> to vector<128x784xf32>
    %52 = arith.addf %49, %51 : vector<128x784xf32>
    %53 = arith.negf %52 : vector<128x784xf32>
    %54 = math.exp %53 : vector<128x784xf32>
    %cst_29 = arith.constant 1.000000e+00 : f32
    %55 = vector.broadcast %cst_29 : f32 to vector<128x784xf32>
    %56 = arith.addf %55, %54 : vector<128x784xf32>
    %57 = arith.divf %55, %56 : vector<128x784xf32>
    %c0_30 = arith.constant 0 : index
    %c0_31 = arith.constant 0 : index
    %58 = vector.load %arg13[%c0_30, %c0_31] : memref<128x784xf32, #tpu.memory_space<vmem>>, vector<128x784xf32>
    tpu.vector_store %arg13[%c0_30, %c0_31], %57 {strides = array<i32>} : memref<128x784xf32, #tpu.memory_space<vmem>>, vector<128x784xf32>,
    %c0_32 = arith.constant 0 : index
    %c0_33 = arith.constant 0 : index
    %59 = vector.load %arg14[%c0_32, %c0_33] : memref<128x2xf32, #tpu.memory_space<vmem>>, vector<128x2xf32>
    tpu.vector_store %arg14[%c0_32, %c0_33], %22 {strides = array<i32>} : memref<128x2xf32, #tpu.memory_space<vmem>>, vector<128x2xf32>,
    %c0_34 = arith.constant 0 : index
    %c0_35 = arith.constant 0 : index
    %60 = vector.load %arg15[%c0_34, %c0_35] : memref<128x2xf32, #tpu.memory_space<vmem>>, vector<128x2xf32>
    tpu.vector_store %arg15[%c0_34, %c0_35], %23 {strides = array<i32>} : memref<128x2xf32, #tpu.memory_space<vmem>>, vector<128x2xf32>,
    return
  }
  func.func @transform_0(%arg0: i32) -> (i32, i32) {
    %c0_i32 = arith.constant 0 : i32
    %c0_i32_0 = arith.constant 0 : i32
    return %arg0, %c0_i32 : i32, i32
  }
  func.func @transform_1(%arg0: i32) -> (i32, i32) {
    %c0_i32 = arith.constant 0 : i32
    %c0_i32_0 = arith.constant 0 : i32
    return %arg0, %c0_i32 : i32, i32
  }
  func.func @transform_2(%arg0: i32) -> (i32, i32) {
    %c0_i32 = arith.constant 0 : i32
    %c0_i32_0 = arith.constant 0 : i32
    %c0_i32_1 = arith.constant 0 : i32
    return %c0_i32, %c0_i32_0 : i32, i32
  }
  func.func @transform_3(%arg0: i32) -> (i32, i32) {
    %c0_i32 = arith.constant 0 : i32
    %c0_i32_0 = arith.constant 0 : i32
    %c0_i32_1 = arith.constant 0 : i32
    return %c0_i32, %c0_i32_0 : i32, i32
  }
  func.func @transform_4(%arg0: i32) -> (i32, i32) {
    %c0_i32 = arith.constant 0 : i32
    %c0_i32_0 = arith.constant 0 : i32
    %c0_i32_1 = arith.constant 0 : i32
    return %c0_i32, %c0_i32_0 : i32, i32
  }
  func.func @transform_5(%arg0: i32) -> (i32, i32) {
    %c0_i32 = arith.constant 0 : i32
    %c0_i32_0 = arith.constant 0 : i32
    %c0_i32_1 = arith.constant 0 : i32
    return %c0_i32, %c0_i32_0 : i32, i32
  }
  func.func @transform_6(%arg0: i32) -> (i32, i32) {
    %c0_i32 = arith.constant 0 : i32
    %c0_i32_0 = arith.constant 0 : i32
    %c0_i32_1 = arith.constant 0 : i32
    return %c0_i32, %c0_i32_0 : i32, i32
  }
  func.func @transform_7(%arg0: i32) -> (i32, i32) {
    %c0_i32 = arith.constant 0 : i32
    %c0_i32_0 = arith.constant 0 : i32
    %c0_i32_1 = arith.constant 0 : i32
    return %c0_i32, %c0_i32_0 : i32, i32
  }
  func.func @transform_8(%arg0: i32) -> (i32, i32) {
    %c0_i32 = arith.constant 0 : i32
    %c0_i32_0 = arith.constant 0 : i32
    %c0_i32_1 = arith.constant 0 : i32
    return %c0_i32, %c0_i32_0 : i32, i32
  }
  func.func @transform_9(%arg0: i32) -> (i32, i32) {
    %c0_i32 = arith.constant 0 : i32
    %c0_i32_0 = arith.constant 0 : i32
    %c0_i32_1 = arith.constant 0 : i32
    return %c0_i32, %c0_i32_0 : i32, i32
  }
  func.func @transform_10(%arg0: i32) -> (i32, i32) {
    %c0_i32 = arith.constant 0 : i32
    %c0_i32_0 = arith.constant 0 : i32
    %c0_i32_1 = arith.constant 0 : i32
    return %c0_i32, %c0_i32_0 : i32, i32
  }
  func.func @transform_11(%arg0: i32) -> (i32, i32) {
    %c0_i32 = arith.constant 0 : i32
    %c0_i32_0 = arith.constant 0 : i32
    %c0_i32_1 = arith.constant 0 : i32
    return %c0_i32, %c0_i32_0 : i32, i32
  }
  func.func @transform_12(%arg0: i32) -> (i32, i32) {
    %c0_i32 = arith.constant 0 : i32
    %c0_i32_0 = arith.constant 0 : i32
    return %arg0, %c0_i32 : i32, i32
  }
  func.func @transform_13(%arg0: i32) -> (i32, i32) {
    %c0_i32 = arith.constant 0 : i32
    %c0_i32_0 = arith.constant 0 : i32
    return %arg0, %c0_i32 : i32, i32
  }
  func.func @transform_14(%arg0: i32) -> (i32, i32) {
    %c0_i32 = arith.constant 0 : i32
    %c0_i32_0 = arith.constant 0 : i32
    return %arg0, %c0_i32 : i32, i32
  }
}

</mosaic_0001>

<llo_original>
// kernel: _lambda_.1
$region0: #{_lambda_.1}
  #allocation0 [shape = 'u32[]', space=smem, size = 0x4, offset = 0x4, fixed_abs, tag = 'smem constant byte address 0x4 - core index']
  #allocation1 [shape = 'u32[144,128]{1,0:T(1,128)}', space=vmem, size = 0x12000, scoped, tag = 'internal scratch']
  %s0 = inlined_call_operand.vmem [shape: f32[256,784], index: 0, kind: input, shape index: {}]
  %s1 = inlined_call_operand.vmem [shape: f32[256,2], index: 1, kind: input, shape index: {}]
  %s2 = inlined_call_operand.vmem [shape: bf16[784,256], index: 2, kind: input, shape index: {}]
  %s3 = inlined_call_operand.vmem [shape: f32[1,256], index: 3, kind: input, shape index: {}]
  %s4 = inlined_call_operand.vmem [shape: bf16[256,512], index: 4, kind: input, shape index: {}]
  %s5 = inlined_call_operand.vmem [shape: f32[1,512], index: 5, kind: input, shape index: {}]
  %s6 = inlined_call_operand.vmem [shape: bf16[512,4], index: 6, kind: input, shape index: {}]
  %s7 = inlined_call_operand.vmem [shape: f32[1,4], index: 7, kind: input, shape index: {}]
  %s8 = inlined_call_operand.vmem [shape: f32[2,512], index: 8, kind: input, shape index: {}]
  %s9 = inlined_call_operand.vmem [shape: f32[1,512], index: 9, kind: input, shape index: {}]
  %s10 = inlined_call_operand.vmem [shape: bf16[512,784], index: 10, kind: input, shape index: {}]
  %s11 = inlined_call_operand.vmem [shape: f32[1,784], index: 11, kind: input, shape index: {}]
  %s12 = inlined_call_operand.vmem [shape: f32[256,784], index: 12, kind: output, shape index: {0}]
  %s13 = inlined_call_operand.vmem [shape: f32[256,2], index: 13, kind: output, shape index: {1}]
  %s14 = inlined_call_operand.vmem [shape: f32[256,2], index: 14, kind: output, shape index: {2}]
  %15 = xla_tuple %s12, %s13, %s14
  %s16 = sld [smem:[#allocation0]]
  $region97: #{_lambda_.1} parent=0
    _
  %s18 = ssub.s32 1, %s16
  %s19 = scalar_select 0, %s18, %s16
  loop: start=0, step=1, limit=4
  $region2: #{_lambda_.1} parent=0 // loop_pre_header
    _
  $region3: #{_lambda_.1} parent=0 // loop_header
    %s21 = sphi 0, %s25
    %p22 = scmp.ge.s32.totalorder %s21, 4
    %s31 = sphi 0, %s33
    %s34 = sphi 0, %s31
    %s35 = sphi 0, %s34
    %s51 = sphi 0, %s35
    %s57 = sphi 0, %s59
    %s60 = sphi 0, %s57
    %s61 = sphi 0, %s60
    %s77 = sphi 0, %s61
    %s81 = sphi 0, %s81
    %s83 = sphi 0, %s81
    %s84 = sphi 0, %s83
    %s98 = sphi 0, %s84
    %s102 = sphi 0, %s102
    %s104 = sphi 0, %s102
    %s105 = sphi 0, %s104
    %s119 = sphi 0, %s105
    %s123 = sphi 0, %s123
    %s125 = sphi 0, %s123
    %s126 = sphi 0, %s125
    %s140 = sphi 0, %s126
    %s144 = sphi 0, %s144
    %s146 = sphi 0, %s144
    %s147 = sphi 0, %s146
    %s161 = sphi 0, %s147
    %s165 = sphi 0, %s165
    %s167 = sphi 0, %s165
    %s168 = sphi 0, %s167
    %s182 = sphi 0, %s168
    %s186 = sphi 0, %s186
    %s188 = sphi 0, %s186
    %s189 = sphi 0, %s188
    %s203 = sphi 0, %s189
    %s207 = sphi 0, %s207
    %s209 = sphi 0, %s207
    %s210 = sphi 0, %s209
    %s224 = sphi 0, %s210
    %s228 = sphi 0, %s228
    %s230 = sphi 0, %s228
    %s231 = sphi 0, %s230
    %s245 = sphi 0, %s231
    %s249 = sphi 0, %s249
    %s251 = sphi 0, %s249
    %s252 = sphi 0, %s251
    %s266 = sphi 0, %s252
    %s270 = sphi 0, %s270
    %s272 = sphi 0, %s270
    %s273 = sphi 0, %s272
    %s287 = sphi 0, %s273
    %s293 = sphi 0, %s295
    %s296 = sphi 0, %s293
    %s297 = sphi 0, %s296
    %s313 = sphi 0, %s297
    %s319 = sphi 0, %s321
    %s322 = sphi 0, %s319
    %s323 = sphi 0, %s322
    %s339 = sphi 0, %s323
    %s345 = sphi 0, %s347
    %s348 = sphi 0, %s345
    %s349 = sphi 0, %s348
    %s365 = sphi 0, %s349
  $region4: #{_lambda_.1} parent=0 // loop_header_branch
    %24 = sbr.rel (%p22) target = $region8
  $region5: #{_lambda_.1} parent=0 // loop_body
    %s26 = ssub.s32 %s21, 1
    %s27 = ssub.s32 %s21, 2
    %s28 = sadd.s32 %s21, 1
    %s29 = ssub.s32 %s21, %s28
    %p30 = scmp.eq.s32.totalorder %s29, 0
    %s32 = sadd.s32 %s31, 1
    %s33 = scalar_select %p30, %s31, %s32
    %p36 = pneg %p30
    %p37 = scmp.eq.s32.totalorder %s21, 1
    %p38 = por %p36, %p37
    %p39 = scmp.ne.s32.totalorder %s31, %s34
    %p40 = scmp.eq.s32.totalorder %s21, 0
    %p41 = por %p39, %p40
    %p42 = scmp.ne.s32.totalorder %s31, %s34
    %p43 = scmp.eq.s32.totalorder %s26, 1
    %p44 = por %p42, %p43
    %p45 = scmp.ne.s32.totalorder %s34, %s35
    %p46 = scmp.eq.s32.totalorder %s26, 0
    %p47 = por %p45, %p46
    %p48 = scmp.ne.s32.totalorder %s34, %s35
    %p49 = scmp.eq.s32.totalorder %s27, 1
    %p50 = por %p48, %p49
    %p52 = scmp.ne.s32.totalorder %s35, %s51
    %p53 = scmp.eq.s32.totalorder %s27, 0
    %p54 = por %p52, %p53
    %s55 = ssub.s32 %s21, %s28
    %p56 = scmp.eq.s32.totalorder %s55, 0
    %s58 = sadd.s32 %s57, 1
    %s59 = scalar_select %p56, %s57, %s58
    %p62 = pneg %p56
    %p63 = scmp.eq.s32.totalorder %s21, 1
    %p64 = por %p62, %p63
    %p65 = scmp.ne.s32.totalorder %s57, %s60
    %p66 = scmp.eq.s32.totalorder %s21, 0
    %p67 = por %p65, %p66
    %p68 = scmp.ne.s32.totalorder %s57, %s60
    %p69 = scmp.eq.s32.totalorder %s26, 1
    %p70 = por %p68, %p69
    %p71 = scmp.ne.s32.totalorder %s60, %s61
    %p72 = scmp.eq.s32.totalorder %s26, 0
    %p73 = por %p71, %p72
    %p74 = scmp.ne.s32.totalorder %s60, %s61
    %p75 = scmp.eq.s32.totalorder %s27, 1
    %p76 = por %p74, %p75
    %p78 = scmp.ne.s32.totalorder %s61, %s77
    %p79 = scmp.eq.s32.totalorder %s27, 0
    %p80 = por %p78, %p79
    %s82 = sadd.s32 %s81, 1
    %p85 = scmp.eq.s32.totalorder %s21, 1
    %p86 = scmp.ne.s32.totalorder %s81, %s83
    %p87 = scmp.eq.s32.totalorder %s21, 0
    %p88 = por %p86, %p87
    %p89 = scmp.ne.s32.totalorder %s81, %s83
    %p90 = scmp.eq.s32.totalorder %s26, 1
    %p91 = por %p89, %p90
    %p92 = scmp.ne.s32.totalorder %s83, %s84
    %p93 = scmp.eq.s32.totalorder %s26, 0
    %p94 = por %p92, %p93
    %p95 = scmp.ne.s32.totalorder %s83, %s84
    %p96 = scmp.eq.s32.totalorder %s27, 1
    %p97 = por %p95, %p96
    %p99 = scmp.ne.s32.totalorder %s84, %s98
    %p100 = scmp.eq.s32.totalorder %s27, 0
    %p101 = por %p99, %p100
    %s103 = sadd.s32 %s102, 1
    %p106 = scmp.eq.s32.totalorder %s21, 1
    %p107 = scmp.ne.s32.totalorder %s102, %s104
    %p108 = scmp.eq.s32.totalorder %s21, 0
    %p109 = por %p107, %p108
    %p110 = scmp.ne.s32.totalorder %s102, %s104
    %p111 = scmp.eq.s32.totalorder %s26, 1
    %p112 = por %p110, %p111
    %p113 = scmp.ne.s32.totalorder %s104, %s105
    %p114 = scmp.eq.s32.totalorder %s26, 0
    %p115 = por %p113, %p114
    %p116 = scmp.ne.s32.totalorder %s104, %s105
    %p117 = scmp.eq.s32.totalorder %s27, 1
    %p118 = por %p116, %p117
    %p120 = scmp.ne.s32.totalorder %s105, %s119
    %p121 = scmp.eq.s32.totalorder %s27, 0
    %p122 = por %p120, %p121
    %s124 = sadd.s32 %s123, 1
    %p127 = scmp.eq.s32.totalorder %s21, 1
    %p128 = scmp.ne.s32.totalorder %s123, %s125
    %p129 = scmp.eq.s32.totalorder %s21, 0
    %p130 = por %p128, %p129
    %p131 = scmp.ne.s32.totalorder %s123, %s125
    %p132 = scmp.eq.s32.totalorder %s26, 1
    %p133 = por %p131, %p132
    %p134 = scmp.ne.s32.totalorder %s125, %s126
    %p135 = scmp.eq.s32.totalorder %s26, 0
    %p136 = por %p134, %p135
    %p137 = scmp.ne.s32.totalorder %s125, %s126
    %p138 = scmp.eq.s32.totalorder %s27, 1
    %p139 = por %p137, %p138
    %p141 = scmp.ne.s32.totalorder %s126, %s140
    %p142 = scmp.eq.s32.totalorder %s27, 0
    %p143 = por %p141, %p142
    %s145 = sadd.s32 %s144, 1
    %p148 = scmp.eq.s32.totalorder %s21, 1
    %p149 = scmp.ne.s32.totalorder %s144, %s146
    %p150 = scmp.eq.s32.totalorder %s21, 0
    %p151 = por %p149, %p150
    %p152 = scmp.ne.s32.totalorder %s144, %s146
    %p153 = scmp.eq.s32.totalorder %s26, 1
    %p154 = por %p152, %p153
    %p155 = scmp.ne.s32.totalorder %s146, %s147
    %p156 = scmp.eq.s32.totalorder %s26, 0
    %p157 = por %p155, %p156
    %p158 = scmp.ne.s32.totalorder %s146, %s147
    %p159 = scmp.eq.s32.totalorder %s27, 1
    %p160 = por %p158, %p159
    %p162 = scmp.ne.s32.totalorder %s147, %s161
    %p163 = scmp.eq.s32.totalorder %s27, 0
    %p164 = por %p162, %p163
    %s166 = sadd.s32 %s165, 1
    %p169 = scmp.eq.s32.totalorder %s21, 1
    %p170 = scmp.ne.s32.totalorder %s165, %s167
    %p171 = scmp.eq.s32.totalorder %s21, 0
    %p172 = por %p170, %p171
    %p173 = scmp.ne.s32.totalorder %s165, %s167
    %p174 = scmp.eq.s32.totalorder %s26, 1
    %p175 = por %p173, %p174
    %p176 = scmp.ne.s32.totalorder %s167, %s168
    %p177 = scmp.eq.s32.totalorder %s26, 0
    %p178 = por %p176, %p177
    %p179 = scmp.ne.s32.totalorder %s167, %s168
    %p180 = scmp.eq.s32.totalorder %s27, 1
    %p181 = por %p179, %p180
    %p183 = scmp.ne.s32.totalorder %s168, %s182
    %p184 = scmp.eq.s32.totalorder %s27, 0
    %p185 = por %p183, %p184
    %s187 = sadd.s32 %s186, 1
    %p190 = scmp.eq.s32.totalorder %s21, 1
    %p191 = scmp.ne.s32.totalorder %s186, %s188
    %p192 = scmp.eq.s32.totalorder %s21, 0
    %p193 = por %p191, %p192
    %p194 = scmp.ne.s32.totalorder %s186, %s188
    %p195 = scmp.eq.s32.totalorder %s26, 1
    %p196 = por %p194, %p195
    %p197 = scmp.ne.s32.totalorder %s188, %s189
    %p198 = scmp.eq.s32.totalorder %s26, 0
    %p199 = por %p197, %p198
    %p200 = scmp.ne.s32.totalorder %s188, %s189
    %p201 = scmp.eq.s32.totalorder %s27, 1
    %p202 = por %p200, %p201
    %p204 = scmp.ne.s32.totalorder %s189, %s203
    %p205 = scmp.eq.s32.totalorder %s27, 0
    %p206 = por %p204, %p205
    %s208 = sadd.s32 %s207, 1
    %p211 = scmp.eq.s32.totalorder %s21, 1
    %p212 = scmp.ne.s32.totalorder %s207, %s209
    %p213 = scmp.eq.s32.totalorder %s21, 0
    %p214 = por %p212, %p213
    %p215 = scmp.ne.s32.totalorder %s207, %s209
    %p216 = scmp.eq.s32.totalorder %s26, 1
    %p217 = por %p215, %p216
    %p218 = scmp.ne.s32.totalorder %s209, %s210
    %p219 = scmp.eq.s32.totalorder %s26, 0
    %p220 = por %p218, %p219
    %p221 = scmp.ne.s32.totalorder %s209, %s210
    %p222 = scmp.eq.s32.totalorder %s27, 1
    %p223 = por %p221, %p222
    %p225 = scmp.ne.s32.totalorder %s210, %s224
    %p226 = scmp.eq.s32.totalorder %s27, 0
    %p227 = por %p225, %p226
    %s229 = sadd.s32 %s228, 1
    %p232 = scmp.eq.s32.totalorder %s21, 1
    %p233 = scmp.ne.s32.totalorder %s228, %s230
    %p234 = scmp.eq.s32.totalorder %s21, 0
    %p235 = por %p233, %p234
    %p236 = scmp.ne.s32.totalorder %s228, %s230
    %p237 = scmp.eq.s32.totalorder %s26, 1
    %p238 = por %p236, %p237
    %p239 = scmp.ne.s32.totalorder %s230, %s231
    %p240 = scmp.eq.s32.totalorder %s26, 0
    %p241 = por %p239, %p240
    %p242 = scmp.ne.s32.totalorder %s230, %s231
    %p243 = scmp.eq.s32.totalorder %s27, 1
    %p244 = por %p242, %p243
    %p246 = scmp.ne.s32.totalorder %s231, %s245
    %p247 = scmp.eq.s32.totalorder %s27, 0
    %p248 = por %p246, %p247
    %s250 = sadd.s32 %s249, 1
    %p253 = scmp.eq.s32.totalorder %s21, 1
    %p254 = scmp.ne.s32.totalorder %s249, %s251
    %p255 = scmp.eq.s32.totalorder %s21, 0
    %p256 = por %p254, %p255
    %p257 = scmp.ne.s32.totalorder %s249, %s251
    %p258 = scmp.eq.s32.totalorder %s26, 1
    %p259 = por %p257, %p258
    %p260 = scmp.ne.s32.totalorder %s251, %s252
    %p261 = scmp.eq.s32.totalorder %s26, 0
    %p262 = por %p260, %p261
    %p263 = scmp.ne.s32.totalorder %s251, %s252
    %p264 = scmp.eq.s32.totalorder %s27, 1
    %p265 = por %p263, %p264
    %p267 = scmp.ne.s32.totalorder %s252, %s266
    %p268 = scmp.eq.s32.totalorder %s27, 0
    %p269 = por %p267, %p268
    %s271 = sadd.s32 %s270, 1
    %p274 = scmp.eq.s32.totalorder %s21, 1
    %p275 = scmp.ne.s32.totalorder %s270, %s272
    %p276 = scmp.eq.s32.totalorder %s21, 0
    %p277 = por %p275, %p276
    %p278 = scmp.ne.s32.totalorder %s270, %s272
    %p279 = scmp.eq.s32.totalorder %s26, 1
    %p280 = por %p278, %p279
    %p281 = scmp.ne.s32.totalorder %s272, %s273
    %p282 = scmp.eq.s32.totalorder %s26, 0
    %p283 = por %p281, %p282
    %p284 = scmp.ne.s32.totalorder %s272, %s273
    %p285 = scmp.eq.s32.totalorder %s27, 1
    %p286 = por %p284, %p285
    %p288 = scmp.ne.s32.totalorder %s273, %s287
    %p289 = scmp.eq.s32.totalorder %s27, 0
    %p290 = por %p288, %p289
    %s291 = ssub.s32 %s21, %s28
    %p292 = scmp.eq.s32.totalorder %s291, 0
    %s294 = sadd.s32 %s293, 1
    %s295 = scalar_select %p292, %s293, %s294
    %p298 = pneg %p292
    %p299 = scmp.eq.s32.totalorder %s21, 1
    %p300 = por %p298, %p299
    %p301 = scmp.ne.s32.totalorder %s293, %s296
    %p302 = scmp.eq.s32.totalorder %s21, 0
    %p303 = por %p301, %p302
    %p304 = scmp.ne.s32.totalorder %s293, %s296
    %p305 = scmp.eq.s32.totalorder %s26, 1
    %p306 = por %p304, %p305
    %p307 = scmp.ne.s32.totalorder %s296, %s297
    %p308 = scmp.eq.s32.totalorder %s26, 0
    %p309 = por %p307, %p308
    %p310 = scmp.ne.s32.totalorder %s296, %s297
    %p311 = scmp.eq.s32.totalorder %s27, 1
    %p312 = por %p310, %p311
    %p314 = scmp.ne.s32.totalorder %s297, %s313
    %p315 = scmp.eq.s32.totalorder %s27, 0
    %p316 = por %p314, %p315
    %s317 = ssub.s32 %s21, %s28
    %p318 = scmp.eq.s32.totalorder %s317, 0
    %s320 = sadd.s32 %s319, 1
    %s321 = scalar_select %p318, %s319, %s320
    %p324 = pneg %p318
    %p325 = scmp.eq.s32.totalorder %s21, 1
    %p326 = por %p324, %p325
    %p327 = scmp.ne.s32.totalorder %s319, %s322
    %p328 = scmp.eq.s32.totalorder %s21, 0
    %p329 = por %p327, %p328
    %p330 = scmp.ne.s32.totalorder %s319, %s322
    %p331 = scmp.eq.s32.totalorder %s26, 1
    %p332 = por %p330, %p331
    %p333 = scmp.ne.s32.totalorder %s322, %s323
    %p334 = scmp.eq.s32.totalorder %s26, 0
    %p335 = por %p333, %p334
    %p336 = scmp.ne.s32.totalorder %s322, %s323
    %p337 = scmp.eq.s32.totalorder %s27, 1
    %p338 = por %p336, %p337
    %p340 = scmp.ne.s32.totalorder %s323, %s339
    %p341 = scmp.eq.s32.totalorder %s27, 0
    %p342 = por %p340, %p341
    %s343 = ssub.s32 %s21, %s28
    %p344 = scmp.eq.s32.totalorder %s343, 0
    %s346 = sadd.s32 %s345, 1
    %s347 = scalar_select %p344, %s345, %s346
    %p350 = pneg %p344
    %p351 = scmp.eq.s32.totalorder %s21, 1
    %p352 = por %p350, %p351
    %p353 = scmp.ne.s32.totalorder %s345, %s348
    %p354 = scmp.eq.s32.totalorder %s21, 0
    %p355 = por %p353, %p354
    %p356 = scmp.ne.s32.totalorder %s345, %s348
    %p357 = scmp.eq.s32.totalorder %s26, 1
    %p358 = por %p356, %p357
    %p359 = scmp.ne.s32.totalorder %s348, %s349
    %p360 = scmp.eq.s32.totalorder %s26, 0
    %p361 = por %p359, %p360
    %p362 = scmp.ne.s32.totalorder %s348, %s349
    %p363 = scmp.eq.s32.totalorder %s27, 1
    %p364 = por %p362, %p363
    %p366 = scmp.ne.s32.totalorder %s349, %s365
    %p367 = scmp.eq.s32.totalorder %s27, 0
    %p368 = por %p366, %p367
    %p369 = scmp.le.s32.totalorder 1, %s21
    %p370 = scmp.lt.s32.totalorder %s21, 3
    %p371 = pnand %p369, %p370
    %p372 = pneg %p371
    // Predicated region
    $region9: #{_lambda_.1} parent=5 // pred_check
      _
    $region10: #{_lambda_.1} parent=5 // pred_check_branch
      %374 = sbr.rel (%p371) target = $region12
    $region11: #{_lambda_.1} parent=5 // pred_region
      %s375 = ssub.s32 %s21, 1
      // Predicated region
      $region13: #{_lambda_.1} parent=11 // pred_check
        %p376 = pneg %p94
      $region14: #{_lambda_.1} parent=11 // pred_check_branch
        %378 = sbr.rel (%p376) target = $region16
      $region15: #{_lambda_.1} parent=11 // pred_region
        _
      $region16: #{_lambda_.1} parent=11 // pred_fallthru
        _
      // Predicated region
      $region17: #{_lambda_.1} parent=11 // pred_check
        %p379 = pneg %p115
      $region18: #{_lambda_.1} parent=11 // pred_check_branch
        %381 = sbr.rel (%p379) target = $region20
      $region19: #{_lambda_.1} parent=11 // pred_region
        _
      $region20: #{_lambda_.1} parent=11 // pred_fallthru
        _
      // Predicated region
      $region21: #{_lambda_.1} parent=11 // pred_check
        %p382 = pneg %p136
      $region22: #{_lambda_.1} parent=11 // pred_check_branch
        %384 = sbr.rel (%p382) target = $region24
      $region23: #{_lambda_.1} parent=11 // pred_region
        _
      $region24: #{_lambda_.1} parent=11 // pred_fallthru
        _
      // Predicated region
      $region25: #{_lambda_.1} parent=11 // pred_check
        %p385 = pneg %p157
      $region26: #{_lambda_.1} parent=11 // pred_check_branch
        %387 = sbr.rel (%p385) target = $region28
      $region27: #{_lambda_.1} parent=11 // pred_region
        _
      $region28: #{_lambda_.1} parent=11 // pred_fallthru
        _
      // Predicated region
      $region29: #{_lambda_.1} parent=11 // pred_check
        %p388 = pneg %p178
      $region30: #{_lambda_.1} parent=11 // pred_check_branch
        %390 = sbr.rel (%p388) target = $region32
      $region31: #{_lambda_.1} parent=11 // pred_region
        _
      $region32: #{_lambda_.1} parent=11 // pred_fallthru
        _
      // Predicated region
      $region33: #{_lambda_.1} parent=11 // pred_check
        %p391 = pneg %p199
      $region34: #{_lambda_.1} parent=11 // pred_check_branch
        %393 = sbr.rel (%p391) target = $region36
      $region35: #{_lambda_.1} parent=11 // pred_region
        _
      $region36: #{_lambda_.1} parent=11 // pred_fallthru
        _
      // Predicated region
      $region37: #{_lambda_.1} parent=11 // pred_check
        %p394 = pneg %p220
      $region38: #{_lambda_.1} parent=11 // pred_check_branch
        %396 = sbr.rel (%p394) target = $region40
      $region39: #{_lambda_.1} parent=11 // pred_region
        _
      $region40: #{_lambda_.1} parent=11 // pred_fallthru
        _
      // Predicated region
      $region41: #{_lambda_.1} parent=11 // pred_check
        %p397 = pneg %p241
      $region42: #{_lambda_.1} parent=11 // pred_check_branch
        %399 = sbr.rel (%p397) target = $region44
      $region43: #{_lambda_.1} parent=11 // pred_region
        _
      $region44: #{_lambda_.1} parent=11 // pred_fallthru
        _
      // Predicated region
      $region45: #{_lambda_.1} parent=11 // pred_check
        %p400 = pneg %p262
      $region46: #{_lambda_.1} parent=11 // pred_check_branch
        %402 = sbr.rel (%p400) target = $region48
      $region47: #{_lambda_.1} parent=11 // pred_region
        _
      $region48: #{_lambda_.1} parent=11 // pred_fallthru
        _
      // Predicated region
      $region49: #{_lambda_.1} parent=11 // pred_check
        %p403 = pneg %p283
      $region50: #{_lambda_.1} parent=11 // pred_check_branch
        %405 = sbr.rel (%p403) target = $region52
      $region51: #{_lambda_.1} parent=11 // pred_region
        _
      $region52: #{_lambda_.1} parent=11 // pred_fallthru
        _
    $region12: #{_lambda_.1} parent=5 // pred_fallthru
      _
    %p406 = scmp.lt.s32.totalorder %s21, 2
    // Predicated region
    $region53: #{_lambda_.1} parent=5 // pred_check
      %p407 = pneg %p406
    $region54: #{_lambda_.1} parent=5 // pred_check_branch
      %409 = sbr.rel (%p407) target = $region56
    $region55: #{_lambda_.1} parent=5 // pred_region
      // Predicated region
      $region57: #{_lambda_.1} parent=55 // pred_check
        %p410 = pneg %p41
      $region58: #{_lambda_.1} parent=55 // pred_check_branch
        %412 = sbr.rel (%p410) target = $region60
      $region59: #{_lambda_.1} parent=55 // pred_region
        %s413 = smul.u32 16, %s21
        %p414 = scmp.lt.s32.totalorder %s413, 31
        %s415 = scalar_select %p414, %s413, 31
        %s416 = smul.addr %s415, 7
        %s417 = smul.addr %s416, 8
        %s418 = scalar_lea.vmem %s0, %s417
        %s419 = smul.u32 16, %s21
      $region60: #{_lambda_.1} parent=55 // pred_fallthru
        _
      // Predicated region
      $region61: #{_lambda_.1} parent=55 // pred_check
        %p420 = pneg %p67
      $region62: #{_lambda_.1} parent=55 // pred_check_branch
        %422 = sbr.rel (%p420) target = $region64
      $region63: #{_lambda_.1} parent=55 // pred_region
        %s423 = smul.u32 16, %s21
        %p424 = scmp.lt.s32.totalorder %s423, 31
        %s425 = scalar_select %p424, %s423, 31
        %s426 = smul.addr %s425, 8
        %s427 = scalar_lea.vmem %s1, %s426
        %s428 = smul.u32 16, %s21
      $region64: #{_lambda_.1} parent=55 // pred_fallthru
        _
    $region56: #{_lambda_.1} parent=5 // pred_fallthru
      _
    %p429 = scmp.le.s32.totalorder 1, %s21
    %p430 = scmp.lt.s32.totalorder %s21, 3
    %p431 = pnand %p429, %p430
    %p432 = pneg %p431
    // Predicated region
    $region65: #{_lambda_.1} parent=5 // pred_check
      _
    $region66: #{_lambda_.1} parent=5 // pred_check_branch
      %434 = sbr.rel (%p431) target = $region68
    $region67: #{_lambda_.1} parent=5 // pred_region
      %s435 = ssub.s32 %s21, 1
      %s436 = smul.u32 16, %s26
      %p437 = scmp.lt.s32.totalorder %s436, 31
      %s438 = scalar_select %p437, %s436, 31
      %s439 = smul.addr %s438, 7
      %s440 = smul.addr %s439, 8
      %s441 = scalar_lea.vmem %s0, %s440
      %p442 = pneg %p47
      %p443 = pneg %p44
      %s444 = smul.u32 16, %s26
      %p445 = scmp.lt.s32.totalorder %s444, 31
      %s446 = scalar_select %p445, %s444, 31
      %s447 = smul.addr %s446, 8
      %s448 = scalar_lea.vmem %s1, %s447
      %p449 = pneg %p73
      %p450 = pneg %p70
      %p451 = pneg %p94
      %p452 = pneg %p91
      %p453 = pneg %p115
      %p454 = pneg %p112
      %p455 = pneg %p136
      %p456 = pneg %p133
      %p457 = pneg %p157
      %p458 = pneg %p154
      %p459 = pneg %p178
      %p460 = pneg %p175
      %p461 = pneg %p199
      %p462 = pneg %p196
      %p463 = pneg %p220
      %p464 = pneg %p217
      %p465 = pneg %p241
      %p466 = pneg %p238
      %p467 = pneg %p262
      %p468 = pneg %p259
      %p469 = pneg %p283
      %p470 = pneg %p280
      %p471 = pneg %p309
      %p472 = pneg %p306
      %s473 = smul.u32 16, %s26
      %p474 = scmp.lt.s32.totalorder %s473, 31
      %s475 = scalar_select %p474, %s473, 31
      %s476 = smul.addr %s475, 7
      %s477 = smul.addr %s476, 8
      %s478 = scalar_lea.vmem %s12, %s477
      %p479 = pneg %p335
      %p480 = pneg %p332
      %s481 = smul.u32 16, %s26
      %p482 = scmp.lt.s32.totalorder %s481, 31
      %s483 = scalar_select %p482, %s481, 31
      %s484 = smul.addr %s483, 8
      %s485 = scalar_lea.vmem %s13, %s484
      %p486 = pneg %p361
      %p487 = pneg %p358
      %s488 = smul.u32 16, %s26
      %p489 = scmp.lt.s32.totalorder %s488, 31
      %s490 = scalar_select %p489, %s488, 31
      %s491 = smul.addr %s490, 8
      %s492 = scalar_lea.vmem %s14, %s491
      %s493 = smul.u32 16, %s26
      %p494 = scmp.lt.s32.totalorder %s493, 31
      %s495 = scalar_select %p494, %s493, 31
      %s496 = smul.addr %s495, 7
      %s497 = smul.addr %s496, 8
      %s498 = scalar_lea.vmem %s0, %s497
      %s499 = smul.u32 16, %s26
      %s500 = smul.u32 16, %s26
      %p501 = scmp.lt.s32.totalorder %s500, 31
      %s502 = scalar_select %p501, %s500, 31
      %s503 = smul.addr %s502, 8
      %s504 = scalar_lea.vmem %s1, %s503
      %s505 = smul.u32 16, %s26
      %s506 = smul.u32 16, %s26
      %p507 = scmp.lt.s32.totalorder %s506, 31
      %s508 = scalar_select %p507, %s506, 31
      %s509 = smul.addr %s508, 7
      %s510 = smul.addr %s509, 8
      %s511 = scalar_lea.vmem %s12, %s510
      %s512 = smul.u32 16, %s26
      %s513 = smul.u32 16, %s26
      %p514 = scmp.lt.s32.totalorder %s513, 31
      %s515 = scalar_select %p514, %s513, 31
      %s516 = smul.addr %s515, 8
      %s517 = scalar_lea.vmem %s13, %s516
      %s518 = smul.u32 16, %s26
      %s519 = smul.u32 16, %s26
      %p520 = scmp.lt.s32.totalorder %s519, 31
      %s521 = scalar_select %p520, %s519, 31
      %s522 = smul.addr %s521, 8
      %s523 = scalar_lea.vmem %s14, %s522
      %s524 = smul.u32 16, %s26
      %v526 = vld [vmem:[%s498] sm:$0xff]
      %v527 = vld [vmem:[%s498 + $0x8] sm:$0xff]
      %v528 = vld [vmem:[%s498 + $0x10] sm:$0xff]
      %v529 = vld [vmem:[%s498 + $0x18] sm:$0xff]
      %v530 = vld [vmem:[%s498 + $0x20] sm:$0xff]
      %v531 = vld [vmem:[%s498 + $0x28] sm:$0xff]
      %v532 = vld [vmem:[%s498 + $0x30] sm:$0xff]
      %v533 = vld [vmem:[%s498 + $0x38] sm:$0xff]
      %v534 = vld [vmem:[%s498 + $0x40] sm:$0xff]
      %v535 = vld [vmem:[%s498 + $0x48] sm:$0xff]
      %v536 = vld [vmem:[%s498 + $0x50] sm:$0xff]
      %v537 = vld [vmem:[%s498 + $0x58] sm:$0xff]
      %v538 = vld [vmem:[%s498 + $0x60] sm:$0xff]
      %v539 = vld [vmem:[%s498 + $0x68] sm:$0xff]
      %v540 = vld [vmem:[%s498 + $0x70] sm:$0xff]
      %v541 = vld [vmem:[%s498 + $0x78] sm:$0xff]
      %v542 = vld [vmem:[%s498 + $0x80] sm:$0xff]
      %v543 = vld [vmem:[%s498 + $0x88] sm:$0xff]
      %v544 = vld [vmem:[%s498 + $0x90] sm:$0xff]
      %v545 = vld [vmem:[%s498 + $0x98] sm:$0xff]
      %v546 = vld [vmem:[%s498 + $0xa0] sm:$0xff]
      %v547 = vld [vmem:[%s498 + $0xa8] sm:$0xff]
      %v548 = vld [vmem:[%s498 + $0xb0] sm:$0xff]
      %v549 = vld [vmem:[%s498 + $0xb8] sm:$0xff]
      %v550 = vld [vmem:[%s498 + $0xc0] sm:$0xff]
      %v551 = vld [vmem:[%s498 + $0xc8] sm:$0xff]
      %v552 = vld [vmem:[%s498 + $0xd0] sm:$0xff]
      %v553 = vld [vmem:[%s498 + $0xd8] sm:$0xff]
      %v554 = vld [vmem:[%s498 + $0xe0] sm:$0xff]
      %v555 = vld [vmem:[%s498 + $0xe8] sm:$0xff]
      %v556 = vld [vmem:[%s498 + $0xf0] sm:$0xff]
      %v557 = vld [vmem:[%s498 + $0xf8] sm:$0xff]
      %v558 = vld [vmem:[%s498 + $0x100] sm:$0xff]
      %v559 = vld [vmem:[%s498 + $0x108] sm:$0xff]
      %v560 = vld [vmem:[%s498 + $0x110] sm:$0xff]
      %v561 = vld [vmem:[%s498 + $0x118] sm:$0xff]
      %v562 = vld [vmem:[%s498 + $0x120] sm:$0xff]
      %v563 = vld [vmem:[%s498 + $0x128] sm:$0xff]
      %v564 = vld [vmem:[%s498 + $0x130] sm:$0xff]
      %v565 = vld [vmem:[%s498 + $0x138] sm:$0xff]
      %v566 = vld [vmem:[%s498 + $0x140] sm:$0xff]
      %v567 = vld [vmem:[%s498 + $0x148] sm:$0xff]
      %v568 = vld [vmem:[%s498 + $0x150] sm:$0xff]
      %v569 = vld [vmem:[%s498 + $0x158] sm:$0xff]
      %v570 = vld [vmem:[%s498 + $0x160] sm:$0xff]
      %v571 = vld [vmem:[%s498 + $0x168] sm:$0xff]
      %v572 = vld [vmem:[%s498 + $0x170] sm:$0xff]
      %v573 = vld [vmem:[%s498 + $0x178] sm:$0xff]
      %v574 = vld [vmem:[%s498 + $0x180] sm:$0xff]
      %v575 = vld [vmem:[%s498 + $0x188] sm:$0xff]
      %v576 = vld [vmem:[%s498 + $0x190] sm:$0xff]
      %v577 = vld [vmem:[%s498 + $0x198] sm:$0xff]
      %v578 = vld [vmem:[%s498 + $0x1a0] sm:$0xff]
      %v579 = vld [vmem:[%s498 + $0x1a8] sm:$0xff]
      %v580 = vld [vmem:[%s498 + $0x1b0] sm:$0xff]
      %v581 = vld [vmem:[%s498 + $0x1b8] sm:$0xff]
      %v582 = vld [vmem:[%s498 + $0x1c0] sm:$0xff]
      %v583 = vld [vmem:[%s498 + $0x1c8] sm:$0xff]
      %v584 = vld [vmem:[%s498 + $0x1d0] sm:$0xff]
      %v585 = vld [vmem:[%s498 + $0x1d8] sm:$0xff]
      %v586 = vld [vmem:[%s498 + $0x1e0] sm:$0xff]
      %v587 = vld [vmem:[%s498 + $0x1e8] sm:$0xff]
      %v588 = vld [vmem:[%s498 + $0x1f0] sm:$0xff]
      %v589 = vld [vmem:[%s498 + $0x1f8] sm:$0xff]
      %v590 = vld [vmem:[%s498 + $0x200] sm:$0xff]
      %v591 = vld [vmem:[%s498 + $0x208] sm:$0xff]
      %v592 = vld [vmem:[%s498 + $0x210] sm:$0xff]
      %v593 = vld [vmem:[%s498 + $0x218] sm:$0xff]
      %v594 = vld [vmem:[%s498 + $0x220] sm:$0xff]
      %v595 = vld [vmem:[%s498 + $0x228] sm:$0xff]
      %v596 = vld [vmem:[%s498 + $0x230] sm:$0xff]
      %v597 = vld [vmem:[%s498 + $0x238] sm:$0xff]
      %v598 = vld [vmem:[%s498 + $0x240] sm:$0xff]
      %v599 = vld [vmem:[%s498 + $0x248] sm:$0xff]
      %v600 = vld [vmem:[%s498 + $0x250] sm:$0xff]
      %v601 = vld [vmem:[%s498 + $0x258] sm:$0xff]
      %v602 = vld [vmem:[%s498 + $0x260] sm:$0xff]
      %v603 = vld [vmem:[%s498 + $0x268] sm:$0xff]
      %v604 = vld [vmem:[%s498 + $0x270] sm:$0xff]
      %v605 = vld [vmem:[%s498 + $0x278] sm:$0xff]
      %v606 = vld [vmem:[%s498 + $0x280] sm:$0xff]
      %v607 = vld [vmem:[%s498 + $0x288] sm:$0xff]
      %v608 = vld [vmem:[%s498 + $0x290] sm:$0xff]
      %v609 = vld [vmem:[%s498 + $0x298] sm:$0xff]
      %v610 = vld [vmem:[%s498 + $0x2a0] sm:$0xff]
      %v611 = vld [vmem:[%s498 + $0x2a8] sm:$0xff]
      %v612 = vld [vmem:[%s498 + $0x2b0] sm:$0xff]
      %v613 = vld [vmem:[%s498 + $0x2b8] sm:$0xff]
      %v614 = vld [vmem:[%s498 + $0x2c0] sm:$0xff]
      %v615 = vld [vmem:[%s498 + $0x2c8] sm:$0xff]
      %v616 = vld [vmem:[%s498 + $0x2d0] sm:$0xff]
      %v617 = vld [vmem:[%s498 + $0x2d8] sm:$0xff]
      %v618 = vld [vmem:[%s498 + $0x2e0] sm:$0xff]
      %v619 = vld [vmem:[%s498 + $0x2e8] sm:$0xff]
      %v620 = vld [vmem:[%s498 + $0x2f0] sm:$0xff]
      %v621 = vld [vmem:[%s498 + $0x2f8] sm:$0xff]
      %v622 = vld [vmem:[%s498 + $0x300] sm:$0xff]
      %v623 = vld [vmem:[%s498 + $0x308] sm:$0xff]
      %v624 = vld [vmem:[%s498 + $0x310] sm:$0xff]
      %v625 = vld [vmem:[%s498 + $0x318] sm:$0xff]
      %v626 = vld [vmem:[%s498 + $0x320] sm:$0xff]
      %v627 = vld [vmem:[%s498 + $0x328] sm:$0xff]
      %v628 = vld [vmem:[%s498 + $0x330] sm:$0xff]
      %v629 = vld [vmem:[%s498 + $0x338] sm:$0xff]
      %v630 = vld [vmem:[%s498 + $0x340] sm:$0xff]
      %v631 = vld [vmem:[%s498 + $0x348] sm:$0xff]
      %v632 = vld [vmem:[%s498 + $0x350] sm:$0xff]
      %v633 = vld [vmem:[%s498 + $0x358] sm:$0xff]
      %v634 = vld [vmem:[%s498 + $0x360] sm:$0xff]
      %v635 = vld [vmem:[%s498 + $0x368] sm:$0xff]
      %v636 = vld [vmem:[%s498 + $0x370] sm:$0xff]
      %v637 = vld [vmem:[%s498 + $0x378] sm:$0xff]
      %v638 = vpack.c.bf16 %v533, %v526
      %v639 = vpack.c.bf16 %v534, %v527
      %v640 = vpack.c.bf16 %v535, %v528
      %v641 = vpack.c.bf16 %v536, %v529
      %v642 = vpack.c.bf16 %v537, %v530
      %v643 = vpack.c.bf16 %v538, %v531
      %v644 = vpack.c.bf16 %v539, %v532
      %v645 = vpack.c.bf16 %v547, %v540
      %v646 = vpack.c.bf16 %v548, %v541
      %v647 = vpack.c.bf16 %v549, %v542
      %v648 = vpack.c.bf16 %v550, %v543
      %v649 = vpack.c.bf16 %v551, %v544
      %v650 = vpack.c.bf16 %v552, %v545
      %v651 = vpack.c.bf16 %v553, %v546
      %v652 = vpack.c.bf16 %v561, %v554
      %v653 = vpack.c.bf16 %v562, %v555
      %v654 = vpack.c.bf16 %v563, %v556
      %v655 = vpack.c.bf16 %v564, %v557
      %v656 = vpack.c.bf16 %v565, %v558
      %v657 = vpack.c.bf16 %v566, %v559
      %v658 = vpack.c.bf16 %v567, %v560
      %v659 = vpack.c.bf16 %v575, %v568
      %v660 = vpack.c.bf16 %v576, %v569
      %v661 = vpack.c.bf16 %v577, %v570
      %v662 = vpack.c.bf16 %v578, %v571
      %v663 = vpack.c.bf16 %v579, %v572
      %v664 = vpack.c.bf16 %v580, %v573
      %v665 = vpack.c.bf16 %v581, %v574
      %v666 = vpack.c.bf16 %v589, %v582
      %v667 = vpack.c.bf16 %v590, %v583
      %v668 = vpack.c.bf16 %v591, %v584
      %v669 = vpack.c.bf16 %v592, %v585
      %v670 = vpack.c.bf16 %v593, %v586
      %v671 = vpack.c.bf16 %v594, %v587
      %v672 = vpack.c.bf16 %v595, %v588
      %v673 = vpack.c.bf16 %v603, %v596
      %v674 = vpack.c.bf16 %v604, %v597
      %v675 = vpack.c.bf16 %v605, %v598
      %v676 = vpack.c.bf16 %v606, %v599
      %v677 = vpack.c.bf16 %v607, %v600
      %v678 = vpack.c.bf16 %v608, %v601
      %v679 = vpack.c.bf16 %v609, %v602
      %v680 = vpack.c.bf16 %v617, %v610
      %v681 = vpack.c.bf16 %v618, %v611
      %v682 = vpack.c.bf16 %v619, %v612
      %v683 = vpack.c.bf16 %v620, %v613
      %v684 = vpack.c.bf16 %v621, %v614
      %v685 = vpack.c.bf16 %v622, %v615
      %v686 = vpack.c.bf16 %v623, %v616
      %v687 = vpack.c.bf16 %v631, %v624
      %v688 = vpack.c.bf16 %v632, %v625
      %v689 = vpack.c.bf16 %v633, %v626
      %v690 = vpack.c.bf16 %v634, %v627
      %v691 = vpack.c.bf16 %v635, %v628
      %v692 = vpack.c.bf16 %v636, %v629
      %v693 = vpack.c.bf16 %v637, %v630
      %v694 = vld [vmem:[%s2] sm:$0xff]
      %v695 = vld [vmem:[%s2 + $0x8] sm:$0xff]
      %v696 = vld [vmem:[%s2 + $0x10] sm:$0xff]
      %v697 = vld [vmem:[%s2 + $0x18] sm:$0xff]
      %v698 = vld [vmem:[%s2 + $0x20] sm:$0xff]
      %v699 = vld [vmem:[%s2 + $0x28] sm:$0xff]
      %v700 = vld [vmem:[%s2 + $0x30] sm:$0xff]
      %v701 = vld [vmem:[%s2 + $0x38] sm:$0xff]
      %v702 = vld [vmem:[%s2 + $0x40] sm:$0xff]
      %v703 = vld [vmem:[%s2 + $0x48] sm:$0xff]
      %v704 = vld [vmem:[%s2 + $0x50] sm:$0xff]
      %v705 = vld [vmem:[%s2 + $0x58] sm:$0xff]
      %v706 = vld [vmem:[%s2 + $0x60] sm:$0xff]
      %v707 = vld [vmem:[%s2 + $0x68] sm:$0xff]
      %v708 = vld [vmem:[%s2 + $0x70] sm:$0xff]
      %v709 = vld [vmem:[%s2 + $0x78] sm:$0xff]
      %v710 = vld [vmem:[%s2 + $0x80] sm:$0xff]
      %v711 = vld [vmem:[%s2 + $0x88] sm:$0xff]
      %v712 = vld [vmem:[%s2 + $0x90] sm:$0xff]
      %v713 = vld [vmem:[%s2 + $0x98] sm:$0xff]
      %v714 = vld [vmem:[%s2 + $0xa0] sm:$0xff]
      %v715 = vld [vmem:[%s2 + $0xa8] sm:$0xff]
      %v716 = vld [vmem:[%s2 + $0xb0] sm:$0xff]
      %v717 = vld [vmem:[%s2 + $0xb8] sm:$0xff]
      %v718 = vld [vmem:[%s2 + $0xc0] sm:$0xff]
      %v719 = vld [vmem:[%s2 + $0xc8] sm:$0xff]
      %v720 = vld [vmem:[%s2 + $0xd0] sm:$0xff]
      %v721 = vld [vmem:[%s2 + $0xd8] sm:$0xff]
      %v722 = vld [vmem:[%s2 + $0xe0] sm:$0xff]
      %v723 = vld [vmem:[%s2 + $0xe8] sm:$0xff]
      %v724 = vld [vmem:[%s2 + $0xf0] sm:$0xff]
      %v725 = vld [vmem:[%s2 + $0xf8] sm:$0xff]
      %v726 = vld [vmem:[%s2 + $0x100] sm:$0xff]
      %v727 = vld [vmem:[%s2 + $0x108] sm:$0xff]
      %v728 = vld [vmem:[%s2 + $0x110] sm:$0xff]
      %v729 = vld [vmem:[%s2 + $0x118] sm:$0xff]
      %v730 = vld [vmem:[%s2 + $0x120] sm:$0xff]
      %v731 = vld [vmem:[%s2 + $0x128] sm:$0xff]
      %v732 = vld [vmem:[%s2 + $0x130] sm:$0xff]
      %v733 = vld [vmem:[%s2 + $0x138] sm:$0xff]
      %v734 = vld [vmem:[%s2 + $0x140] sm:$0xff]
      %v735 = vld [vmem:[%s2 + $0x148] sm:$0xff]
      %v736 = vld [vmem:[%s2 + $0x150] sm:$0xff]
      %v737 = vld [vmem:[%s2 + $0x158] sm:$0xff]
      %v738 = vld [vmem:[%s2 + $0x160] sm:$0xff]
      %v739 = vld [vmem:[%s2 + $0x168] sm:$0xff]
      %v740 = vld [vmem:[%s2 + $0x170] sm:$0xff]
      %v741 = vld [vmem:[%s2 + $0x178] sm:$0xff]
      %v742 = vld [vmem:[%s2 + $0x180] sm:$0xff]
      %v743 = vld [vmem:[%s2 + $0x188] sm:$0xff]
      %v744 = vld [vmem:[%s2 + $0x190] sm:$0xff]
      %v745 = vld [vmem:[%s2 + $0x198] sm:$0xff]
      %v746 = vld [vmem:[%s2 + $0x1a0] sm:$0xff]
      %v747 = vld [vmem:[%s2 + $0x1a8] sm:$0xff]
      %v748 = vld [vmem:[%s2 + $0x1b0] sm:$0xff]
      %v749 = vld [vmem:[%s2 + $0x1b8] sm:$0xff]
      %v750 = vld [vmem:[%s2 + $0x1c0] sm:$0xff]
      %v751 = vld [vmem:[%s2 + $0x1c8] sm:$0xff]
      %v752 = vld [vmem:[%s2 + $0x1d0] sm:$0xff]
      %v753 = vld [vmem:[%s2 + $0x1d8] sm:$0xff]
      %v754 = vld [vmem:[%s2 + $0x1e0] sm:$0xff]
      %v755 = vld [vmem:[%s2 + $0x1e8] sm:$0xff]
      %v756 = vld [vmem:[%s2 + $0x1f0] sm:$0xff]
      %v757 = vld [vmem:[%s2 + $0x1f8] sm:$0xff]
      %v758 = vld [vmem:[%s2 + $0x200] sm:$0xff]
      %v759 = vld [vmem:[%s2 + $0x208] sm:$0xff]
      %v760 = vld [vmem:[%s2 + $0x210] sm:$0xff]
      %v761 = vld [vmem:[%s2 + $0x218] sm:$0xff]
      %v762 = vld [vmem:[%s2 + $0x220] sm:$0xff]
      %v763 = vld [vmem:[%s2 + $0x228] sm:$0xff]
      %v764 = vld [vmem:[%s2 + $0x230] sm:$0xff]
      %v765 = vld [vmem:[%s2 + $0x238] sm:$0xff]
      %v766 = vld [vmem:[%s2 + $0x240] sm:$0xff]
      %v767 = vld [vmem:[%s2 + $0x248] sm:$0xff]
      %v768 = vld [vmem:[%s2 + $0x250] sm:$0xff]
      %v769 = vld [vmem:[%s2 + $0x258] sm:$0xff]
      %v770 = vld [vmem:[%s2 + $0x260] sm:$0xff]
      %v771 = vld [vmem:[%s2 + $0x268] sm:$0xff]
      %v772 = vld [vmem:[%s2 + $0x270] sm:$0xff]
      %v773 = vld [vmem:[%s2 + $0x278] sm:$0xff]
      %v774 = vld [vmem:[%s2 + $0x280] sm:$0xff]
      %v775 = vld [vmem:[%s2 + $0x288] sm:$0xff]
      %v776 = vld [vmem:[%s2 + $0x290] sm:$0xff]
      %v777 = vld [vmem:[%s2 + $0x298] sm:$0xff]
      %v778 = vld [vmem:[%s2 + $0x2a0] sm:$0xff]
      %v779 = vld [vmem:[%s2 + $0x2a8] sm:$0xff]
      %v780 = vld [vmem:[%s2 + $0x2b0] sm:$0xff]
      %v781 = vld [vmem:[%s2 + $0x2b8] sm:$0xff]
      %v782 = vld [vmem:[%s2 + $0x2c0] sm:$0xff]
      %v783 = vld [vmem:[%s2 + $0x2c8] sm:$0xff]
      %v784 = vld [vmem:[%s2 + $0x2d0] sm:$0xff]
      %v785 = vld [vmem:[%s2 + $0x2d8] sm:$0xff]
      %v786 = vld [vmem:[%s2 + $0x2e0] sm:$0xff]
      %v787 = vld [vmem:[%s2 + $0x2e8] sm:$0xff]
      %v788 = vld [vmem:[%s2 + $0x2f0] sm:$0xff]
      %v789 = vld [vmem:[%s2 + $0x2f8] sm:$0xff]
      %v790 = vld [vmem:[%s2 + $0x300] sm:$0xff]
      %v791 = vld [vmem:[%s2 + $0x308] sm:$0xff]
      %v792 = vld [vmem:[%s3] sm:$0x3]
      %v794 = vlaneseq
      %v795 = vshrl.u32 %v794, 7
      %v796 = vsub.s32 0, %v795
      %v797 = vrot.slane %v792, %v796
      %v798 = vlaneseq
      %v799 = vshrl.u32 %v798, 7
      %v800 = vsub.s32 1, %v799
      %v801 = vrot.slane %v792, %v800
      %v902 = vunpack.c.l.b16 %v694
      %v903 = vunpack.c.h.b16 %v694
      %v904 = vunpack.c.l.b16 %v695
      %v905 = vunpack.c.h.b16 %v695
      %v906 = vunpack.c.l.b16 %v696
      %v907 = vunpack.c.h.b16 %v696
      %v908 = vunpack.c.l.b16 %v697
      %v909 = vunpack.c.h.b16 %v697
      %v910 = vunpack.c.l.b16 %v698
      %v911 = vunpack.c.h.b16 %v698
      %v912 = vunpack.c.l.b16 %v699
      %v913 = vunpack.c.h.b16 %v699
      %v914 = vunpack.c.l.b16 %v700
      %v915 = vunpack.c.h.b16 %v700
      %v916 = vunpack.c.l.b16 %v701
      %v917 = vunpack.c.h.b16 %v701
      %v918 = vunpack.c.l.b16 %v702
      %v919 = vunpack.c.h.b16 %v702
      %v920 = vunpack.c.l.b16 %v703
      %v921 = vunpack.c.h.b16 %v703
      %v922 = vunpack.c.l.b16 %v704
      %v923 = vunpack.c.h.b16 %v704
      %v924 = vunpack.c.l.b16 %v705
      %v925 = vunpack.c.h.b16 %v705
      %v926 = vunpack.c.l.b16 %v706
      %v927 = vunpack.c.h.b16 %v706
      %v928 = vunpack.c.l.b16 %v707
      %v929 = vunpack.c.h.b16 %v707
      %v930 = vunpack.c.l.b16 %v708
      %v931 = vunpack.c.h.b16 %v708
      %v932 = vunpack.c.l.b16 %v709
      %v933 = vunpack.c.h.b16 %v709
      %v934 = vunpack.c.l.b16 %v710
      %v935 = vunpack.c.h.b16 %v710
      %v936 = vunpack.c.l.b16 %v711
      %v937 = vunpack.c.h.b16 %v711
      %v938 = vunpack.c.l.b16 %v712
      %v939 = vunpack.c.h.b16 %v712
      %v940 = vunpack.c.l.b16 %v713
      %v941 = vunpack.c.h.b16 %v713
      %v942 = vunpack.c.l.b16 %v714
      %v943 = vunpack.c.h.b16 %v714
      %v944 = vunpack.c.l.b16 %v715
      %v945 = vunpack.c.h.b16 %v715
      %v946 = vunpack.c.l.b16 %v716
      %v947 = vunpack.c.h.b16 %v716
      %v948 = vunpack.c.l.b16 %v717
      %v949 = vunpack.c.h.b16 %v717
      %v950 = vunpack.c.l.b16 %v718
      %v951 = vunpack.c.h.b16 %v718
      %v952 = vunpack.c.l.b16 %v719
      %v953 = vunpack.c.h.b16 %v719
      %v954 = vunpack.c.l.b16 %v720
      %v955 = vunpack.c.h.b16 %v720
      %v956 = vunpack.c.l.b16 %v721
      %v957 = vunpack.c.h.b16 %v721
      %v958 = vunpack.c.l.b16 %v722
      %v959 = vunpack.c.h.b16 %v722
      %v960 = vunpack.c.l.b16 %v723
      %v961 = vunpack.c.h.b16 %v723
      %v962 = vunpack.c.l.b16 %v724
      %v963 = vunpack.c.h.b16 %v724
      %v964 = vunpack.c.l.b16 %v725
      %v965 = vunpack.c.h.b16 %v725
      %v966 = vunpack.c.l.b16 %v726
      %v967 = vunpack.c.h.b16 %v726
      %v968 = vunpack.c.l.b16 %v727
      %v969 = vunpack.c.h.b16 %v727
      %v970 = vunpack.c.l.b16 %v728
      %v971 = vunpack.c.h.b16 %v728
      %v972 = vunpack.c.l.b16 %v729
      %v973 = vunpack.c.h.b16 %v729
      %v974 = vunpack.c.l.b16 %v730
      %v975 = vunpack.c.h.b16 %v730
      %v976 = vunpack.c.l.b16 %v731
      %v977 = vunpack.c.h.b16 %v731
      %v978 = vunpack.c.l.b16 %v732
      %v979 = vunpack.c.h.b16 %v732
      %v980 = vunpack.c.l.b16 %v733
      %v981 = vunpack.c.h.b16 %v733
      %v982 = vunpack.c.l.b16 %v734
      %v983 = vunpack.c.h.b16 %v734
      %v984 = vunpack.c.l.b16 %v735
      %v985 = vunpack.c.h.b16 %v735
      %v986 = vunpack.c.l.b16 %v736
      %v987 = vunpack.c.h.b16 %v736
      %v988 = vunpack.c.l.b16 %v737
      %v989 = vunpack.c.h.b16 %v737
      %v990 = vunpack.c.l.b16 %v738
      %v991 = vunpack.c.h.b16 %v738
      %v992 = vunpack.c.l.b16 %v739
      %v993 = vunpack.c.h.b16 %v739
      %v994 = vunpack.c.l.b16 %v740
      %v995 = vunpack.c.h.b16 %v740
      %v996 = vunpack.c.l.b16 %v741
      %v997 = vunpack.c.h.b16 %v741
      %v998 = vunpack.c.l.b16 %v742
      %v999 = vunpack.c.h.b16 %v742
      %v1000 = vunpack.c.l.b16 %v743
      %v1001 = vunpack.c.h.b16 %v743
      %v1002 = vunpack.c.l.b16 %v744
      %v1003 = vunpack.c.h.b16 %v744
      %v1004 = vunpack.c.l.b16 %v745
      %v1005 = vunpack.c.h.b16 %v745
      %v1006 = vunpack.c.l.b16 %v746
      %v1007 = vunpack.c.h.b16 %v746
      %v1008 = vunpack.c.l.b16 %v747
      %v1009 = vunpack.c.h.b16 %v747
      %v1010 = vunpack.c.l.b16 %v748
      %v1011 = vunpack.c.h.b16 %v748
      %v1012 = vunpack.c.l.b16 %v749
      %v1013 = vunpack.c.h.b16 %v749
      %v1014 = vunpack.c.l.b16 %v750
      %v1015 = vunpack.c.h.b16 %v750
      %v1016 = vunpack.c.l.b16 %v751
      %v1017 = vunpack.c.h.b16 %v751
      %v1018 = vunpack.c.l.b16 %v752
      %v1019 = vunpack.c.h.b16 %v752
      %v1020 = vunpack.c.l.b16 %v753
      %v1021 = vunpack.c.h.b16 %v753
      %v1022 = vunpack.c.l.b16 %v754
      %v1023 = vunpack.c.h.b16 %v754
      %v1024 = vunpack.c.l.b16 %v755
      %v1025 = vunpack.c.h.b16 %v755
      %v1026 = vunpack.c.l.b16 %v756
      %v1027 = vunpack.c.h.b16 %v756
      %v1028 = vunpack.c.l.b16 %v757
      %v1029 = vunpack.c.h.b16 %v757
      %v1030 = vunpack.c.l.b16 %v758
      %v1031 = vunpack.c.h.b16 %v758
      %v1032 = vunpack.c.l.b16 %v759
      %v1033 = vunpack.c.h.b16 %v759
      %v1034 = vunpack.c.l.b16 %v760
      %v1035 = vunpack.c.h.b16 %v760
      %v1036 = vunpack.c.l.b16 %v761
      %v1037 = vunpack.c.h.b16 %v761
      %v1038 = vunpack.c.l.b16 %v762
      %v1039 = vunpack.c.h.b16 %v762
      %v1040 = vunpack.c.l.b16 %v763
      %v1041 = vunpack.c.h.b16 %v763
      %v1042 = vunpack.c.l.b16 %v764
      %v1043 = vunpack.c.h.b16 %v764
      %v1044 = vunpack.c.l.b16 %v765
      %v1045 = vunpack.c.h.b16 %v765
      %v1046 = vunpack.c.l.b16 %v766
      %v1047 = vunpack.c.h.b16 %v766
      %v1048 = vunpack.c.l.b16 %v767
      %v1049 = vunpack.c.h.b16 %v767
      %v1050 = vunpack.c.l.b16 %v768
      %v1051 = vunpack.c.h.b16 %v768
      %v1052 = vunpack.c.l.b16 %v769
      %v1053 = vunpack.c.h.b16 %v769
      %v1054 = vunpack.c.l.b16 %v770
      %v1055 = vunpack.c.h.b16 %v770
      %v1056 = vunpack.c.l.b16 %v771
      %v1057 = vunpack.c.h.b16 %v771
      %v1058 = vunpack.c.l.b16 %v772
      %v1059 = vunpack.c.h.b16 %v772
      %v1060 = vunpack.c.l.b16 %v773
      %v1061 = vunpack.c.h.b16 %v773
      %v1062 = vunpack.c.l.b16 %v774
      %v1063 = vunpack.c.h.b16 %v774
      %v1064 = vunpack.c.l.b16 %v775
      %v1065 = vunpack.c.h.b16 %v775
      %v1066 = vunpack.c.l.b16 %v776
      %v1067 = vunpack.c.h.b16 %v776
      %v1068 = vunpack.c.l.b16 %v777
      %v1069 = vunpack.c.h.b16 %v777
      %v1070 = vunpack.c.l.b16 %v778
      %v1071 = vunpack.c.h.b16 %v778
      %v1072 = vunpack.c.l.b16 %v779
      %v1073 = vunpack.c.h.b16 %v779
      %v1074 = vunpack.c.l.b16 %v780
      %v1075 = vunpack.c.h.b16 %v780
      %v1076 = vunpack.c.l.b16 %v781
      %v1077 = vunpack.c.h.b16 %v781
      %v1078 = vunpack.c.l.b16 %v782
      %v1079 = vunpack.c.h.b16 %v782
      %v1080 = vunpack.c.l.b16 %v783
      %v1081 = vunpack.c.h.b16 %v783
      %v1082 = vunpack.c.l.b16 %v784
      %v1083 = vunpack.c.h.b16 %v784
      %v1084 = vunpack.c.l.b16 %v785
      %v1085 = vunpack.c.h.b16 %v785
      %v1086 = vunpack.c.l.b16 %v786
      %v1087 = vunpack.c.h.b16 %v786
      %v1088 = vunpack.c.l.b16 %v787
      %v1089 = vunpack.c.h.b16 %v787
      %v1090 = vunpack.c.l.b16 %v788
      %v1091 = vunpack.c.h.b16 %v788
      %v1092 = vunpack.c.l.b16 %v789
      %v1093 = vunpack.c.h.b16 %v789
      %v1094 = vunpack.c.l.b16 %v790
      %v1095 = vunpack.c.h.b16 %v790
      %v1096 = vunpack.c.l.b16 %v791
      %v1097 = vunpack.c.h.b16 %v791
      %v1098 = vpack.c.b16 %v904, %v902
      %v1099 = vpack.c.b16 %v905, %v903
      %v1100 = vpack.c.b16 %v908, %v906
      %v1101 = vpack.c.b16 %v909, %v907
      %v1102 = vpack.c.b16 %v912, %v910
      %v1103 = vpack.c.b16 %v913, %v911
      %v1104 = vpack.c.b16 %v916, %v914
      %v1105 = vpack.c.b16 %v917, %v915
      %v1106 = vpack.c.b16 %v920, %v918
      %v1107 = vpack.c.b16 %v921, %v919
      %v1108 = vpack.c.b16 %v924, %v922
      %v1109 = vpack.c.b16 %v925, %v923
      %v1110 = vpack.c.b16 %v928, %v926
      %v1111 = vpack.c.b16 %v929, %v927
      %v1112 = vpack.c.b16 %v932, %v930
      %v1113 = vpack.c.b16 %v933, %v931
      %v1114 = vpack.c.b16 %v936, %v934
      %v1115 = vpack.c.b16 %v937, %v935
      %v1116 = vpack.c.b16 %v940, %v938
      %v1117 = vpack.c.b16 %v941, %v939
      %v1118 = vpack.c.b16 %v944, %v942
      %v1119 = vpack.c.b16 %v945, %v943
      %v1120 = vpack.c.b16 %v948, %v946
      %v1121 = vpack.c.b16 %v949, %v947
      %v1122 = vpack.c.b16 %v952, %v950
      %v1123 = vpack.c.b16 %v953, %v951
      %v1124 = vpack.c.b16 %v956, %v954
      %v1125 = vpack.c.b16 %v957, %v955
      %v1126 = vpack.c.b16 %v960, %v958
      %v1127 = vpack.c.b16 %v961, %v959
      %v1128 = vpack.c.b16 %v964, %v962
      %v1129 = vpack.c.b16 %v965, %v963
      %v1130 = vpack.c.b16 %v968, %v966
      %v1131 = vpack.c.b16 %v969, %v967
      %v1132 = vpack.c.b16 %v972, %v970
      %v1133 = vpack.c.b16 %v973, %v971
      %v1134 = vpack.c.b16 %v976, %v974
      %v1135 = vpack.c.b16 %v977, %v975
      %v1136 = vpack.c.b16 %v980, %v978
      %v1137 = vpack.c.b16 %v981, %v979
      %v1138 = vpack.c.b16 %v984, %v982
      %v1139 = vpack.c.b16 %v985, %v983
      %v1140 = vpack.c.b16 %v988, %v986
      %v1141 = vpack.c.b16 %v989, %v987
      %v1142 = vpack.c.b16 %v992, %v990
      %v1143 = vpack.c.b16 %v993, %v991
      %v1144 = vpack.c.b16 %v996, %v994
      %v1145 = vpack.c.b16 %v997, %v995
      %v1146 = vpack.c.b16 %v1000, %v998
      %v1147 = vpack.c.b16 %v1001, %v999
      %v1148 = vpack.c.b16 %v1004, %v1002
      %v1149 = vpack.c.b16 %v1005, %v1003
      %v1150 = vpack.c.b16 %v1008, %v1006
      %v1151 = vpack.c.b16 %v1009, %v1007
      %v1152 = vpack.c.b16 %v1012, %v1010
      %v1153 = vpack.c.b16 %v1013, %v1011
      %v1154 = vpack.c.b16 %v1016, %v1014
      %v1155 = vpack.c.b16 %v1017, %v1015
      %v1156 = vpack.c.b16 %v1020, %v1018
      %v1157 = vpack.c.b16 %v1021, %v1019
      %v1158 = vpack.c.b16 %v1024, %v1022
      %v1159 = vpack.c.b16 %v1025, %v1023
      %v1160 = vpack.c.b16 %v1028, %v1026
      %v1161 = vpack.c.b16 %v1029, %v1027
      %v1162 = vpack.c.b16 %v1032, %v1030
      %v1163 = vpack.c.b16 %v1033, %v1031
      %v1164 = vpack.c.b16 %v1036, %v1034
      %v1165 = vpack.c.b16 %v1037, %v1035
      %v1166 = vpack.c.b16 %v1040, %v1038
      %v1167 = vpack.c.b16 %v1041, %v1039
      %v1168 = vpack.c.b16 %v1044, %v1042
      %v1169 = vpack.c.b16 %v1045, %v1043
      %v1170 = vpack.c.b16 %v1048, %v1046
      %v1171 = vpack.c.b16 %v1049, %v1047
      %v1172 = vpack.c.b16 %v1052, %v1050
      %v1173 = vpack.c.b16 %v1053, %v1051
      %v1174 = vpack.c.b16 %v1056, %v1054
      %v1175 = vpack.c.b16 %v1057, %v1055
      %v1176 = vpack.c.b16 %v1060, %v1058
      %v1177 = vpack.c.b16 %v1061, %v1059
      %v1178 = vpack.c.b16 %v1064, %v1062
      %v1179 = vpack.c.b16 %v1065, %v1063
      %v1180 = vpack.c.b16 %v1068, %v1066
      %v1181 = vpack.c.b16 %v1069, %v1067
      %v1182 = vpack.c.b16 %v1072, %v1070
      %v1183 = vpack.c.b16 %v1073, %v1071
      %v1184 = vpack.c.b16 %v1076, %v1074
      %v1185 = vpack.c.b16 %v1077, %v1075
      %v1186 = vpack.c.b16 %v1080, %v1078
      %v1187 = vpack.c.b16 %v1081, %v1079
      %v1188 = vpack.c.b16 %v1084, %v1082
      %v1189 = vpack.c.b16 %v1085, %v1083
      %v1190 = vpack.c.b16 %v1088, %v1086
      %v1191 = vpack.c.b16 %v1089, %v1087
      %v1192 = vpack.c.b16 %v1092, %v1090
      %v1193 = vpack.c.b16 %v1093, %v1091
      %v1194 = vpack.c.b16 %v1096, %v1094
      %v1195 = vpack.c.b16 %v1097, %v1095
      %vm1294 = vcmask 130048
      %v1296 = vsel %vm1294, %v644, 0
      %v1299 = vsel %vm1294, %v651, 0
      %v1302 = vsel %vm1294, %v658, 0
      %v1305 = vsel %vm1294, %v665, 0
      %v1308 = vsel %vm1294, %v672, 0
      %v1311 = vsel %vm1294, %v679, 0
      %v1314 = vsel %vm1294, %v686, 0
      %v1317 = vsel %vm1294, %v693, 0
      %1319 = vmatprep.subr.bf16.mxu0 %v1113
      %1320 = vmatpush1.bf16.msra.mxu0 %v1112
      %1321 = vmatprep.subr.bf16.mxu0 %v1111
      %1322 = vmatpush1.bf16.msra.mxu0 %v1110
      %1323 = vmatprep.subr.bf16.mxu0 %v1109
      %1324 = vmatpush1.bf16.msra.mxu0 %v1108
      %1325 = vmatprep.subr.bf16.mxu0 %v1107
      %1326 = vmatpush1.bf16.msra.mxu0 %v1106
      %1327 = vmatprep.subr.bf16.mxu0 %v1105
      %1328 = vmatpush1.bf16.msra.mxu0 %v1104
      %1329 = vmatprep.subr.bf16.mxu0 %v1103
      %1330 = vmatpush1.bf16.msra.mxu0 %v1102
      %1331 = vmatprep.subr.bf16.mxu0 %v1101
      %1332 = vmatpush1.bf16.msra.mxu0 %v1100
      %1333 = vmatprep.subr.bf16.mxu0 %v1099
      %1334 = vmatpush1.bf16.msra.mxu0 %v1098
      %1335 = vmatprep.subr.bf16.mxu0 %v1129
      %1336 = vmatpush2.bf16.msra.mxu0 %v1128
      %1337 = vmatprep.subr.bf16.mxu0 %v1127
      %1338 = vmatpush2.bf16.msra.mxu0 %v1126
      %1339 = vmatprep.subr.bf16.mxu0 %v1125
      %1340 = vmatpush2.bf16.msra.mxu0 %v1124
      %1341 = vmatprep.subr.bf16.mxu0 %v1123
      %1342 = vmatpush2.bf16.msra.mxu0 %v1122
      %1343 = vmatprep.subr.bf16.mxu0 %v1121
      %1344 = vmatpush2.bf16.msra.mxu0 %v1120
      %1345 = vmatprep.subr.bf16.mxu0 %v1119
      %1346 = vmatpush2.bf16.msra.mxu0 %v1118
      %1347 = vmatprep.subr.bf16.mxu0 %v1117
      %1348 = vmatpush2.bf16.msra.mxu0 %v1116
      %1349 = vmatprep.subr.bf16.mxu0 %v1115
      %1350 = vmatpush2.bf16.msra.mxu0 %v1114
      %1351 = vmatprep.mubr.bf16.mxu0 %v639
      %1352 = vmatmul.mubr.bf16.gmra.mxu0 %v638
      %v1353 = vpop.f32.mrf.mxu0
      %v1354 = vadd.f32 %v797, %v1353
      %v1355 = vpop.f32.mrf.mxu0
      %v1356 = vadd.f32 %v801, %v1355
      %v1357 = vpop.f32.mrf.mxu0
      %v1358 = vadd.f32 %v797, %v1357
      %v1359 = vpop.f32.mrf.mxu0
      %v1360 = vadd.f32 %v801, %v1359
      %1361 = vmatprep.mubr.bf16.mxu0 %v646
      %1362 = vmatmul.mubr.bf16.gmra.mxu0 %v645
      %v1363 = vpop.f32.mrf.mxu0
      %v1364 = vadd.f32 %v797, %v1363
      %v1365 = vpop.f32.mrf.mxu0
      %v1366 = vadd.f32 %v801, %v1365
      %v1367 = vpop.f32.mrf.mxu0
      %v1368 = vadd.f32 %v797, %v1367
      %v1369 = vpop.f32.mrf.mxu0
      %v1370 = vadd.f32 %v801, %v1369
      %1371 = vmatprep.mubr.bf16.mxu0 %v653
      %1372 = vmatmul.mubr.bf16.gmra.mxu0 %v652
      %v1373 = vpop.f32.mrf.mxu0
      %v1374 = vadd.f32 %v797, %v1373
      %v1375 = vpop.f32.mrf.mxu0
      %v1376 = vadd.f32 %v801, %v1375
      %v1377 = vpop.f32.mrf.mxu0
      %v1378 = vadd.f32 %v797, %v1377
      %v1379 = vpop.f32.mrf.mxu0
      %v1380 = vadd.f32 %v801, %v1379
      %1381 = vmatprep.mubr.bf16.mxu0 %v660
      %1382 = vmatmul.mubr.bf16.gmra.mxu0 %v659
      %v1383 = vpop.f32.mrf.mxu0
      %v1384 = vadd.f32 %v797, %v1383
      %v1385 = vpop.f32.mrf.mxu0
      %v1386 = vadd.f32 %v801, %v1385
      %v1387 = vpop.f32.mrf.mxu0
      %v1388 = vadd.f32 %v797, %v1387
      %v1389 = vpop.f32.mrf.mxu0
      %v1390 = vadd.f32 %v801, %v1389
      %1391 = vmatprep.mubr.bf16.mxu0 %v667
      %1392 = vmatmul.mubr.bf16.gmra.mxu0 %v666
      %v1393 = vpop.f32.mrf.mxu0
      %v1394 = vadd.f32 %v797, %v1393
      %v1395 = vpop.f32.mrf.mxu0
      %v1396 = vadd.f32 %v801, %v1395
      %v1397 = vpop.f32.mrf.mxu0
      %v1398 = vadd.f32 %v797, %v1397
      %v1399 = vpop.f32.mrf.mxu0
      %v1400 = vadd.f32 %v801, %v1399
      %1401 = vmatprep.mubr.bf16.mxu0 %v674
      %1402 = vmatmul.mubr.bf16.gmra.mxu0 %v673
      %v1403 = vpop.f32.mrf.mxu0
      %v1404 = vadd.f32 %v797, %v1403
      %v1405 = vpop.f32.mrf.mxu0
      %v1406 = vadd.f32 %v801, %v1405
      %v1407 = vpop.f32.mrf.mxu0
      %v1408 = vadd.f32 %v797, %v1407
      %v1409 = vpop.f32.mrf.mxu0
      %v1410 = vadd.f32 %v801, %v1409
      %1411 = vmatprep.mubr.bf16.mxu0 %v681
      %1412 = vmatmul.mubr.bf16.gmra.mxu0 %v680
      %v1413 = vpop.f32.mrf.mxu0
      %v1414 = vadd.f32 %v797, %v1413
      %v1415 = vpop.f32.mrf.mxu0
      %v1416 = vadd.f32 %v801, %v1415
      %v1417 = vpop.f32.mrf.mxu0
      %v1418 = vadd.f32 %v797, %v1417
      %v1419 = vpop.f32.mrf.mxu0
      %v1420 = vadd.f32 %v801, %v1419
      %1421 = vmatprep.mubr.bf16.mxu0 %v688
      %1422 = vmatmul.mubr.bf16.gmra.mxu0 %v687
      %v1423 = vpop.f32.mrf.mxu0
      %v1424 = vadd.f32 %v797, %v1423
      %v1425 = vpop.f32.mrf.mxu0
      %v1426 = vadd.f32 %v801, %v1425
      %v1427 = vpop.f32.mrf.mxu0
      %v1428 = vadd.f32 %v797, %v1427
      %v1429 = vpop.f32.mrf.mxu0
      %v1430 = vadd.f32 %v801, %v1429
      %1431 = vdwg.mxu0
      %1432 = vmatprep.subr.bf16.mxu0 %v1145
      %1433 = vmatpush1.bf16.msra.mxu0 %v1144
      %1434 = vmatprep.subr.bf16.mxu0 %v1143
      %1435 = vmatpush1.bf16.msra.mxu0 %v1142
      %1436 = vmatprep.subr.bf16.mxu0 %v1141
      %1437 = vmatpush1.bf16.msra.mxu0 %v1140
      %1438 = vmatprep.subr.bf16.mxu0 %v1139
      %1439 = vmatpush1.bf16.msra.mxu0 %v1138
      %1440 = vmatprep.subr.bf16.mxu0 %v1137
      %1441 = vmatpush1.bf16.msra.mxu0 %v1136
      %1442 = vmatprep.subr.bf16.mxu0 %v1135
      %1443 = vmatpush1.bf16.msra.mxu0 %v1134
      %1444 = vmatprep.subr.bf16.mxu0 %v1133
      %1445 = vmatpush1.bf16.msra.mxu0 %v1132
      %1446 = vmatprep.subr.bf16.mxu0 %v1131
      %1447 = vmatpush1.bf16.msra.mxu0 %v1130
      %1448 = vmatprep.subr.bf16.mxu0 %v1161
      %1449 = vmatpush2.bf16.msra.mxu0 %v1160
      %1450 = vmatprep.subr.bf16.mxu0 %v1159
      %1451 = vmatpush2.bf16.msra.mxu0 %v1158
      %1452 = vmatprep.subr.bf16.mxu0 %v1157
      %1453 = vmatpush2.bf16.msra.mxu0 %v1156
      %1454 = vmatprep.subr.bf16.mxu0 %v1155
      %1455 = vmatpush2.bf16.msra.mxu0 %v1154
      %1456 = vmatprep.subr.bf16.mxu0 %v1153
      %1457 = vmatpush2.bf16.msra.mxu0 %v1152
      %1458 = vmatprep.subr.bf16.mxu0 %v1151
      %1459 = vmatpush2.bf16.msra.mxu0 %v1150
      %1460 = vmatprep.subr.bf16.mxu0 %v1149
      %1461 = vmatpush2.bf16.msra.mxu0 %v1148
      %1462 = vmatprep.subr.bf16.mxu0 %v1147
      %1463 = vmatpush2.bf16.msra.mxu0 %v1146
      %1464 = vmatprep.mubr.bf16.mxu0 %v641
      %1465 = vmatmul.mubr.bf16.gmra.mxu0 %v640
      %v1466 = vpop.f32.mrf.mxu0
      %v1467 = vadd.f32 %v1354, %v1466
      %v1468 = vpop.f32.mrf.mxu0
      %v1469 = vadd.f32 %v1356, %v1468
      %v1470 = vpop.f32.mrf.mxu0
      %v1471 = vadd.f32 %v1358, %v1470
      %v1472 = vpop.f32.mrf.mxu0
      %v1473 = vadd.f32 %v1360, %v1472
      %1474 = vmatprep.mubr.bf16.mxu0 %v648
      %1475 = vmatmul.mubr.bf16.gmra.mxu0 %v647
      %v1476 = vpop.f32.mrf.mxu0
      %v1477 = vadd.f32 %v1364, %v1476
      %v1478 = vpop.f32.mrf.mxu0
      %v1479 = vadd.f32 %v1366, %v1478
      %v1480 = vpop.f32.mrf.mxu0
      %v1481 = vadd.f32 %v1368, %v1480
      %v1482 = vpop.f32.mrf.mxu0
      %v1483 = vadd.f32 %v1370, %v1482
      %1484 = vmatprep.mubr.bf16.mxu0 %v655
      %1485 = vmatmul.mubr.bf16.gmra.mxu0 %v654
      %v1486 = vpop.f32.mrf.mxu0
      %v1487 = vadd.f32 %v1374, %v1486
      %v1488 = vpop.f32.mrf.mxu0
      %v1489 = vadd.f32 %v1376, %v1488
      %v1490 = vpop.f32.mrf.mxu0
      %v1491 = vadd.f32 %v1378, %v1490
      %v1492 = vpop.f32.mrf.mxu0
      %v1493 = vadd.f32 %v1380, %v1492
      %1494 = vmatprep.mubr.bf16.mxu0 %v662
      %1495 = vmatmul.mubr.bf16.gmra.mxu0 %v661
      %v1496 = vpop.f32.mrf.mxu0
      %v1497 = vadd.f32 %v1384, %v1496
      %v1498 = vpop.f32.mrf.mxu0
      %v1499 = vadd.f32 %v1386, %v1498
      %v1500 = vpop.f32.mrf.mxu0
      %v1501 = vadd.f32 %v1388, %v1500
      %v1502 = vpop.f32.mrf.mxu0
      %v1503 = vadd.f32 %v1390, %v1502
      %1504 = vmatprep.mubr.bf16.mxu0 %v669
      %1505 = vmatmul.mubr.bf16.gmra.mxu0 %v668
      %v1506 = vpop.f32.mrf.mxu0
      %v1507 = vadd.f32 %v1394, %v1506
      %v1508 = vpop.f32.mrf.mxu0
      %v1509 = vadd.f32 %v1396, %v1508
      %v1510 = vpop.f32.mrf.mxu0
      %v1511 = vadd.f32 %v1398, %v1510
      %v1512 = vpop.f32.mrf.mxu0
      %v1513 = vadd.f32 %v1400, %v1512
      %1514 = vmatprep.mubr.bf16.mxu0 %v676
      %1515 = vmatmul.mubr.bf16.gmra.mxu0 %v675
      %v1516 = vpop.f32.mrf.mxu0
      %v1517 = vadd.f32 %v1404, %v1516
      %v1518 = vpop.f32.mrf.mxu0
      %v1519 = vadd.f32 %v1406, %v1518
      %v1520 = vpop.f32.mrf.mxu0
      %v1521 = vadd.f32 %v1408, %v1520
      %v1522 = vpop.f32.mrf.mxu0
      %v1523 = vadd.f32 %v1410, %v1522
      %1524 = vmatprep.mubr.bf16.mxu0 %v683
      %1525 = vmatmul.mubr.bf16.gmra.mxu0 %v682
      %v1526 = vpop.f32.mrf.mxu0
      %v1527 = vadd.f32 %v1414, %v1526
      %v1528 = vpop.f32.mrf.mxu0
      %v1529 = vadd.f32 %v1416, %v1528
      %v1530 = vpop.f32.mrf.mxu0
      %v1531 = vadd.f32 %v1418, %v1530
      %v1532 = vpop.f32.mrf.mxu0
      %v1533 = vadd.f32 %v1420, %v1532
      %1534 = vmatprep.mubr.bf16.mxu0 %v690
      %1535 = vmatmul.mubr.bf16.gmra.mxu0 %v689
      %v1536 = vpop.f32.mrf.mxu0
      %v1537 = vadd.f32 %v1424, %v1536
      %v1538 = vpop.f32.mrf.mxu0
      %v1539 = vadd.f32 %v1426, %v1538
      %v1540 = vpop.f32.mrf.mxu0
      %v1541 = vadd.f32 %v1428, %v1540
      %v1542 = vpop.f32.mrf.mxu0
      %v1543 = vadd.f32 %v1430, %v1542
      %1544 = vdwg.mxu0
      %1545 = vmatprep.subr.bf16.mxu0 %v1177
      %1546 = vmatpush1.bf16.msra.mxu0 %v1176
      %1547 = vmatprep.subr.bf16.mxu0 %v1175
      %1548 = vmatpush1.bf16.msra.mxu0 %v1174
      %1549 = vmatprep.subr.bf16.mxu0 %v1173
      %1550 = vmatpush1.bf16.msra.mxu0 %v1172
      %1551 = vmatprep.subr.bf16.mxu0 %v1171
      %1552 = vmatpush1.bf16.msra.mxu0 %v1170
      %1553 = vmatprep.subr.bf16.mxu0 %v1169
      %1554 = vmatpush1.bf16.msra.mxu0 %v1168
      %1555 = vmatprep.subr.bf16.mxu0 %v1167
      %1556 = vmatpush1.bf16.msra.mxu0 %v1166
      %1557 = vmatprep.subr.bf16.mxu0 %v1165
      %1558 = vmatpush1.bf16.msra.mxu0 %v1164
      %1559 = vmatprep.subr.bf16.mxu0 %v1163
      %1560 = vmatpush1.bf16.msra.mxu0 %v1162
      %1561 = vmatprep.subr.bf16.mxu0 %v1193
      %1562 = vmatpush2.bf16.msra.mxu0 %v1192
      %1563 = vmatprep.subr.bf16.mxu0 %v1191
      %1564 = vmatpush2.bf16.msra.mxu0 %v1190
      %1565 = vmatprep.subr.bf16.mxu0 %v1189
      %1566 = vmatpush2.bf16.msra.mxu0 %v1188
      %1567 = vmatprep.subr.bf16.mxu0 %v1187
      %1568 = vmatpush2.bf16.msra.mxu0 %v1186
      %1569 = vmatprep.subr.bf16.mxu0 %v1185
      %1570 = vmatpush2.bf16.msra.mxu0 %v1184
      %1571 = vmatprep.subr.bf16.mxu0 %v1183
      %1572 = vmatpush2.bf16.msra.mxu0 %v1182
      %1573 = vmatprep.subr.bf16.mxu0 %v1181
      %1574 = vmatpush2.bf16.msra.mxu0 %v1180
      %1575 = vmatprep.subr.bf16.mxu0 %v1179
      %1576 = vmatpush2.bf16.msra.mxu0 %v1178
      %1577 = vmatprep.mubr.bf16.mxu0 %v643
      %1578 = vmatmul.mubr.bf16.gmra.mxu0 %v642
      %v1579 = vpop.f32.mrf.mxu0
      %v1580 = vadd.f32 %v1467, %v1579
      %v1581 = vpop.f32.mrf.mxu0
      %v1582 = vadd.f32 %v1469, %v1581
      %v1583 = vpop.f32.mrf.mxu0
      %v1584 = vadd.f32 %v1471, %v1583
      %v1585 = vpop.f32.mrf.mxu0
      %v1586 = vadd.f32 %v1473, %v1585
      %1587 = vmatprep.mubr.bf16.mxu0 %v650
      %1588 = vmatmul.mubr.bf16.gmra.mxu0 %v649
      %v1589 = vpop.f32.mrf.mxu0
      %v1590 = vadd.f32 %v1477, %v1589
      %v1591 = vpop.f32.mrf.mxu0
      %v1592 = vadd.f32 %v1479, %v1591
      %v1593 = vpop.f32.mrf.mxu0
      %v1594 = vadd.f32 %v1481, %v1593
      %v1595 = vpop.f32.mrf.mxu0
      %v1596 = vadd.f32 %v1483, %v1595
      %1597 = vmatprep.mubr.bf16.mxu0 %v657
      %1598 = vmatmul.mubr.bf16.gmra.mxu0 %v656
      %v1599 = vpop.f32.mrf.mxu0
      %v1600 = vadd.f32 %v1487, %v1599
      %v1601 = vpop.f32.mrf.mxu0
      %v1602 = vadd.f32 %v1489, %v1601
      %v1603 = vpop.f32.mrf.mxu0
      %v1604 = vadd.f32 %v1491, %v1603
      %v1605 = vpop.f32.mrf.mxu0
      %v1606 = vadd.f32 %v1493, %v1605
      %1607 = vmatprep.mubr.bf16.mxu0 %v664
      %1608 = vmatmul.mubr.bf16.gmra.mxu0 %v663
      %v1609 = vpop.f32.mrf.mxu0
      %v1610 = vadd.f32 %v1497, %v1609
      %v1611 = vpop.f32.mrf.mxu0
      %v1612 = vadd.f32 %v1499, %v1611
      %v1613 = vpop.f32.mrf.mxu0
      %v1614 = vadd.f32 %v1501, %v1613
      %v1615 = vpop.f32.mrf.mxu0
      %v1616 = vadd.f32 %v1503, %v1615
      %1617 = vmatprep.mubr.bf16.mxu0 %v671
      %1618 = vmatmul.mubr.bf16.gmra.mxu0 %v670
      %v1619 = vpop.f32.mrf.mxu0
      %v1620 = vadd.f32 %v1507, %v1619
      %v1621 = vpop.f32.mrf.mxu0
      %v1622 = vadd.f32 %v1509, %v1621
      %v1623 = vpop.f32.mrf.mxu0
      %v1624 = vadd.f32 %v1511, %v1623
      %v1625 = vpop.f32.mrf.mxu0
      %v1626 = vadd.f32 %v1513, %v1625
      %1627 = vmatprep.mubr.bf16.mxu0 %v678
      %1628 = vmatmul.mubr.bf16.gmra.mxu0 %v677
      %v1629 = vpop.f32.mrf.mxu0
      %v1630 = vadd.f32 %v1517, %v1629
      %v1631 = vpop.f32.mrf.mxu0
      %v1632 = vadd.f32 %v1519, %v1631
      %v1633 = vpop.f32.mrf.mxu0
      %v1634 = vadd.f32 %v1521, %v1633
      %v1635 = vpop.f32.mrf.mxu0
      %v1636 = vadd.f32 %v1523, %v1635
      %1637 = vmatprep.mubr.bf16.mxu0 %v685
      %1638 = vmatmul.mubr.bf16.gmra.mxu0 %v684
      %v1639 = vpop.f32.mrf.mxu0
      %v1640 = vadd.f32 %v1527, %v1639
      %v1641 = vpop.f32.mrf.mxu0
      %v1642 = vadd.f32 %v1529, %v1641
      %v1643 = vpop.f32.mrf.mxu0
      %v1644 = vadd.f32 %v1531, %v1643
      %v1645 = vpop.f32.mrf.mxu0
      %v1646 = vadd.f32 %v1533, %v1645
      %1647 = vmatprep.mubr.bf16.mxu0 %v692
      %1648 = vmatmul.mubr.bf16.gmra.mxu0 %v691
      %v1649 = vpop.f32.mrf.mxu0
      %v1650 = vadd.f32 %v1537, %v1649
      %v1651 = vpop.f32.mrf.mxu0
      %v1652 = vadd.f32 %v1539, %v1651
      %v1653 = vpop.f32.mrf.mxu0
      %v1654 = vadd.f32 %v1541, %v1653
      %v1655 = vpop.f32.mrf.mxu0
      %v1656 = vadd.f32 %v1543, %v1655
      %1657 = vdwg.mxu0
      %1658 = vmatprep.subr.bf16.mxu0 0
      %1659 = vmatpush1.bf16.msra.mxu0 0
      %1660 = vmatprep.subr.bf16.mxu0 0
      %1661 = vmatpush1.bf16.msra.mxu0 0
      %1662 = vmatprep.subr.bf16.mxu0 0
      %1663 = vmatpush1.bf16.msra.mxu0 0
      %1664 = vmatprep.subr.bf16.mxu0 0
      %1665 = vmatpush1.bf16.msra.mxu0 0
      %1666 = vmatprep.subr.bf16.mxu0 0
      %1667 = vmatpush1.bf16.msra.mxu0 0
      %1668 = vmatprep.subr.bf16.mxu0 0
      %1669 = vmatpush1.bf16.msra.mxu0 0
      %1670 = vmatprep.subr.bf16.mxu0 0
      %1671 = vmatpush1.bf16.msra.mxu0 0
      %1672 = vmatprep.subr.bf16.mxu0 %v1195
      %1673 = vmatpush1.bf16.msra.mxu0 %v1194
      %1674 = vmatprep.subr.bf16.mxu0 0
      %1675 = vmatpush2.bf16.msra.mxu0 0
      %1676 = vmatprep.subr.bf16.mxu0 0
      %1677 = vmatpush2.bf16.msra.mxu0 0
      %1678 = vmatprep.subr.bf16.mxu0 0
      %1679 = vmatpush2.bf16.msra.mxu0 0
      %1680 = vmatprep.subr.bf16.mxu0 0
      %1681 = vmatpush2.bf16.msra.mxu0 0
      %1682 = vmatprep.subr.bf16.mxu0 0
      %1683 = vmatpush2.bf16.msra.mxu0 0
      %1684 = vmatprep.subr.bf16.mxu0 0
      %1685 = vmatpush2.bf16.msra.mxu0 0
      %1686 = vmatprep.subr.bf16.mxu0 0
      %1687 = vmatpush2.bf16.msra.mxu0 0
      %1688 = vmatprep.subr.bf16.mxu0 0
      %1689 = vmatpush2.bf16.msra.mxu0 0
      %1690 = vmatprep.mubr.bf16.mxu0 0
      %1691 = vmatmul.mubr.bf16.gmra.mxu0 %v1296
      %v1692 = vpop.f32.mrf.mxu0
      %v1693 = vadd.f32 %v1580, %v1692
      %v1694 = vpop.f32.mrf.mxu0
      %v1695 = vadd.f32 %v1582, %v1694
      %v1696 = vpop.f32.mrf.mxu0
      %v1697 = vadd.f32 %v1584, %v1696
      %v1698 = vpop.f32.mrf.mxu0
      %v1699 = vadd.f32 %v1586, %v1698
      %1700 = vmatprep.mubr.bf16.mxu0 0
      %1701 = vmatmul.mubr.bf16.gmra.mxu0 %v1299
      %v1702 = vpop.f32.mrf.mxu0
      %v1703 = vadd.f32 %v1590, %v1702
      %v1704 = vpop.f32.mrf.mxu0
      %v1705 = vadd.f32 %v1592, %v1704
      %v1706 = vpop.f32.mrf.mxu0
      %v1707 = vadd.f32 %v1594, %v1706
      %v1708 = vpop.f32.mrf.mxu0
      %v1709 = vadd.f32 %v1596, %v1708
      %1710 = vmatprep.mubr.bf16.mxu0 0
      %1711 = vmatmul.mubr.bf16.gmra.mxu0 %v1302
      %v1712 = vpop.f32.mrf.mxu0
      %v1713 = vadd.f32 %v1600, %v1712
      %v1714 = vpop.f32.mrf.mxu0
      %v1715 = vadd.f32 %v1602, %v1714
      %v1716 = vpop.f32.mrf.mxu0
      %v1717 = vadd.f32 %v1604, %v1716
      %v1718 = vpop.f32.mrf.mxu0
      %v1719 = vadd.f32 %v1606, %v1718
      %1720 = vmatprep.mubr.bf16.mxu0 0
      %1721 = vmatmul.mubr.bf16.gmra.mxu0 %v1305
      %v1722 = vpop.f32.mrf.mxu0
      %v1723 = vadd.f32 %v1610, %v1722
      %v1724 = vpop.f32.mrf.mxu0
      %v1725 = vadd.f32 %v1612, %v1724
      %v1726 = vpop.f32.mrf.mxu0
      %v1727 = vadd.f32 %v1614, %v1726
      %v1728 = vpop.f32.mrf.mxu0
      %v1729 = vadd.f32 %v1616, %v1728
      %1730 = vmatprep.mubr.bf16.mxu0 0
      %1731 = vmatmul.mubr.bf16.gmra.mxu0 %v1308
      %v1732 = vpop.f32.mrf.mxu0
      %v1733 = vadd.f32 %v1620, %v1732
      %v1734 = vpop.f32.mrf.mxu0
      %v1735 = vadd.f32 %v1622, %v1734
      %v1736 = vpop.f32.mrf.mxu0
      %v1737 = vadd.f32 %v1624, %v1736
      %v1738 = vpop.f32.mrf.mxu0
      %v1739 = vadd.f32 %v1626, %v1738
      %1740 = vmatprep.mubr.bf16.mxu0 0
      %1741 = vmatmul.mubr.bf16.gmra.mxu0 %v1311
      %v1742 = vpop.f32.mrf.mxu0
      %v1743 = vadd.f32 %v1630, %v1742
      %v1744 = vpop.f32.mrf.mxu0
      %v1745 = vadd.f32 %v1632, %v1744
      %v1746 = vpop.f32.mrf.mxu0
      %v1747 = vadd.f32 %v1634, %v1746
      %v1748 = vpop.f32.mrf.mxu0
      %v1749 = vadd.f32 %v1636, %v1748
      %1750 = vmatprep.mubr.bf16.mxu0 0
      %1751 = vmatmul.mubr.bf16.gmra.mxu0 %v1314
      %v1752 = vpop.f32.mrf.mxu0
      %v1753 = vadd.f32 %v1640, %v1752
      %v1754 = vpop.f32.mrf.mxu0
      %v1755 = vadd.f32 %v1642, %v1754
      %v1756 = vpop.f32.mrf.mxu0
      %v1757 = vadd.f32 %v1644, %v1756
      %v1758 = vpop.f32.mrf.mxu0
      %v1759 = vadd.f32 %v1646, %v1758
      %1760 = vmatprep.mubr.bf16.mxu0 0
      %1761 = vmatmul.mubr.bf16.gmra.mxu0 %v1317
      %v1762 = vpop.f32.mrf.mxu0
      %v1763 = vadd.f32 %v1650, %v1762
      %v1764 = vpop.f32.mrf.mxu0
      %v1765 = vadd.f32 %v1652, %v1764
      %v1766 = vpop.f32.mrf.mxu0
      %v1767 = vadd.f32 %v1654, %v1766
      %v1768 = vpop.f32.mrf.mxu0
      %v1769 = vadd.f32 %v1656, %v1768
      %1770 = vdwg.mxu0
      %v1771 = vmax.f32 %v1693, 0.0
      %v1772 = vmax.f32 %v1695, 0.0
      %v1773 = vmax.f32 %v1697, 0.0
      %v1774 = vmax.f32 %v1699, 0.0
      %v1775 = vmax.f32 %v1703, 0.0
      %v1776 = vmax.f32 %v1705, 0.0
      %v1777 = vmax.f32 %v1707, 0.0
      %v1778 = vmax.f32 %v1709, 0.0
      %v1779 = vmax.f32 %v1713, 0.0
      %v1780 = vmax.f32 %v1715, 0.0
      %v1781 = vmax.f32 %v1717, 0.0
      %v1782 = vmax.f32 %v1719, 0.0
      %v1783 = vmax.f32 %v1723, 0.0
      %v1784 = vmax.f32 %v1725, 0.0
      %v1785 = vmax.f32 %v1727, 0.0
      %v1786 = vmax.f32 %v1729, 0.0
      %v1787 = vmax.f32 %v1733, 0.0
      %v1788 = vmax.f32 %v1735, 0.0
      %v1789 = vmax.f32 %v1737, 0.0
      %v1790 = vmax.f32 %v1739, 0.0
      %v1791 = vmax.f32 %v1743, 0.0
      %v1792 = vmax.f32 %v1745, 0.0
      %v1793 = vmax.f32 %v1747, 0.0
      %v1794 = vmax.f32 %v1749, 0.0
      %v1795 = vmax.f32 %v1753, 0.0
      %v1796 = vmax.f32 %v1755, 0.0
      %v1797 = vmax.f32 %v1757, 0.0
      %v1798 = vmax.f32 %v1759, 0.0
      %v1799 = vmax.f32 %v1763, 0.0
      %v1800 = vmax.f32 %v1765, 0.0
      %v1801 = vmax.f32 %v1767, 0.0
      %v1802 = vmax.f32 %v1769, 0.0
      %v1803 = vpack.c.bf16 %v1773, %v1771
      %v1804 = vpack.c.bf16 %v1774, %v1772
      %v1805 = vpack.c.bf16 %v1777, %v1775
      %v1806 = vpack.c.bf16 %v1778, %v1776
      %v1807 = vpack.c.bf16 %v1781, %v1779
      %v1808 = vpack.c.bf16 %v1782, %v1780
      %v1809 = vpack.c.bf16 %v1785, %v1783
      %v1810 = vpack.c.bf16 %v1786, %v1784
      %v1811 = vpack.c.bf16 %v1789, %v1787
      %v1812 = vpack.c.bf16 %v1790, %v1788
      %v1813 = vpack.c.bf16 %v1793, %v1791
      %v1814 = vpack.c.bf16 %v1794, %v1792
      %v1815 = vpack.c.bf16 %v1797, %v1795
      %v1816 = vpack.c.bf16 %v1798, %v1796
      %v1817 = vpack.c.bf16 %v1801, %v1799
      %v1818 = vpack.c.bf16 %v1802, %v1800
      %v1819 = vld [vmem:[%s4] sm:$0xff]
      %v1820 = vld [vmem:[%s4 + $0x8] sm:$0xff]
      %v1821 = vld [vmem:[%s4 + $0x10] sm:$0xff]
      %v1822 = vld [vmem:[%s4 + $0x18] sm:$0xff]
      %v1823 = vld [vmem:[%s4 + $0x20] sm:$0xff]
      %v1824 = vld [vmem:[%s4 + $0x28] sm:$0xff]
      %v1825 = vld [vmem:[%s4 + $0x30] sm:$0xff]
      %v1826 = vld [vmem:[%s4 + $0x38] sm:$0xff]
      %v1827 = vld [vmem:[%s4 + $0x40] sm:$0xff]
      %v1828 = vld [vmem:[%s4 + $0x48] sm:$0xff]
      %v1829 = vld [vmem:[%s4 + $0x50] sm:$0xff]
      %v1830 = vld [vmem:[%s4 + $0x58] sm:$0xff]
      %v1831 = vld [vmem:[%s4 + $0x60] sm:$0xff]
      %v1832 = vld [vmem:[%s4 + $0x68] sm:$0xff]
      %v1833 = vld [vmem:[%s4 + $0x70] sm:$0xff]
      %v1834 = vld [vmem:[%s4 + $0x78] sm:$0xff]
      %v1835 = vld [vmem:[%s4 + $0x80] sm:$0xff]
      %v1836 = vld [vmem:[%s4 + $0x88] sm:$0xff]
      %v1837 = vld [vmem:[%s4 + $0x90] sm:$0xff]
      %v1838 = vld [vmem:[%s4 + $0x98] sm:$0xff]
      %v1839 = vld [vmem:[%s4 + $0xa0] sm:$0xff]
      %v1840 = vld [vmem:[%s4 + $0xa8] sm:$0xff]
      %v1841 = vld [vmem:[%s4 + $0xb0] sm:$0xff]
      %v1842 = vld [vmem:[%s4 + $0xb8] sm:$0xff]
      %v1843 = vld [vmem:[%s4 + $0xc0] sm:$0xff]
      %v1844 = vld [vmem:[%s4 + $0xc8] sm:$0xff]
      %v1845 = vld [vmem:[%s4 + $0xd0] sm:$0xff]
      %v1846 = vld [vmem:[%s4 + $0xd8] sm:$0xff]
      %v1847 = vld [vmem:[%s4 + $0xe0] sm:$0xff]
      %v1848 = vld [vmem:[%s4 + $0xe8] sm:$0xff]
      %v1849 = vld [vmem:[%s4 + $0xf0] sm:$0xff]
      %v1850 = vld [vmem:[%s4 + $0xf8] sm:$0xff]
      %v1851 = vld [vmem:[%s4 + $0x100] sm:$0xff]
      %v1852 = vld [vmem:[%s4 + $0x108] sm:$0xff]
      %v1853 = vld [vmem:[%s4 + $0x110] sm:$0xff]
      %v1854 = vld [vmem:[%s4 + $0x118] sm:$0xff]
      %v1855 = vld [vmem:[%s4 + $0x120] sm:$0xff]
      %v1856 = vld [vmem:[%s4 + $0x128] sm:$0xff]
      %v1857 = vld [vmem:[%s4 + $0x130] sm:$0xff]
      %v1858 = vld [vmem:[%s4 + $0x138] sm:$0xff]
      %v1859 = vld [vmem:[%s4 + $0x140] sm:$0xff]
      %v1860 = vld [vmem:[%s4 + $0x148] sm:$0xff]
      %v1861 = vld [vmem:[%s4 + $0x150] sm:$0xff]
      %v1862 = vld [vmem:[%s4 + $0x158] sm:$0xff]
      %v1863 = vld [vmem:[%s4 + $0x160] sm:$0xff]
      %v1864 = vld [vmem:[%s4 + $0x168] sm:$0xff]
      %v1865 = vld [vmem:[%s4 + $0x170] sm:$0xff]
      %v1866 = vld [vmem:[%s4 + $0x178] sm:$0xff]
      %v1867 = vld [vmem:[%s4 + $0x180] sm:$0xff]
      %v1868 = vld [vmem:[%s4 + $0x188] sm:$0xff]
      %v1869 = vld [vmem:[%s4 + $0x190] sm:$0xff]
      %v1870 = vld [vmem:[%s4 + $0x198] sm:$0xff]
      %v1871 = vld [vmem:[%s4 + $0x1a0] sm:$0xff]
      %v1872 = vld [vmem:[%s4 + $0x1a8] sm:$0xff]
      %v1873 = vld [vmem:[%s4 + $0x1b0] sm:$0xff]
      %v1874 = vld [vmem:[%s4 + $0x1b8] sm:$0xff]
      %v1875 = vld [vmem:[%s4 + $0x1c0] sm:$0xff]
      %v1876 = vld [vmem:[%s4 + $0x1c8] sm:$0xff]
      %v1877 = vld [vmem:[%s4 + $0x1d0] sm:$0xff]
      %v1878 = vld [vmem:[%s4 + $0x1d8] sm:$0xff]
      %v1879 = vld [vmem:[%s4 + $0x1e0] sm:$0xff]
      %v1880 = vld [vmem:[%s4 + $0x1e8] sm:$0xff]
      %v1881 = vld [vmem:[%s4 + $0x1f0] sm:$0xff]
      %v1882 = vld [vmem:[%s4 + $0x1f8] sm:$0xff]
      %v1883 = vld [vmem:[%s5] sm:$0xf]
      %v1885 = vlaneseq
      %v1886 = vshrl.u32 %v1885, 7
      %v1887 = vsub.s32 0, %v1886
      %v1888 = vrot.slane %v1883, %v1887
      %v1889 = vlaneseq
      %v1890 = vshrl.u32 %v1889, 7
      %v1891 = vsub.s32 1, %v1890
      %v1892 = vrot.slane %v1883, %v1891
      %v1893 = vlaneseq
      %v1894 = vshrl.u32 %v1893, 7
      %v1895 = vsub.s32 2, %v1894
      %v1896 = vrot.slane %v1883, %v1895
      %v1897 = vlaneseq
      %v1898 = vshrl.u32 %v1897, 7
      %v1899 = vsub.s32 3, %v1898
      %v1900 = vrot.slane %v1883, %v1899
      %v1969 = vunpack.c.l.b16 %v1819
      %v1970 = vunpack.c.h.b16 %v1819
      %v1971 = vunpack.c.l.b16 %v1820
      %v1972 = vunpack.c.h.b16 %v1820
      %v1973 = vunpack.c.l.b16 %v1821
      %v1974 = vunpack.c.h.b16 %v1821
      %v1975 = vunpack.c.l.b16 %v1822
      %v1976 = vunpack.c.h.b16 %v1822
      %v1977 = vunpack.c.l.b16 %v1823
      %v1978 = vunpack.c.h.b16 %v1823
      %v1979 = vunpack.c.l.b16 %v1824
      %v1980 = vunpack.c.h.b16 %v1824
      %v1981 = vunpack.c.l.b16 %v1825
      %v1982 = vunpack.c.h.b16 %v1825
      %v1983 = vunpack.c.l.b16 %v1826
      %v1984 = vunpack.c.h.b16 %v1826
      %v1985 = vunpack.c.l.b16 %v1827
      %v1986 = vunpack.c.h.b16 %v1827
      %v1987 = vunpack.c.l.b16 %v1828
      %v1988 = vunpack.c.h.b16 %v1828
      %v1989 = vunpack.c.l.b16 %v1829
      %v1990 = vunpack.c.h.b16 %v1829
      %v1991 = vunpack.c.l.b16 %v1830
      %v1992 = vunpack.c.h.b16 %v1830
      %v1993 = vunpack.c.l.b16 %v1831
      %v1994 = vunpack.c.h.b16 %v1831
      %v1995 = vunpack.c.l.b16 %v1832
      %v1996 = vunpack.c.h.b16 %v1832
      %v1997 = vunpack.c.l.b16 %v1833
      %v1998 = vunpack.c.h.b16 %v1833
      %v1999 = vunpack.c.l.b16 %v1834
      %v2000 = vunpack.c.h.b16 %v1834
      %v2001 = vunpack.c.l.b16 %v1835
      %v2002 = vunpack.c.h.b16 %v1835
      %v2003 = vunpack.c.l.b16 %v1836
      %v2004 = vunpack.c.h.b16 %v1836
      %v2005 = vunpack.c.l.b16 %v1837
      %v2006 = vunpack.c.h.b16 %v1837
      %v2007 = vunpack.c.l.b16 %v1838
      %v2008 = vunpack.c.h.b16 %v1838
      %v2009 = vunpack.c.l.b16 %v1839
      %v2010 = vunpack.c.h.b16 %v1839
      %v2011 = vunpack.c.l.b16 %v1840
      %v2012 = vunpack.c.h.b16 %v1840
      %v2013 = vunpack.c.l.b16 %v1841
      %v2014 = vunpack.c.h.b16 %v1841
      %v2015 = vunpack.c.l.b16 %v1842
      %v2016 = vunpack.c.h.b16 %v1842
      %v2017 = vunpack.c.l.b16 %v1843
      %v2018 = vunpack.c.h.b16 %v1843
      %v2019 = vunpack.c.l.b16 %v1844
      %v2020 = vunpack.c.h.b16 %v1844
      %v2021 = vunpack.c.l.b16 %v1845
      %v2022 = vunpack.c.h.b16 %v1845
      %v2023 = vunpack.c.l.b16 %v1846
      %v2024 = vunpack.c.h.b16 %v1846
      %v2025 = vunpack.c.l.b16 %v1847
      %v2026 = vunpack.c.h.b16 %v1847
      %v2027 = vunpack.c.l.b16 %v1848
      %v2028 = vunpack.c.h.b16 %v1848
      %v2029 = vunpack.c.l.b16 %v1849
      %v2030 = vunpack.c.h.b16 %v1849
      %v2031 = vunpack.c.l.b16 %v1850
      %v2032 = vunpack.c.h.b16 %v1850
      %v2033 = vunpack.c.l.b16 %v1851
      %v2034 = vunpack.c.h.b16 %v1851
      %v2035 = vunpack.c.l.b16 %v1852
      %v2036 = vunpack.c.h.b16 %v1852
      %v2037 = vunpack.c.l.b16 %v1853
      %v2038 = vunpack.c.h.b16 %v1853
      %v2039 = vunpack.c.l.b16 %v1854
      %v2040 = vunpack.c.h.b16 %v1854
      %v2041 = vunpack.c.l.b16 %v1855
      %v2042 = vunpack.c.h.b16 %v1855
      %v2043 = vunpack.c.l.b16 %v1856
      %v2044 = vunpack.c.h.b16 %v1856
      %v2045 = vunpack.c.l.b16 %v1857
      %v2046 = vunpack.c.h.b16 %v1857
      %v2047 = vunpack.c.l.b16 %v1858
      %v2048 = vunpack.c.h.b16 %v1858
      %v2049 = vunpack.c.l.b16 %v1859
      %v2050 = vunpack.c.h.b16 %v1859
      %v2051 = vunpack.c.l.b16 %v1860
      %v2052 = vunpack.c.h.b16 %v1860
      %v2053 = vunpack.c.l.b16 %v1861
      %v2054 = vunpack.c.h.b16 %v1861
      %v2055 = vunpack.c.l.b16 %v1862
      %v2056 = vunpack.c.h.b16 %v1862
      %v2057 = vunpack.c.l.b16 %v1863
      %v2058 = vunpack.c.h.b16 %v1863
      %v2059 = vunpack.c.l.b16 %v1864
      %v2060 = vunpack.c.h.b16 %v1864
      %v2061 = vunpack.c.l.b16 %v1865
      %v2062 = vunpack.c.h.b16 %v1865
      %v2063 = vunpack.c.l.b16 %v1866
      %v2064 = vunpack.c.h.b16 %v1866
      %v2065 = vunpack.c.l.b16 %v1867
      %v2066 = vunpack.c.h.b16 %v1867
      %v2067 = vunpack.c.l.b16 %v1868
      %v2068 = vunpack.c.h.b16 %v1868
      %v2069 = vunpack.c.l.b16 %v1869
      %v2070 = vunpack.c.h.b16 %v1869
      %v2071 = vunpack.c.l.b16 %v1870
      %v2072 = vunpack.c.h.b16 %v1870
      %v2073 = vunpack.c.l.b16 %v1871
      %v2074 = vunpack.c.h.b16 %v1871
      %v2075 = vunpack.c.l.b16 %v1872
      %v2076 = vunpack.c.h.b16 %v1872
      %v2077 = vunpack.c.l.b16 %v1873
      %v2078 = vunpack.c.h.b16 %v1873
      %v2079 = vunpack.c.l.b16 %v1874
      %v2080 = vunpack.c.h.b16 %v1874
      %v2081 = vunpack.c.l.b16 %v1875
      %v2082 = vunpack.c.h.b16 %v1875
      %v2083 = vunpack.c.l.b16 %v1876
      %v2084 = vunpack.c.h.b16 %v1876
      %v2085 = vunpack.c.l.b16 %v1877
      %v2086 = vunpack.c.h.b16 %v1877
      %v2087 = vunpack.c.l.b16 %v1878
      %v2088 = vunpack.c.h.b16 %v1878
      %v2089 = vunpack.c.l.b16 %v1879
      %v2090 = vunpack.c.h.b16 %v1879
      %v2091 = vunpack.c.l.b16 %v1880
      %v2092 = vunpack.c.h.b16 %v1880
      %v2093 = vunpack.c.l.b16 %v1881
      %v2094 = vunpack.c.h.b16 %v1881
      %v2095 = vunpack.c.l.b16 %v1882
      %v2096 = vunpack.c.h.b16 %v1882
      %v2097 = vpack.c.b16 %v1973, %v1969
      %v2098 = vpack.c.b16 %v1974, %v1970
      %v2099 = vpack.c.b16 %v1975, %v1971
      %v2100 = vpack.c.b16 %v1976, %v1972
      %v2101 = vpack.c.b16 %v1981, %v1977
      %v2102 = vpack.c.b16 %v1982, %v1978
      %v2103 = vpack.c.b16 %v1983, %v1979
      %v2104 = vpack.c.b16 %v1984, %v1980
      %v2105 = vpack.c.b16 %v1989, %v1985
      %v2106 = vpack.c.b16 %v1990, %v1986
      %v2107 = vpack.c.b16 %v1991, %v1987
      %v2108 = vpack.c.b16 %v1992, %v1988
      %v2109 = vpack.c.b16 %v1997, %v1993
      %v2110 = vpack.c.b16 %v1998, %v1994
      %v2111 = vpack.c.b16 %v1999, %v1995
      %v2112 = vpack.c.b16 %v2000, %v1996
      %v2113 = vpack.c.b16 %v2005, %v2001
      %v2114 = vpack.c.b16 %v2006, %v2002
      %v2115 = vpack.c.b16 %v2007, %v2003
      %v2116 = vpack.c.b16 %v2008, %v2004
      %v2117 = vpack.c.b16 %v2013, %v2009
      %v2118 = vpack.c.b16 %v2014, %v2010
      %v2119 = vpack.c.b16 %v2015, %v2011
      %v2120 = vpack.c.b16 %v2016, %v2012
      %v2121 = vpack.c.b16 %v2021, %v2017
      %v2122 = vpack.c.b16 %v2022, %v2018
      %v2123 = vpack.c.b16 %v2023, %v2019
      %v2124 = vpack.c.b16 %v2024, %v2020
      %v2125 = vpack.c.b16 %v2029, %v2025
      %v2126 = vpack.c.b16 %v2030, %v2026
      %v2127 = vpack.c.b16 %v2031, %v2027
      %v2128 = vpack.c.b16 %v2032, %v2028
      %v2129 = vpack.c.b16 %v2037, %v2033
      %v2130 = vpack.c.b16 %v2038, %v2034
      %v2131 = vpack.c.b16 %v2039, %v2035
      %v2132 = vpack.c.b16 %v2040, %v2036
      %v2133 = vpack.c.b16 %v2045, %v2041
      %v2134 = vpack.c.b16 %v2046, %v2042
      %v2135 = vpack.c.b16 %v2047, %v2043
      %v2136 = vpack.c.b16 %v2048, %v2044
      %v2137 = vpack.c.b16 %v2053, %v2049
      %v2138 = vpack.c.b16 %v2054, %v2050
      %v2139 = vpack.c.b16 %v2055, %v2051
      %v2140 = vpack.c.b16 %v2056, %v2052
      %v2141 = vpack.c.b16 %v2061, %v2057
      %v2142 = vpack.c.b16 %v2062, %v2058
      %v2143 = vpack.c.b16 %v2063, %v2059
      %v2144 = vpack.c.b16 %v2064, %v2060
      %v2145 = vpack.c.b16 %v2069, %v2065
      %v2146 = vpack.c.b16 %v2070, %v2066
      %v2147 = vpack.c.b16 %v2071, %v2067
      %v2148 = vpack.c.b16 %v2072, %v2068
      %v2149 = vpack.c.b16 %v2077, %v2073
      %v2150 = vpack.c.b16 %v2078, %v2074
      %v2151 = vpack.c.b16 %v2079, %v2075
      %v2152 = vpack.c.b16 %v2080, %v2076
      %v2153 = vpack.c.b16 %v2085, %v2081
      %v2154 = vpack.c.b16 %v2086, %v2082
      %v2155 = vpack.c.b16 %v2087, %v2083
      %v2156 = vpack.c.b16 %v2088, %v2084
      %v2157 = vpack.c.b16 %v2093, %v2089
      %v2158 = vpack.c.b16 %v2094, %v2090
      %v2159 = vpack.c.b16 %v2095, %v2091
      %v2160 = vpack.c.b16 %v2096, %v2092
      %2225 = vmatprep.subr.bf16.mxu0 %v2126
      %2226 = vmatpush1.bf16.msra.mxu0 %v2125
      %2227 = vmatprep.subr.bf16.mxu0 %v2122
      %2228 = vmatpush1.bf16.msra.mxu0 %v2121
      %2229 = vmatprep.subr.bf16.mxu0 %v2118
      %2230 = vmatpush1.bf16.msra.mxu0 %v2117
      %2231 = vmatprep.subr.bf16.mxu0 %v2114
      %2232 = vmatpush1.bf16.msra.mxu0 %v2113
      %2233 = vmatprep.subr.bf16.mxu0 %v2110
      %2234 = vmatpush1.bf16.msra.mxu0 %v2109
      %2235 = vmatprep.subr.bf16.mxu0 %v2106
      %2236 = vmatpush1.bf16.msra.mxu0 %v2105
      %2237 = vmatprep.subr.bf16.mxu0 %v2102
      %2238 = vmatpush1.bf16.msra.mxu0 %v2101
      %2239 = vmatprep.subr.bf16.mxu0 %v2098
      %2240 = vmatpush1.bf16.msra.mxu0 %v2097
      %2241 = vmatprep.subr.bf16.mxu0 %v2158
      %2242 = vmatpush2.bf16.msra.mxu0 %v2157
      %2243 = vmatprep.subr.bf16.mxu0 %v2154
      %2244 = vmatpush2.bf16.msra.mxu0 %v2153
      %2245 = vmatprep.subr.bf16.mxu0 %v2150
      %2246 = vmatpush2.bf16.msra.mxu0 %v2149
      %2247 = vmatprep.subr.bf16.mxu0 %v2146
      %2248 = vmatpush2.bf16.msra.mxu0 %v2145
      %2249 = vmatprep.subr.bf16.mxu0 %v2142
      %2250 = vmatpush2.bf16.msra.mxu0 %v2141
      %2251 = vmatprep.subr.bf16.mxu0 %v2138
      %2252 = vmatpush2.bf16.msra.mxu0 %v2137
      %2253 = vmatprep.subr.bf16.mxu0 %v2134
      %2254 = vmatpush2.bf16.msra.mxu0 %v2133
      %2255 = vmatprep.subr.bf16.mxu0 %v2130
      %2256 = vmatpush2.bf16.msra.mxu0 %v2129
      %2257 = vmatprep.mubr.bf16.mxu0 %v1804
      %2258 = vmatmul.mubr.bf16.gmra.mxu0 %v1803
      %v2259 = vpop.f32.mrf.mxu0
      %v2260 = vadd.f32 %v1888, %v2259
      %v2261 = vpop.f32.mrf.mxu0
      %v2262 = vadd.f32 %v1892, %v2261
      %v2263 = vpop.f32.mrf.mxu0
      %v2264 = vadd.f32 %v1888, %v2263
      %v2265 = vpop.f32.mrf.mxu0
      %v2266 = vadd.f32 %v1892, %v2265
      %2267 = vmatprep.mubr.bf16.mxu0 %v1806
      %2268 = vmatmul.mubr.bf16.gmra.mxu0 %v1805
      %v2269 = vpop.f32.mrf.mxu0
      %v2270 = vadd.f32 %v1888, %v2269
      %v2271 = vpop.f32.mrf.mxu0
      %v2272 = vadd.f32 %v1892, %v2271
      %v2273 = vpop.f32.mrf.mxu0
      %v2274 = vadd.f32 %v1888, %v2273
      %v2275 = vpop.f32.mrf.mxu0
      %v2276 = vadd.f32 %v1892, %v2275
      %2277 = vmatprep.mubr.bf16.mxu0 %v1808
      %2278 = vmatmul.mubr.bf16.gmra.mxu0 %v1807
      %v2279 = vpop.f32.mrf.mxu0
      %v2280 = vadd.f32 %v1888, %v2279
      %v2281 = vpop.f32.mrf.mxu0
      %v2282 = vadd.f32 %v1892, %v2281
      %v2283 = vpop.f32.mrf.mxu0
      %v2284 = vadd.f32 %v1888, %v2283
      %v2285 = vpop.f32.mrf.mxu0
      %v2286 = vadd.f32 %v1892, %v2285
      %2287 = vmatprep.mubr.bf16.mxu0 %v1810
      %2288 = vmatmul.mubr.bf16.gmra.mxu0 %v1809
      %v2289 = vpop.f32.mrf.mxu0
      %v2290 = vadd.f32 %v1888, %v2289
      %v2291 = vpop.f32.mrf.mxu0
      %v2292 = vadd.f32 %v1892, %v2291
      %v2293 = vpop.f32.mrf.mxu0
      %v2294 = vadd.f32 %v1888, %v2293
      %v2295 = vpop.f32.mrf.mxu0
      %v2296 = vadd.f32 %v1892, %v2295
      %2297 = vmatprep.mubr.bf16.mxu0 %v1812
      %2298 = vmatmul.mubr.bf16.gmra.mxu0 %v1811
      %v2299 = vpop.f32.mrf.mxu0
      %v2300 = vadd.f32 %v1888, %v2299
      %v2301 = vpop.f32.mrf.mxu0
      %v2302 = vadd.f32 %v1892, %v2301
      %v2303 = vpop.f32.mrf.mxu0
      %v2304 = vadd.f32 %v1888, %v2303
      %v2305 = vpop.f32.mrf.mxu0
      %v2306 = vadd.f32 %v1892, %v2305
      %2307 = vmatprep.mubr.bf16.mxu0 %v1814
      %2308 = vmatmul.mubr.bf16.gmra.mxu0 %v1813
      %v2309 = vpop.f32.mrf.mxu0
      %v2310 = vadd.f32 %v1888, %v2309
      %v2311 = vpop.f32.mrf.mxu0
      %v2312 = vadd.f32 %v1892, %v2311
      %v2313 = vpop.f32.mrf.mxu0
      %v2314 = vadd.f32 %v1888, %v2313
      %v2315 = vpop.f32.mrf.mxu0
      %v2316 = vadd.f32 %v1892, %v2315
      %2317 = vmatprep.mubr.bf16.mxu0 %v1816
      %2318 = vmatmul.mubr.bf16.gmra.mxu0 %v1815
      %v2319 = vpop.f32.mrf.mxu0
      %v2320 = vadd.f32 %v1888, %v2319
      %v2321 = vpop.f32.mrf.mxu0
      %v2322 = vadd.f32 %v1892, %v2321
      %v2323 = vpop.f32.mrf.mxu0
      %v2324 = vadd.f32 %v1888, %v2323
      %v2325 = vpop.f32.mrf.mxu0
      %v2326 = vadd.f32 %v1892, %v2325
      %2327 = vmatprep.mubr.bf16.mxu0 %v1818
      %2328 = vmatmul.mubr.bf16.gmra.mxu0 %v1817
      %v2329 = vpop.f32.mrf.mxu0
      %v2330 = vadd.f32 %v1888, %v2329
      %v2331 = vpop.f32.mrf.mxu0
      %v2332 = vadd.f32 %v1892, %v2331
      %v2333 = vpop.f32.mrf.mxu0
      %v2334 = vadd.f32 %v1888, %v2333
      %v2335 = vpop.f32.mrf.mxu0
      %v2336 = vadd.f32 %v1892, %v2335
      %2337 = vdwg.mxu0
      %2338 = vmatprep.subr.bf16.mxu0 %v2128
      %2339 = vmatpush1.bf16.msra.mxu0 %v2127
      %2340 = vmatprep.subr.bf16.mxu0 %v2124
      %2341 = vmatpush1.bf16.msra.mxu0 %v2123
      %2342 = vmatprep.subr.bf16.mxu0 %v2120
      %2343 = vmatpush1.bf16.msra.mxu0 %v2119
      %2344 = vmatprep.subr.bf16.mxu0 %v2116
      %2345 = vmatpush1.bf16.msra.mxu0 %v2115
      %2346 = vmatprep.subr.bf16.mxu0 %v2112
      %2347 = vmatpush1.bf16.msra.mxu0 %v2111
      %2348 = vmatprep.subr.bf16.mxu0 %v2108
      %2349 = vmatpush1.bf16.msra.mxu0 %v2107
      %2350 = vmatprep.subr.bf16.mxu0 %v2104
      %2351 = vmatpush1.bf16.msra.mxu0 %v2103
      %2352 = vmatprep.subr.bf16.mxu0 %v2100
      %2353 = vmatpush1.bf16.msra.mxu0 %v2099
      %2354 = vmatprep.subr.bf16.mxu0 %v2160
      %2355 = vmatpush2.bf16.msra.mxu0 %v2159
      %2356 = vmatprep.subr.bf16.mxu0 %v2156
      %2357 = vmatpush2.bf16.msra.mxu0 %v2155
      %2358 = vmatprep.subr.bf16.mxu0 %v2152
      %2359 = vmatpush2.bf16.msra.mxu0 %v2151
      %2360 = vmatprep.subr.bf16.mxu0 %v2148
      %2361 = vmatpush2.bf16.msra.mxu0 %v2147
      %2362 = vmatprep.subr.bf16.mxu0 %v2144
      %2363 = vmatpush2.bf16.msra.mxu0 %v2143
      %2364 = vmatprep.subr.bf16.mxu0 %v2140
      %2365 = vmatpush2.bf16.msra.mxu0 %v2139
      %2366 = vmatprep.subr.bf16.mxu0 %v2136
      %2367 = vmatpush2.bf16.msra.mxu0 %v2135
      %2368 = vmatprep.subr.bf16.mxu0 %v2132
      %2369 = vmatpush2.bf16.msra.mxu0 %v2131
      %2370 = vmatprep.mubr.bf16.mxu0 %v1804
      %2371 = vmatmul.mubr.bf16.gmra.mxu0 %v1803
      %v2372 = vpop.f32.mrf.mxu0
      %v2373 = vadd.f32 %v1896, %v2372
      %v2374 = vpop.f32.mrf.mxu0
      %v2375 = vadd.f32 %v1900, %v2374
      %v2376 = vpop.f32.mrf.mxu0
      %v2377 = vadd.f32 %v1896, %v2376
      %v2378 = vpop.f32.mrf.mxu0
      %v2379 = vadd.f32 %v1900, %v2378
      %2380 = vmatprep.mubr.bf16.mxu0 %v1806
      %2381 = vmatmul.mubr.bf16.gmra.mxu0 %v1805
      %v2382 = vpop.f32.mrf.mxu0
      %v2383 = vadd.f32 %v1896, %v2382
      %v2384 = vpop.f32.mrf.mxu0
      %v2385 = vadd.f32 %v1900, %v2384
      %v2386 = vpop.f32.mrf.mxu0
      %v2387 = vadd.f32 %v1896, %v2386
      %v2388 = vpop.f32.mrf.mxu0
      %v2389 = vadd.f32 %v1900, %v2388
      %2390 = vmatprep.mubr.bf16.mxu0 %v1808
      %2391 = vmatmul.mubr.bf16.gmra.mxu0 %v1807
      %v2392 = vpop.f32.mrf.mxu0
      %v2393 = vadd.f32 %v1896, %v2392
      %v2394 = vpop.f32.mrf.mxu0
      %v2395 = vadd.f32 %v1900, %v2394
      %v2396 = vpop.f32.mrf.mxu0
      %v2397 = vadd.f32 %v1896, %v2396
      %v2398 = vpop.f32.mrf.mxu0
      %v2399 = vadd.f32 %v1900, %v2398
      %2400 = vmatprep.mubr.bf16.mxu0 %v1810
      %2401 = vmatmul.mubr.bf16.gmra.mxu0 %v1809
      %v2402 = vpop.f32.mrf.mxu0
      %v2403 = vadd.f32 %v1896, %v2402
      %v2404 = vpop.f32.mrf.mxu0
      %v2405 = vadd.f32 %v1900, %v2404
      %v2406 = vpop.f32.mrf.mxu0
      %v2407 = vadd.f32 %v1896, %v2406
      %v2408 = vpop.f32.mrf.mxu0
      %v2409 = vadd.f32 %v1900, %v2408
      %2410 = vmatprep.mubr.bf16.mxu0 %v1812
      %2411 = vmatmul.mubr.bf16.gmra.mxu0 %v1811
      %v2412 = vpop.f32.mrf.mxu0
      %v2413 = vadd.f32 %v1896, %v2412
      %v2414 = vpop.f32.mrf.mxu0
      %v2415 = vadd.f32 %v1900, %v2414
      %v2416 = vpop.f32.mrf.mxu0
      %v2417 = vadd.f32 %v1896, %v2416
      %v2418 = vpop.f32.mrf.mxu0
      %v2419 = vadd.f32 %v1900, %v2418
      %2420 = vmatprep.mubr.bf16.mxu0 %v1814
      %2421 = vmatmul.mubr.bf16.gmra.mxu0 %v1813
      %v2422 = vpop.f32.mrf.mxu0
      %v2423 = vadd.f32 %v1896, %v2422
      %v2424 = vpop.f32.mrf.mxu0
      %v2425 = vadd.f32 %v1900, %v2424
      %v2426 = vpop.f32.mrf.mxu0
      %v2427 = vadd.f32 %v1896, %v2426
      %v2428 = vpop.f32.mrf.mxu0
      %v2429 = vadd.f32 %v1900, %v2428
      %2430 = vmatprep.mubr.bf16.mxu0 %v1816
      %2431 = vmatmul.mubr.bf16.gmra.mxu0 %v1815
      %v2432 = vpop.f32.mrf.mxu0
      %v2433 = vadd.f32 %v1896, %v2432
      %v2434 = vpop.f32.mrf.mxu0
      %v2435 = vadd.f32 %v1900, %v2434
      %v2436 = vpop.f32.mrf.mxu0
      %v2437 = vadd.f32 %v1896, %v2436
      %v2438 = vpop.f32.mrf.mxu0
      %v2439 = vadd.f32 %v1900, %v2438
      %2440 = vmatprep.mubr.bf16.mxu0 %v1818
      %2441 = vmatmul.mubr.bf16.gmra.mxu0 %v1817
      %v2442 = vpop.f32.mrf.mxu0
      %v2443 = vadd.f32 %v1896, %v2442
      %v2444 = vpop.f32.mrf.mxu0
      %v2445 = vadd.f32 %v1900, %v2444
      %v2446 = vpop.f32.mrf.mxu0
      %v2447 = vadd.f32 %v1896, %v2446
      %v2448 = vpop.f32.mrf.mxu0
      %v2449 = vadd.f32 %v1900, %v2448
      %2450 = vdwg.mxu0
      %v2451 = vtanh.pop %v2260
      %v2452 = vtanh.pop %v2262
      %v2453 = vtanh.pop %v2373
      %v2454 = vtanh.pop %v2375
      %v2455 = vtanh.pop %v2264
      %v2456 = vtanh.pop %v2266
      %v2457 = vtanh.pop %v2377
      %v2458 = vtanh.pop %v2379
      %v2459 = vtanh.pop %v2270
      %v2460 = vtanh.pop %v2272
      %v2461 = vtanh.pop %v2383
      %v2462 = vtanh.pop %v2385
      %v2463 = vtanh.pop %v2274
      %v2464 = vtanh.pop %v2276
      %v2465 = vtanh.pop %v2387
      %v2466 = vtanh.pop %v2389
      %v2467 = vtanh.pop %v2280
      %v2468 = vtanh.pop %v2282
      %v2469 = vtanh.pop %v2393
      %v2470 = vtanh.pop %v2395
      %v2471 = vtanh.pop %v2284
      %v2472 = vtanh.pop %v2286
      %v2473 = vtanh.pop %v2397
      %v2474 = vtanh.pop %v2399
      %v2475 = vtanh.pop %v2290
      %v2476 = vtanh.pop %v2292
      %v2477 = vtanh.pop %v2403
      %v2478 = vtanh.pop %v2405
      %v2479 = vtanh.pop %v2294
      %v2480 = vtanh.pop %v2296
      %v2481 = vtanh.pop %v2407
      %v2482 = vtanh.pop %v2409
      %v2483 = vtanh.pop %v2300
      %v2484 = vtanh.pop %v2302
      %v2485 = vtanh.pop %v2413
      %v2486 = vtanh.pop %v2415
      %v2487 = vtanh.pop %v2304
      %v2488 = vtanh.pop %v2306
      %v2489 = vtanh.pop %v2417
      %v2490 = vtanh.pop %v2419
      %v2491 = vtanh.pop %v2310
      %v2492 = vtanh.pop %v2312
      %v2493 = vtanh.pop %v2423
      %v2494 = vtanh.pop %v2425
      %v2495 = vtanh.pop %v2314
      %v2496 = vtanh.pop %v2316
      %v2497 = vtanh.pop %v2427
      %v2498 = vtanh.pop %v2429
      %v2499 = vtanh.pop %v2320
      %v2500 = vtanh.pop %v2322
      %v2501 = vtanh.pop %v2433
      %v2502 = vtanh.pop %v2435
      %v2503 = vtanh.pop %v2324
      %v2504 = vtanh.pop %v2326
      %v2505 = vtanh.pop %v2437
      %v2506 = vtanh.pop %v2439
      %v2507 = vtanh.pop %v2330
      %v2508 = vtanh.pop %v2332
      %v2509 = vtanh.pop %v2443
      %v2510 = vtanh.pop %v2445
      %v2511 = vtanh.pop %v2334
      %v2512 = vtanh.pop %v2336
      %v2513 = vtanh.pop %v2447
      %v2514 = vtanh.pop %v2449
      %v2515 = vpack.c.bf16 %v2455, %v2451
      %v2516 = vpack.c.bf16 %v2456, %v2452
      %v2517 = vpack.c.bf16 %v2457, %v2453
      %v2518 = vpack.c.bf16 %v2458, %v2454
      %v2519 = vpack.c.bf16 %v2463, %v2459
      %v2520 = vpack.c.bf16 %v2464, %v2460
      %v2521 = vpack.c.bf16 %v2465, %v2461
      %v2522 = vpack.c.bf16 %v2466, %v2462
      %v2523 = vpack.c.bf16 %v2471, %v2467
      %v2524 = vpack.c.bf16 %v2472, %v2468
      %v2525 = vpack.c.bf16 %v2473, %v2469
      %v2526 = vpack.c.bf16 %v2474, %v2470
      %v2527 = vpack.c.bf16 %v2479, %v2475
      %v2528 = vpack.c.bf16 %v2480, %v2476
      %v2529 = vpack.c.bf16 %v2481, %v2477
      %v2530 = vpack.c.bf16 %v2482, %v2478
      %v2531 = vpack.c.bf16 %v2487, %v2483
      %v2532 = vpack.c.bf16 %v2488, %v2484
      %v2533 = vpack.c.bf16 %v2489, %v2485
      %v2534 = vpack.c.bf16 %v2490, %v2486
      %v2535 = vpack.c.bf16 %v2495, %v2491
      %v2536 = vpack.c.bf16 %v2496, %v2492
      %v2537 = vpack.c.bf16 %v2497, %v2493
      %v2538 = vpack.c.bf16 %v2498, %v2494
      %v2539 = vpack.c.bf16 %v2503, %v2499
      %v2540 = vpack.c.bf16 %v2504, %v2500
      %v2541 = vpack.c.bf16 %v2505, %v2501
      %v2542 = vpack.c.bf16 %v2506, %v2502
      %v2543 = vpack.c.bf16 %v2511, %v2507
      %v2544 = vpack.c.bf16 %v2512, %v2508
      %v2545 = vpack.c.bf16 %v2513, %v2509
      %v2546 = vpack.c.bf16 %v2514, %v2510
      %v2547 = vld [vmem:[%s6] sm:$0xf]
      %v2548 = vld [vmem:[%s6 + $0x4] sm:$0xf]
      %v2549 = vld [vmem:[%s6 + $0x8] sm:$0xf]
      %v2550 = vld [vmem:[%s6 + $0xc] sm:$0xf]
      %v2551 = vld [vmem:[%s6 + $0x10] sm:$0xf]
      %v2552 = vld [vmem:[%s6 + $0x14] sm:$0xf]
      %v2553 = vld [vmem:[%s6 + $0x18] sm:$0xf]
      %v2554 = vld [vmem:[%s6 + $0x1c] sm:$0xf]
      %v2555 = vld [vmem:[%s6 + $0x20] sm:$0xf]
      %v2556 = vld [vmem:[%s6 + $0x24] sm:$0xf]
      %v2557 = vld [vmem:[%s6 + $0x28] sm:$0xf]
      %v2558 = vld [vmem:[%s6 + $0x2c] sm:$0xf]
      %v2559 = vld [vmem:[%s6 + $0x30] sm:$0xf]
      %v2560 = vld [vmem:[%s6 + $0x34] sm:$0xf]
      %v2561 = vld [vmem:[%s6 + $0x38] sm:$0xf]
      %v2562 = vld [vmem:[%s6 + $0x3c] sm:$0xf]
      %v2563 = vld [vmem:[%s6 + $0x40] sm:$0xf]
      %v2564 = vld [vmem:[%s6 + $0x44] sm:$0xf]
      %v2565 = vld [vmem:[%s6 + $0x48] sm:$0xf]
      %v2566 = vld [vmem:[%s6 + $0x4c] sm:$0xf]
      %v2567 = vld [vmem:[%s6 + $0x50] sm:$0xf]
      %v2568 = vld [vmem:[%s6 + $0x54] sm:$0xf]
      %v2569 = vld [vmem:[%s6 + $0x58] sm:$0xf]
      %v2570 = vld [vmem:[%s6 + $0x5c] sm:$0xf]
      %v2571 = vld [vmem:[%s6 + $0x60] sm:$0xf]
      %v2572 = vld [vmem:[%s6 + $0x64] sm:$0xf]
      %v2573 = vld [vmem:[%s6 + $0x68] sm:$0xf]
      %v2574 = vld [vmem:[%s6 + $0x6c] sm:$0xf]
      %v2575 = vld [vmem:[%s6 + $0x70] sm:$0xf]
      %v2576 = vld [vmem:[%s6 + $0x74] sm:$0xf]
      %v2577 = vld [vmem:[%s6 + $0x78] sm:$0xf]
      %v2578 = vld [vmem:[%s6 + $0x7c] sm:$0xf]
      %v2579 = vld [vmem:[%s6 + $0x80] sm:$0xf]
      %v2580 = vld [vmem:[%s6 + $0x84] sm:$0xf]
      %v2581 = vld [vmem:[%s6 + $0x88] sm:$0xf]
      %v2582 = vld [vmem:[%s6 + $0x8c] sm:$0xf]
      %v2583 = vld [vmem:[%s6 + $0x90] sm:$0xf]
      %v2584 = vld [vmem:[%s6 + $0x94] sm:$0xf]
      %v2585 = vld [vmem:[%s6 + $0x98] sm:$0xf]
      %v2586 = vld [vmem:[%s6 + $0x9c] sm:$0xf]
      %v2587 = vld [vmem:[%s6 + $0xa0] sm:$0xf]
      %v2588 = vld [vmem:[%s6 + $0xa4] sm:$0xf]
      %v2589 = vld [vmem:[%s6 + $0xa8] sm:$0xf]
      %v2590 = vld [vmem:[%s6 + $0xac] sm:$0xf]
      %v2591 = vld [vmem:[%s6 + $0xb0] sm:$0xf]
      %v2592 = vld [vmem:[%s6 + $0xb4] sm:$0xf]
      %v2593 = vld [vmem:[%s6 + $0xb8] sm:$0xf]
      %v2594 = vld [vmem:[%s6 + $0xbc] sm:$0xf]
      %v2595 = vld [vmem:[%s6 + $0xc0] sm:$0xf]
      %v2596 = vld [vmem:[%s6 + $0xc4] sm:$0xf]
      %v2597 = vld [vmem:[%s6 + $0xc8] sm:$0xf]
      %v2598 = vld [vmem:[%s6 + $0xcc] sm:$0xf]
      %v2599 = vld [vmem:[%s6 + $0xd0] sm:$0xf]
      %v2600 = vld [vmem:[%s6 + $0xd4] sm:$0xf]
      %v2601 = vld [vmem:[%s6 + $0xd8] sm:$0xf]
      %v2602 = vld [vmem:[%s6 + $0xdc] sm:$0xf]
      %v2603 = vld [vmem:[%s6 + $0xe0] sm:$0xf]
      %v2604 = vld [vmem:[%s6 + $0xe4] sm:$0xf]
      %v2605 = vld [vmem:[%s6 + $0xe8] sm:$0xf]
      %v2606 = vld [vmem:[%s6 + $0xec] sm:$0xf]
      %v2607 = vld [vmem:[%s6 + $0xf0] sm:$0xf]
      %v2608 = vld [vmem:[%s6 + $0xf4] sm:$0xf]
      %v2609 = vld [vmem:[%s6 + $0xf8] sm:$0xf]
      %v2610 = vld [vmem:[%s6 + $0xfc] sm:$0xf]
      %v2611 = vld [vmem:[%s7] sm:$0x1]
      %v2613 = vlaneseq
      %v2614 = vshrl.u32 %v2613, 7
      %v2615 = vsub.s32 0, %v2614
      %v2616 = vrot.slane %v2611, %v2615
      %v2682 = vunpack.c.l.b16 %v2547
      %v2683 = vunpack.c.l.b16 %v2548
      %v2684 = vunpack.c.l.b16 %v2549
      %v2685 = vunpack.c.l.b16 %v2550
      %v2686 = vunpack.c.l.b16 %v2551
      %v2687 = vunpack.c.l.b16 %v2552
      %v2688 = vunpack.c.l.b16 %v2553
      %v2689 = vunpack.c.l.b16 %v2554
      %v2690 = vunpack.c.l.b16 %v2555
      %v2691 = vunpack.c.l.b16 %v2556
      %v2692 = vunpack.c.l.b16 %v2557
      %v2693 = vunpack.c.l.b16 %v2558
      %v2694 = vunpack.c.l.b16 %v2559
      %v2695 = vunpack.c.l.b16 %v2560
      %v2696 = vunpack.c.l.b16 %v2561
      %v2697 = vunpack.c.l.b16 %v2562
      %v2698 = vunpack.c.l.b16 %v2563
      %v2699 = vunpack.c.l.b16 %v2564
      %v2700 = vunpack.c.l.b16 %v2565
      %v2701 = vunpack.c.l.b16 %v2566
      %v2702 = vunpack.c.l.b16 %v2567
      %v2703 = vunpack.c.l.b16 %v2568
      %v2704 = vunpack.c.l.b16 %v2569
      %v2705 = vunpack.c.l.b16 %v2570
      %v2706 = vunpack.c.l.b16 %v2571
      %v2707 = vunpack.c.l.b16 %v2572
      %v2708 = vunpack.c.l.b16 %v2573
      %v2709 = vunpack.c.l.b16 %v2574
      %v2710 = vunpack.c.l.b16 %v2575
      %v2711 = vunpack.c.l.b16 %v2576
      %v2712 = vunpack.c.l.b16 %v2577
      %v2713 = vunpack.c.l.b16 %v2578
      %v2714 = vunpack.c.l.b16 %v2579
      %v2715 = vunpack.c.l.b16 %v2580
      %v2716 = vunpack.c.l.b16 %v2581
      %v2717 = vunpack.c.l.b16 %v2582
      %v2718 = vunpack.c.l.b16 %v2583
      %v2719 = vunpack.c.l.b16 %v2584
      %v2720 = vunpack.c.l.b16 %v2585
      %v2721 = vunpack.c.l.b16 %v2586
      %v2722 = vunpack.c.l.b16 %v2587
      %v2723 = vunpack.c.l.b16 %v2588
      %v2724 = vunpack.c.l.b16 %v2589
      %v2725 = vunpack.c.l.b16 %v2590
      %v2726 = vunpack.c.l.b16 %v2591
      %v2727 = vunpack.c.l.b16 %v2592
      %v2728 = vunpack.c.l.b16 %v2593
      %v2729 = vunpack.c.l.b16 %v2594
      %v2730 = vunpack.c.l.b16 %v2595
      %v2731 = vunpack.c.l.b16 %v2596
      %v2732 = vunpack.c.l.b16 %v2597
      %v2733 = vunpack.c.l.b16 %v2598
      %v2734 = vunpack.c.l.b16 %v2599
      %v2735 = vunpack.c.l.b16 %v2600
      %v2736 = vunpack.c.l.b16 %v2601
      %v2737 = vunpack.c.l.b16 %v2602
      %v2738 = vunpack.c.l.b16 %v2603
      %v2739 = vunpack.c.l.b16 %v2604
      %v2740 = vunpack.c.l.b16 %v2605
      %v2741 = vunpack.c.l.b16 %v2606
      %v2742 = vunpack.c.l.b16 %v2607
      %v2743 = vunpack.c.l.b16 %v2608
      %v2744 = vunpack.c.l.b16 %v2609
      %v2745 = vunpack.c.l.b16 %v2610
      %v2746 = vpack.c.b16 %v2683, %v2682
      %v2747 = vpack.c.b16 %v2685, %v2684
      %v2748 = vpack.c.b16 %v2687, %v2686
      %v2749 = vpack.c.b16 %v2689, %v2688
      %v2750 = vpack.c.b16 %v2691, %v2690
      %v2751 = vpack.c.b16 %v2693, %v2692
      %v2752 = vpack.c.b16 %v2695, %v2694
      %v2753 = vpack.c.b16 %v2697, %v2696
      %v2754 = vpack.c.b16 %v2699, %v2698
      %v2755 = vpack.c.b16 %v2701, %v2700
      %v2756 = vpack.c.b16 %v2703, %v2702
      %v2757 = vpack.c.b16 %v2705, %v2704
      %v2758 = vpack.c.b16 %v2707, %v2706
      %v2759 = vpack.c.b16 %v2709, %v2708
      %v2760 = vpack.c.b16 %v2711, %v2710
      %v2761 = vpack.c.b16 %v2713, %v2712
      %v2762 = vpack.c.b16 %v2715, %v2714
      %v2763 = vpack.c.b16 %v2717, %v2716
      %v2764 = vpack.c.b16 %v2719, %v2718
      %v2765 = vpack.c.b16 %v2721, %v2720
      %v2766 = vpack.c.b16 %v2723, %v2722
      %v2767 = vpack.c.b16 %v2725, %v2724
      %v2768 = vpack.c.b16 %v2727, %v2726
      %v2769 = vpack.c.b16 %v2729, %v2728
      %v2770 = vpack.c.b16 %v2731, %v2730
      %v2771 = vpack.c.b16 %v2733, %v2732
      %v2772 = vpack.c.b16 %v2735, %v2734
      %v2773 = vpack.c.b16 %v2737, %v2736
      %v2774 = vpack.c.b16 %v2739, %v2738
      %v2775 = vpack.c.b16 %v2741, %v2740
      %v2776 = vpack.c.b16 %v2743, %v2742
      %v2777 = vpack.c.b16 %v2745, %v2744
      %2810 = vmatprep.subr.bf16.mxu0 0
      %2811 = vmatpush1.bf16.msra.mxu0 %v2753
      %2812 = vmatprep.subr.bf16.mxu0 0
      %2813 = vmatpush1.bf16.msra.mxu0 %v2752
      %2814 = vmatprep.subr.bf16.mxu0 0
      %2815 = vmatpush1.bf16.msra.mxu0 %v2751
      %2816 = vmatprep.subr.bf16.mxu0 0
      %2817 = vmatpush1.bf16.msra.mxu0 %v2750
      %2818 = vmatprep.subr.bf16.mxu0 0
      %2819 = vmatpush1.bf16.msra.mxu0 %v2749
      %2820 = vmatprep.subr.bf16.mxu0 0
      %2821 = vmatpush1.bf16.msra.mxu0 %v2748
      %2822 = vmatprep.subr.bf16.mxu0 0
      %2823 = vmatpush1.bf16.msra.mxu0 %v2747
      %2824 = vmatprep.subr.bf16.mxu0 0
      %2825 = vmatpush1.bf16.msra.mxu0 %v2746
      %2826 = vmatprep.subr.bf16.mxu0 0
      %2827 = vmatpush2.bf16.msra.mxu0 %v2761
      %2828 = vmatprep.subr.bf16.mxu0 0
      %2829 = vmatpush2.bf16.msra.mxu0 %v2760
      %2830 = vmatprep.subr.bf16.mxu0 0
      %2831 = vmatpush2.bf16.msra.mxu0 %v2759
      %2832 = vmatprep.subr.bf16.mxu0 0
      %2833 = vmatpush2.bf16.msra.mxu0 %v2758
      %2834 = vmatprep.subr.bf16.mxu0 0
      %2835 = vmatpush2.bf16.msra.mxu0 %v2757
      %2836 = vmatprep.subr.bf16.mxu0 0
      %2837 = vmatpush2.bf16.msra.mxu0 %v2756
      %2838 = vmatprep.subr.bf16.mxu0 0
      %2839 = vmatpush2.bf16.msra.mxu0 %v2755
      %2840 = vmatprep.subr.bf16.mxu0 0
      %2841 = vmatpush2.bf16.msra.mxu0 %v2754
      %2842 = vmatprep.mubr.bf16.mxu0 %v2516
      %2843 = vmatmul.mubr.bf16.gmra.mxu0 %v2515
      %v2844 = vpop.f32.mrf.mxu0
      %v2845 = vadd.f32 %v2616, %v2844
      %v2846 = vpop.f32.mrf.mxu0
      %v2847 = vpop.f32.mrf.mxu0
      %v2848 = vadd.f32 %v2616, %v2847
      %v2849 = vpop.f32.mrf.mxu0
      %2850 = vmatprep.mubr.bf16.mxu0 %v2520
      %2851 = vmatmul.mubr.bf16.gmra.mxu0 %v2519
      %v2852 = vpop.f32.mrf.mxu0
      %v2853 = vadd.f32 %v2616, %v2852
      %v2854 = vpop.f32.mrf.mxu0
      %v2855 = vpop.f32.mrf.mxu0
      %v2856 = vadd.f32 %v2616, %v2855
      %v2857 = vpop.f32.mrf.mxu0
      %2858 = vmatprep.mubr.bf16.mxu0 %v2524
      %2859 = vmatmul.mubr.bf16.gmra.mxu0 %v2523
      %v2860 = vpop.f32.mrf.mxu0
      %v2861 = vadd.f32 %v2616, %v2860
      %v2862 = vpop.f32.mrf.mxu0
      %v2863 = vpop.f32.mrf.mxu0
      %v2864 = vadd.f32 %v2616, %v2863
      %v2865 = vpop.f32.mrf.mxu0
      %2866 = vmatprep.mubr.bf16.mxu0 %v2528
      %2867 = vmatmul.mubr.bf16.gmra.mxu0 %v2527
      %v2868 = vpop.f32.mrf.mxu0
      %v2869 = vadd.f32 %v2616, %v2868
      %v2870 = vpop.f32.mrf.mxu0
      %v2871 = vpop.f32.mrf.mxu0
      %v2872 = vadd.f32 %v2616, %v2871
      %v2873 = vpop.f32.mrf.mxu0
      %2874 = vmatprep.mubr.bf16.mxu0 %v2532
      %2875 = vmatmul.mubr.bf16.gmra.mxu0 %v2531
      %v2876 = vpop.f32.mrf.mxu0
      %v2877 = vadd.f32 %v2616, %v2876
      %v2878 = vpop.f32.mrf.mxu0
      %v2879 = vpop.f32.mrf.mxu0
      %v2880 = vadd.f32 %v2616, %v2879
      %v2881 = vpop.f32.mrf.mxu0
      %2882 = vmatprep.mubr.bf16.mxu0 %v2536
      %2883 = vmatmul.mubr.bf16.gmra.mxu0 %v2535
      %v2884 = vpop.f32.mrf.mxu0
      %v2885 = vadd.f32 %v2616, %v2884
      %v2886 = vpop.f32.mrf.mxu0
      %v2887 = vpop.f32.mrf.mxu0
      %v2888 = vadd.f32 %v2616, %v2887
      %v2889 = vpop.f32.mrf.mxu0
      %2890 = vmatprep.mubr.bf16.mxu0 %v2540
      %2891 = vmatmul.mubr.bf16.gmra.mxu0 %v2539
      %v2892 = vpop.f32.mrf.mxu0
      %v2893 = vadd.f32 %v2616, %v2892
      %v2894 = vpop.f32.mrf.mxu0
      %v2895 = vpop.f32.mrf.mxu0
      %v2896 = vadd.f32 %v2616, %v2895
      %v2897 = vpop.f32.mrf.mxu0
      %2898 = vmatprep.mubr.bf16.mxu0 %v2544
      %2899 = vmatmul.mubr.bf16.gmra.mxu0 %v2543
      %v2900 = vpop.f32.mrf.mxu0
      %v2901 = vadd.f32 %v2616, %v2900
      %v2902 = vpop.f32.mrf.mxu0
      %v2903 = vpop.f32.mrf.mxu0
      %v2904 = vadd.f32 %v2616, %v2903
      %v2905 = vpop.f32.mrf.mxu0
      %2906 = vdwg.mxu0
      %2907 = vmatprep.subr.bf16.mxu0 0
      %2908 = vmatpush1.bf16.msra.mxu0 %v2769
      %2909 = vmatprep.subr.bf16.mxu0 0
      %2910 = vmatpush1.bf16.msra.mxu0 %v2768
      %2911 = vmatprep.subr.bf16.mxu0 0
      %2912 = vmatpush1.bf16.msra.mxu0 %v2767
      %2913 = vmatprep.subr.bf16.mxu0 0
      %2914 = vmatpush1.bf16.msra.mxu0 %v2766
      %2915 = vmatprep.subr.bf16.mxu0 0
      %2916 = vmatpush1.bf16.msra.mxu0 %v2765
      %2917 = vmatprep.subr.bf16.mxu0 0
      %2918 = vmatpush1.bf16.msra.mxu0 %v2764
      %2919 = vmatprep.subr.bf16.mxu0 0
      %2920 = vmatpush1.bf16.msra.mxu0 %v2763
      %2921 = vmatprep.subr.bf16.mxu0 0
      %2922 = vmatpush1.bf16.msra.mxu0 %v2762
      %2923 = vmatprep.subr.bf16.mxu0 0
      %2924 = vmatpush2.bf16.msra.mxu0 %v2777
      %2925 = vmatprep.subr.bf16.mxu0 0
      %2926 = vmatpush2.bf16.msra.mxu0 %v2776
      %2927 = vmatprep.subr.bf16.mxu0 0
      %2928 = vmatpush2.bf16.msra.mxu0 %v2775
      %2929 = vmatprep.subr.bf16.mxu0 0
      %2930 = vmatpush2.bf16.msra.mxu0 %v2774
      %2931 = vmatprep.subr.bf16.mxu0 0
      %2932 = vmatpush2.bf16.msra.mxu0 %v2773
      %2933 = vmatprep.subr.bf16.mxu0 0
      %2934 = vmatpush2.bf16.msra.mxu0 %v2772
      %2935 = vmatprep.subr.bf16.mxu0 0
      %2936 = vmatpush2.bf16.msra.mxu0 %v2771
      %2937 = vmatprep.subr.bf16.mxu0 0
      %2938 = vmatpush2.bf16.msra.mxu0 %v2770
      %2939 = vmatprep.mubr.bf16.mxu0 %v2518
      %2940 = vmatmul.mubr.bf16.gmra.mxu0 %v2517
      %v2941 = vpop.f32.mrf.mxu0
      %v2942 = vadd.f32 %v2845, %v2941
      %v2943 = vpop.f32.mrf.mxu0
      %v2944 = vpop.f32.mrf.mxu0
      %v2945 = vadd.f32 %v2848, %v2944
      %v2946 = vpop.f32.mrf.mxu0
      %2947 = vmatprep.mubr.bf16.mxu0 %v2522
      %2948 = vmatmul.mubr.bf16.gmra.mxu0 %v2521
      %v2949 = vpop.f32.mrf.mxu0
      %v2950 = vadd.f32 %v2853, %v2949
      %v2951 = vpop.f32.mrf.mxu0
      %v2952 = vpop.f32.mrf.mxu0
      %v2953 = vadd.f32 %v2856, %v2952
      %v2954 = vpop.f32.mrf.mxu0
      %2955 = vmatprep.mubr.bf16.mxu0 %v2526
      %2956 = vmatmul.mubr.bf16.gmra.mxu0 %v2525
      %v2957 = vpop.f32.mrf.mxu0
      %v2958 = vadd.f32 %v2861, %v2957
      %v2959 = vpop.f32.mrf.mxu0
      %v2960 = vpop.f32.mrf.mxu0
      %v2961 = vadd.f32 %v2864, %v2960
      %v2962 = vpop.f32.mrf.mxu0
      %2963 = vmatprep.mubr.bf16.mxu0 %v2530
      %2964 = vmatmul.mubr.bf16.gmra.mxu0 %v2529
      %v2965 = vpop.f32.mrf.mxu0
      %v2966 = vadd.f32 %v2869, %v2965
      %v2967 = vpop.f32.mrf.mxu0
      %v2968 = vpop.f32.mrf.mxu0
      %v2969 = vadd.f32 %v2872, %v2968
      %v2970 = vpop.f32.mrf.mxu0
      %2971 = vmatprep.mubr.bf16.mxu0 %v2534
      %2972 = vmatmul.mubr.bf16.gmra.mxu0 %v2533
      %v2973 = vpop.f32.mrf.mxu0
      %v2974 = vadd.f32 %v2877, %v2973
      %v2975 = vpop.f32.mrf.mxu0
      %v2976 = vpop.f32.mrf.mxu0
      %v2977 = vadd.f32 %v2880, %v2976
      %v2978 = vpop.f32.mrf.mxu0
      %2979 = vmatprep.mubr.bf16.mxu0 %v2538
      %2980 = vmatmul.mubr.bf16.gmra.mxu0 %v2537
      %v2981 = vpop.f32.mrf.mxu0
      %v2982 = vadd.f32 %v2885, %v2981
      %v2983 = vpop.f32.mrf.mxu0
      %v2984 = vpop.f32.mrf.mxu0
      %v2985 = vadd.f32 %v2888, %v2984
      %v2986 = vpop.f32.mrf.mxu0
      %2987 = vmatprep.mubr.bf16.mxu0 %v2542
      %2988 = vmatmul.mubr.bf16.gmra.mxu0 %v2541
      %v2989 = vpop.f32.mrf.mxu0
      %v2990 = vadd.f32 %v2893, %v2989
      %v2991 = vpop.f32.mrf.mxu0
      %v2992 = vpop.f32.mrf.mxu0
      %v2993 = vadd.f32 %v2896, %v2992
      %v2994 = vpop.f32.mrf.mxu0
      %2995 = vmatprep.mubr.bf16.mxu0 %v2546
      %2996 = vmatmul.mubr.bf16.gmra.mxu0 %v2545
      %v2997 = vpop.f32.mrf.mxu0
      %v2998 = vadd.f32 %v2901, %v2997
      %v2999 = vpop.f32.mrf.mxu0
      %v3000 = vpop.f32.mrf.mxu0
      %v3001 = vadd.f32 %v2904, %v3000
      %v3002 = vpop.f32.mrf.mxu0
      %3003 = vdwg.mxu0
      %v3004 = vld [vmem:[%s504] sm:$0xff]
      %v3005 = vld [vmem:[%s504 + $0x8] sm:$0xff]
      %v3006 = vld [vmem:[%s504 + $0x10] sm:$0xff]
      %v3007 = vld [vmem:[%s504 + $0x18] sm:$0xff]
      %v3008 = vld [vmem:[%s504 + $0x20] sm:$0xff]
      %v3009 = vld [vmem:[%s504 + $0x28] sm:$0xff]
      %v3010 = vld [vmem:[%s504 + $0x30] sm:$0xff]
      %v3011 = vld [vmem:[%s504 + $0x38] sm:$0xff]
      %v3012 = vld [vmem:[%s504 + $0x40] sm:$0xff]
      %v3013 = vld [vmem:[%s504 + $0x48] sm:$0xff]
      %v3014 = vld [vmem:[%s504 + $0x50] sm:$0xff]
      %v3015 = vld [vmem:[%s504 + $0x58] sm:$0xff]
      %v3016 = vld [vmem:[%s504 + $0x60] sm:$0xff]
      %v3017 = vld [vmem:[%s504 + $0x68] sm:$0xff]
      %v3018 = vld [vmem:[%s504 + $0x70] sm:$0xff]
      %v3019 = vld [vmem:[%s504 + $0x78] sm:$0xff]
      %v3020 = vmul.f32 %v2942, 0.5
      %v3021 = vmul.f32 %v2945, 0.5
      %v3022 = vmul.f32 %v2950, 0.5
      %v3023 = vmul.f32 %v2953, 0.5
      %v3024 = vmul.f32 %v2958, 0.5
      %v3025 = vmul.f32 %v2961, 0.5
      %v3026 = vmul.f32 %v2966, 0.5
      %v3027 = vmul.f32 %v2969, 0.5
      %v3028 = vmul.f32 %v2974, 0.5
      %v3029 = vmul.f32 %v2977, 0.5
      %v3030 = vmul.f32 %v2982, 0.5
      %v3031 = vmul.f32 %v2985, 0.5
      %v3032 = vmul.f32 %v2990, 0.5
      %v3033 = vmul.f32 %v2993, 0.5
      %v3034 = vmul.f32 %v2998, 0.5
      %v3035 = vmul.f32 %v3001, 0.5
      %v3036 = vmul.f32 %v3020, 1.442695
      %v3037 = vpow.pop %v3036
      %v3038 = vmul.f32 %v3021, 1.442695
      %v3039 = vpow.pop %v3038
      %v3040 = vmul.f32 %v3022, 1.442695
      %v3041 = vpow.pop %v3040
      %v3042 = vmul.f32 %v3023, 1.442695
      %v3043 = vpow.pop %v3042
      %v3044 = vmul.f32 %v3024, 1.442695
      %v3045 = vpow.pop %v3044
      %v3046 = vmul.f32 %v3025, 1.442695
      %v3047 = vpow.pop %v3046
      %v3048 = vmul.f32 %v3026, 1.442695
      %v3049 = vpow.pop %v3048
      %v3050 = vmul.f32 %v3027, 1.442695
      %v3051 = vpow.pop %v3050
      %v3052 = vmul.f32 %v3028, 1.442695
      %v3053 = vpow.pop %v3052
      %v3054 = vmul.f32 %v3029, 1.442695
      %v3055 = vpow.pop %v3054
      %v3056 = vmul.f32 %v3030, 1.442695
      %v3057 = vpow.pop %v3056
      %v3058 = vmul.f32 %v3031, 1.442695
      %v3059 = vpow.pop %v3058
      %v3060 = vmul.f32 %v3032, 1.442695
      %v3061 = vpow.pop %v3060
      %v3062 = vmul.f32 %v3033, 1.442695
      %v3063 = vpow.pop %v3062
      %v3064 = vmul.f32 %v3034, 1.442695
      %v3065 = vpow.pop %v3064
      %v3066 = vmul.f32 %v3035, 1.442695
      %v3067 = vpow.pop %v3066
      %3084 = vrot.lane.b32.xlu0 %v3037, 126
      %v3085 = vpop.permute.xlu0 %3084
      %3086 = vrot.lane.b32.xlu0 %v3039, 126
      %v3087 = vpop.permute.xlu0 %3086
      %3088 = vrot.lane.b32.xlu0 %v3041, 126
      %v3089 = vpop.permute.xlu0 %3088
      %3090 = vrot.lane.b32.xlu0 %v3043, 126
      %v3091 = vpop.permute.xlu0 %3090
      %3092 = vrot.lane.b32.xlu0 %v3045, 126
      %v3093 = vpop.permute.xlu0 %3092
      %3094 = vrot.lane.b32.xlu0 %v3047, 126
      %v3095 = vpop.permute.xlu0 %3094
      %3096 = vrot.lane.b32.xlu0 %v3049, 126
      %v3097 = vpop.permute.xlu0 %3096
      %3098 = vrot.lane.b32.xlu0 %v3051, 126
      %v3099 = vpop.permute.xlu0 %3098
      %3100 = vrot.lane.b32.xlu0 %v3053, 126
      %v3101 = vpop.permute.xlu0 %3100
      %3102 = vrot.lane.b32.xlu0 %v3055, 126
      %v3103 = vpop.permute.xlu0 %3102
      %3104 = vrot.lane.b32.xlu0 %v3057, 126
      %v3105 = vpop.permute.xlu0 %3104
      %3106 = vrot.lane.b32.xlu0 %v3059, 126
      %v3107 = vpop.permute.xlu0 %3106
      %3108 = vrot.lane.b32.xlu0 %v3061, 126
      %v3109 = vpop.permute.xlu0 %3108
      %3110 = vrot.lane.b32.xlu0 %v3063, 126
      %v3111 = vpop.permute.xlu0 %3110
      %3112 = vrot.lane.b32.xlu0 %v3065, 126
      %v3113 = vpop.permute.xlu0 %3112
      %3114 = vrot.lane.b32.xlu0 %v3067, 126
      %v3115 = vpop.permute.xlu0 %3114
      %v3132 = vmul.f32 %v3004, %v3085
      %v3133 = vmul.f32 %v3005, %v3087
      %v3134 = vmul.f32 %v3006, %v3089
      %v3135 = vmul.f32 %v3007, %v3091
      %v3136 = vmul.f32 %v3008, %v3093
      %v3137 = vmul.f32 %v3009, %v3095
      %v3138 = vmul.f32 %v3010, %v3097
      %v3139 = vmul.f32 %v3011, %v3099
      %v3140 = vmul.f32 %v3012, %v3101
      %v3141 = vmul.f32 %v3013, %v3103
      %v3142 = vmul.f32 %v3014, %v3105
      %v3143 = vmul.f32 %v3015, %v3107
      %v3144 = vmul.f32 %v3016, %v3109
      %v3145 = vmul.f32 %v3017, %v3111
      %v3146 = vmul.f32 %v3018, %v3113
      %v3147 = vmul.f32 %v3019, %v3115
      %v3148 = vadd.f32 %v2942, %v3132
      %v3149 = vadd.f32 %v2945, %v3133
      %v3150 = vadd.f32 %v2950, %v3134
      %v3151 = vadd.f32 %v2953, %v3135
      %v3152 = vadd.f32 %v2958, %v3136
      %v3153 = vadd.f32 %v2961, %v3137
      %v3154 = vadd.f32 %v2966, %v3138
      %v3155 = vadd.f32 %v2969, %v3139
      %v3156 = vadd.f32 %v2974, %v3140
      %v3157 = vadd.f32 %v2977, %v3141
      %v3158 = vadd.f32 %v2982, %v3142
      %v3159 = vadd.f32 %v2985, %v3143
      %v3160 = vadd.f32 %v2990, %v3144
      %v3161 = vadd.f32 %v2993, %v3145
      %v3162 = vadd.f32 %v2998, %v3146
      %v3163 = vadd.f32 %v3001, %v3147
      %v3164 = vld [vmem:[%s8] sm:$0xff]
      %3166 = vset.pattern.permute.xlu0 0
      %3167 = vperm.xlu0 %3166, %v3148
      %v3168 = vpop.permute.xlu0 %3167
      %3171 = vset.pattern.permute.xlu0 0
      %3172 = vperm.xlu0 %3171, %v3149
      %v3173 = vpop.permute.xlu0 %3172
      %3176 = vset.pattern.permute.xlu0 0
      %3177 = vperm.xlu0 %3176, %v3150
      %v3178 = vpop.permute.xlu0 %3177
      %3181 = vset.pattern.permute.xlu0 0
      %3182 = vperm.xlu0 %3181, %v3151
      %v3183 = vpop.permute.xlu0 %3182
      %3186 = vset.pattern.permute.xlu0 0
      %3187 = vperm.xlu0 %3186, %v3152
      %v3188 = vpop.permute.xlu0 %3187
      %3191 = vset.pattern.permute.xlu0 0
      %3192 = vperm.xlu0 %3191, %v3153
      %v3193 = vpop.permute.xlu0 %3192
      %3196 = vset.pattern.permute.xlu0 0
      %3197 = vperm.xlu0 %3196, %v3154
      %v3198 = vpop.permute.xlu0 %3197
      %3201 = vset.pattern.permute.xlu0 0
      %3202 = vperm.xlu0 %3201, %v3155
      %v3203 = vpop.permute.xlu0 %3202
      %3206 = vset.pattern.permute.xlu0 0
      %3207 = vperm.xlu0 %3206, %v3156
      %v3208 = vpop.permute.xlu0 %3207
      %3211 = vset.pattern.permute.xlu0 0
      %3212 = vperm.xlu0 %3211, %v3157
      %v3213 = vpop.permute.xlu0 %3212
      %3216 = vset.pattern.permute.xlu0 0
      %3217 = vperm.xlu0 %3216, %v3158
      %v3218 = vpop.permute.xlu0 %3217
      %3221 = vset.pattern.permute.xlu0 0
      %3222 = vperm.xlu0 %3221, %v3159
      %v3223 = vpop.permute.xlu0 %3222
      %3226 = vset.pattern.permute.xlu0 0
      %3227 = vperm.xlu0 %3226, %v3160
      %v3228 = vpop.permute.xlu0 %3227
      %3231 = vset.pattern.permute.xlu0 0
      %3232 = vperm.xlu0 %3231, %v3161
      %v3233 = vpop.permute.xlu0 %3232
      %3236 = vset.pattern.permute.xlu0 0
      %3237 = vperm.xlu0 %3236, %v3162
      %v3238 = vpop.permute.xlu0 %3237
      %3241 = vset.pattern.permute.xlu0 0
      %3242 = vperm.xlu0 %3241, %v3163
      %v3243 = vpop.permute.xlu0 %3242
      %v3246 = vlaneseq
      %v3247 = vshrl.u32 %v3246, 7
      %v3248 = vsub.s32 0, %v3247
      %v3249 = vrot.slane %v3164, %v3248
      %v3250 = vlaneseq
      %v3251 = vshrl.u32 %v3250, 7
      %v3252 = vsub.s32 2, %v3251
      %v3253 = vrot.slane %v3164, %v3252
      %v3254 = vlaneseq
      %v3255 = vshrl.u32 %v3254, 7
      %v3256 = vsub.s32 4, %v3255
      %v3257 = vrot.slane %v3164, %v3256
      %v3258 = vlaneseq
      %v3259 = vshrl.u32 %v3258, 7
      %v3260 = vsub.s32 6, %v3259
      %v3261 = vrot.slane %v3164, %v3260
      %v3266 = vlaneseq
      %v3267 = vshrl.u32 %v3266, 7
      %v3268 = vsub.s32 0, %v3267
      %v3269 = vrot.slane %v3249, %v3268
      %v3270 = vlaneseq
      %v3271 = vshrl.u32 %v3270, 7
      %v3272 = vsub.s32 0, %v3271
      %v3273 = vrot.slane %v3253, %v3272
      %v3274 = vlaneseq
      %v3275 = vshrl.u32 %v3274, 7
      %v3276 = vsub.s32 0, %v3275
      %v3277 = vrot.slane %v3257, %v3276
      %v3278 = vlaneseq
      %v3279 = vshrl.u32 %v3278, 7
      %v3280 = vsub.s32 0, %v3279
      %v3281 = vrot.slane %v3261, %v3280
      %v3282 = vmul.f32 %v3168, %v3269
      %v3283 = vmul.f32 %v3168, %v3273
      %v3284 = vmul.f32 %v3168, %v3277
      %v3285 = vmul.f32 %v3168, %v3281
      %v3286 = vmul.f32 %v3173, %v3269
      %v3287 = vmul.f32 %v3173, %v3273
      %v3288 = vmul.f32 %v3173, %v3277
      %v3289 = vmul.f32 %v3173, %v3281
      %v3290 = vmul.f32 %v3178, %v3269
      %v3291 = vmul.f32 %v3178, %v3273
      %v3292 = vmul.f32 %v3178, %v3277
      %v3293 = vmul.f32 %v3178, %v3281
      %v3294 = vmul.f32 %v3183, %v3269
      %v3295 = vmul.f32 %v3183, %v3273
      %v3296 = vmul.f32 %v3183, %v3277
      %v3297 = vmul.f32 %v3183, %v3281
      %v3298 = vmul.f32 %v3188, %v3269
      %v3299 = vmul.f32 %v3188, %v3273
      %v3300 = vmul.f32 %v3188, %v3277
      %v3301 = vmul.f32 %v3188, %v3281
      %v3302 = vmul.f32 %v3193, %v3269
      %v3303 = vmul.f32 %v3193, %v3273
      %v3304 = vmul.f32 %v3193, %v3277
      %v3305 = vmul.f32 %v3193, %v3281
      %v3306 = vmul.f32 %v3198, %v3269
      %v3307 = vmul.f32 %v3198, %v3273
      %v3308 = vmul.f32 %v3198, %v3277
      %v3309 = vmul.f32 %v3198, %v3281
      %v3310 = vmul.f32 %v3203, %v3269
      %v3311 = vmul.f32 %v3203, %v3273
      %v3312 = vmul.f32 %v3203, %v3277
      %v3313 = vmul.f32 %v3203, %v3281
      %v3314 = vmul.f32 %v3208, %v3269
      %v3315 = vmul.f32 %v3208, %v3273
      %v3316 = vmul.f32 %v3208, %v3277
      %v3317 = vmul.f32 %v3208, %v3281
      %v3318 = vmul.f32 %v3213, %v3269
      %v3319 = vmul.f32 %v3213, %v3273
      %v3320 = vmul.f32 %v3213, %v3277
      %v3321 = vmul.f32 %v3213, %v3281
      %v3322 = vmul.f32 %v3218, %v3269
      %v3323 = vmul.f32 %v3218, %v3273
      %v3324 = vmul.f32 %v3218, %v3277
      %v3325 = vmul.f32 %v3218, %v3281
      %v3326 = vmul.f32 %v3223, %v3269
      %v3327 = vmul.f32 %v3223, %v3273
      %v3328 = vmul.f32 %v3223, %v3277
      %v3329 = vmul.f32 %v3223, %v3281
      %v3330 = vmul.f32 %v3228, %v3269
      %v3331 = vmul.f32 %v3228, %v3273
      %v3332 = vmul.f32 %v3228, %v3277
      %v3333 = vmul.f32 %v3228, %v3281
      %v3334 = vmul.f32 %v3233, %v3269
      %v3335 = vmul.f32 %v3233, %v3273
      %v3336 = vmul.f32 %v3233, %v3277
      %v3337 = vmul.f32 %v3233, %v3281
      %v3338 = vmul.f32 %v3238, %v3269
      %v3339 = vmul.f32 %v3238, %v3273
      %v3340 = vmul.f32 %v3238, %v3277
      %v3341 = vmul.f32 %v3238, %v3281
      %v3342 = vmul.f32 %v3243, %v3269
      %v3343 = vmul.f32 %v3243, %v3273
      %v3344 = vmul.f32 %v3243, %v3277
      %v3345 = vmul.f32 %v3243, %v3281
      %3346 = vset.pattern.permute.xlu0 1
      %3347 = vperm.xlu0 %3346, %v3148
      %v3348 = vpop.permute.xlu0 %3347
      %3350 = vset.pattern.permute.xlu0 1
      %3351 = vperm.xlu0 %3350, %v3149
      %v3352 = vpop.permute.xlu0 %3351
      %3354 = vset.pattern.permute.xlu0 1
      %3355 = vperm.xlu0 %3354, %v3150
      %v3356 = vpop.permute.xlu0 %3355
      %3358 = vset.pattern.permute.xlu0 1
      %3359 = vperm.xlu0 %3358, %v3151
      %v3360 = vpop.permute.xlu0 %3359
      %3362 = vset.pattern.permute.xlu0 1
      %3363 = vperm.xlu0 %3362, %v3152
      %v3364 = vpop.permute.xlu0 %3363
      %3366 = vset.pattern.permute.xlu0 1
      %3367 = vperm.xlu0 %3366, %v3153
      %v3368 = vpop.permute.xlu0 %3367
      %3370 = vset.pattern.permute.xlu0 1
      %3371 = vperm.xlu0 %3370, %v3154
      %v3372 = vpop.permute.xlu0 %3371
      %3374 = vset.pattern.permute.xlu0 1
      %3375 = vperm.xlu0 %3374, %v3155
      %v3376 = vpop.permute.xlu0 %3375
      %3378 = vset.pattern.permute.xlu0 1
      %3379 = vperm.xlu0 %3378, %v3156
      %v3380 = vpop.permute.xlu0 %3379
      %3382 = vset.pattern.permute.xlu0 1
      %3383 = vperm.xlu0 %3382, %v3157
      %v3384 = vpop.permute.xlu0 %3383
      %3386 = vset.pattern.permute.xlu0 1
      %3387 = vperm.xlu0 %3386, %v3158
      %v3388 = vpop.permute.xlu0 %3387
      %3390 = vset.pattern.permute.xlu0 1
      %3391 = vperm.xlu0 %3390, %v3159
      %v3392 = vpop.permute.xlu0 %3391
      %3394 = vset.pattern.permute.xlu0 1
      %3395 = vperm.xlu0 %3394, %v3160
      %v3396 = vpop.permute.xlu0 %3395
      %3398 = vset.pattern.permute.xlu0 1
      %3399 = vperm.xlu0 %3398, %v3161
      %v3400 = vpop.permute.xlu0 %3399
      %3402 = vset.pattern.permute.xlu0 1
      %3403 = vperm.xlu0 %3402, %v3162
      %v3404 = vpop.permute.xlu0 %3403
      %3406 = vset.pattern.permute.xlu0 1
      %3407 = vperm.xlu0 %3406, %v3163
      %v3408 = vpop.permute.xlu0 %3407
      %v3410 = vlaneseq
      %v3411 = vshrl.u32 %v3410, 7
      %v3412 = vsub.s32 1, %v3411
      %v3413 = vrot.slane %v3164, %v3412
      %v3414 = vlaneseq
      %v3415 = vshrl.u32 %v3414, 7
      %v3416 = vsub.s32 3, %v3415
      %v3417 = vrot.slane %v3164, %v3416
      %v3418 = vlaneseq
      %v3419 = vshrl.u32 %v3418, 7
      %v3420 = vsub.s32 5, %v3419
      %v3421 = vrot.slane %v3164, %v3420
      %v3422 = vlaneseq
      %v3423 = vshrl.u32 %v3422, 7
      %v3424 = vsub.s32 7, %v3423
      %v3425 = vrot.slane %v3164, %v3424
      %v3430 = vlaneseq
      %v3431 = vshrl.u32 %v3430, 7
      %v3432 = vsub.s32 1, %v3431
      %v3433 = vrot.slane %v3413, %v3432
      %v3434 = vlaneseq
      %v3435 = vshrl.u32 %v3434, 7
      %v3436 = vsub.s32 1, %v3435
      %v3437 = vrot.slane %v3417, %v3436
      %v3438 = vlaneseq
      %v3439 = vshrl.u32 %v3438, 7
      %v3440 = vsub.s32 1, %v3439
      %v3441 = vrot.slane %v3421, %v3440
      %v3442 = vlaneseq
      %v3443 = vshrl.u32 %v3442, 7
      %v3444 = vsub.s32 1, %v3443
      %v3445 = vrot.slane %v3425, %v3444
      %v3446 = vmul.f32 %v3348, %v3433
      %v3447 = vmul.f32 %v3348, %v3437
      %v3448 = vmul.f32 %v3348, %v3441
      %v3449 = vmul.f32 %v3348, %v3445
      %v3450 = vmul.f32 %v3352, %v3433
      %v3451 = vmul.f32 %v3352, %v3437
      %v3452 = vmul.f32 %v3352, %v3441
      %v3453 = vmul.f32 %v3352, %v3445
      %v3454 = vmul.f32 %v3356, %v3433
      %v3455 = vmul.f32 %v3356, %v3437
      %v3456 = vmul.f32 %v3356, %v3441
      %v3457 = vmul.f32 %v3356, %v3445
      %v3458 = vmul.f32 %v3360, %v3433
      %v3459 = vmul.f32 %v3360, %v3437
      %v3460 = vmul.f32 %v3360, %v3441
      %v3461 = vmul.f32 %v3360, %v3445
      %v3462 = vmul.f32 %v3364, %v3433
      %v3463 = vmul.f32 %v3364, %v3437
      %v3464 = vmul.f32 %v3364, %v3441
      %v3465 = vmul.f32 %v3364, %v3445
      %v3466 = vmul.f32 %v3368, %v3433
      %v3467 = vmul.f32 %v3368, %v3437
      %v3468 = vmul.f32 %v3368, %v3441
      %v3469 = vmul.f32 %v3368, %v3445
      %v3470 = vmul.f32 %v3372, %v3433
      %v3471 = vmul.f32 %v3372, %v3437
      %v3472 = vmul.f32 %v3372, %v3441
      %v3473 = vmul.f32 %v3372, %v3445
      %v3474 = vmul.f32 %v3376, %v3433
      %v3475 = vmul.f32 %v3376, %v3437
      %v3476 = vmul.f32 %v3376, %v3441
      %v3477 = vmul.f32 %v3376, %v3445
      %v3478 = vmul.f32 %v3380, %v3433
      %v3479 = vmul.f32 %v3380, %v3437
      %v3480 = vmul.f32 %v3380, %v3441
      %v3481 = vmul.f32 %v3380, %v3445
      %v3482 = vmul.f32 %v3384, %v3433
      %v3483 = vmul.f32 %v3384, %v3437
      %v3484 = vmul.f32 %v3384, %v3441
      %v3485 = vmul.f32 %v3384, %v3445
      %v3486 = vmul.f32 %v3388, %v3433
      %v3487 = vmul.f32 %v3388, %v3437
      %v3488 = vmul.f32 %v3388, %v3441
      %v3489 = vmul.f32 %v3388, %v3445
      %v3490 = vmul.f32 %v3392, %v3433
      %v3491 = vmul.f32 %v3392, %v3437
      %v3492 = vmul.f32 %v3392, %v3441
      %v3493 = vmul.f32 %v3392, %v3445
      %v3494 = vmul.f32 %v3396, %v3433
      %v3495 = vmul.f32 %v3396, %v3437
      %v3496 = vmul.f32 %v3396, %v3441
      %v3497 = vmul.f32 %v3396, %v3445
      %v3498 = vmul.f32 %v3400, %v3433
      %v3499 = vmul.f32 %v3400, %v3437
      %v3500 = vmul.f32 %v3400, %v3441
      %v3501 = vmul.f32 %v3400, %v3445
      %v3502 = vmul.f32 %v3404, %v3433
      %v3503 = vmul.f32 %v3404, %v3437
      %v3504 = vmul.f32 %v3404, %v3441
      %v3505 = vmul.f32 %v3404, %v3445
      %v3506 = vmul.f32 %v3408, %v3433
      %v3507 = vmul.f32 %v3408, %v3437
      %v3508 = vmul.f32 %v3408, %v3441
      %v3509 = vmul.f32 %v3408, %v3445
      %v3510 = vadd.f32 %v3282, %v3446
      %v3511 = vadd.f32 %v3283, %v3447
      %v3512 = vadd.f32 %v3284, %v3448
      %v3513 = vadd.f32 %v3285, %v3449
      %v3514 = vadd.f32 %v3286, %v3450
      %v3515 = vadd.f32 %v3287, %v3451
      %v3516 = vadd.f32 %v3288, %v3452
      %v3517 = vadd.f32 %v3289, %v3453
      %v3518 = vadd.f32 %v3290, %v3454
      %v3519 = vadd.f32 %v3291, %v3455
      %v3520 = vadd.f32 %v3292, %v3456
      %v3521 = vadd.f32 %v3293, %v3457
      %v3522 = vadd.f32 %v3294, %v3458
      %v3523 = vadd.f32 %v3295, %v3459
      %v3524 = vadd.f32 %v3296, %v3460
      %v3525 = vadd.f32 %v3297, %v3461
      %v3526 = vadd.f32 %v3298, %v3462
      %v3527 = vadd.f32 %v3299, %v3463
      %v3528 = vadd.f32 %v3300, %v3464
      %v3529 = vadd.f32 %v3301, %v3465
      %v3530 = vadd.f32 %v3302, %v3466
      %v3531 = vadd.f32 %v3303, %v3467
      %v3532 = vadd.f32 %v3304, %v3468
      %v3533 = vadd.f32 %v3305, %v3469
      %v3534 = vadd.f32 %v3306, %v3470
      %v3535 = vadd.f32 %v3307, %v3471
      %v3536 = vadd.f32 %v3308, %v3472
      %v3537 = vadd.f32 %v3309, %v3473
      %v3538 = vadd.f32 %v3310, %v3474
      %v3539 = vadd.f32 %v3311, %v3475
      %v3540 = vadd.f32 %v3312, %v3476
      %v3541 = vadd.f32 %v3313, %v3477
      %v3542 = vadd.f32 %v3314, %v3478
      %v3543 = vadd.f32 %v3315, %v3479
      %v3544 = vadd.f32 %v3316, %v3480
      %v3545 = vadd.f32 %v3317, %v3481
      %v3546 = vadd.f32 %v3318, %v3482
      %v3547 = vadd.f32 %v3319, %v3483
      %v3548 = vadd.f32 %v3320, %v3484
      %v3549 = vadd.f32 %v3321, %v3485
      %v3550 = vadd.f32 %v3322, %v3486
      %v3551 = vadd.f32 %v3323, %v3487
      %v3552 = vadd.f32 %v3324, %v3488
      %v3553 = vadd.f32 %v3325, %v3489
      %v3554 = vadd.f32 %v3326, %v3490
      %v3555 = vadd.f32 %v3327, %v3491
      %v3556 = vadd.f32 %v3328, %v3492
      %v3557 = vadd.f32 %v3329, %v3493
      %v3558 = vadd.f32 %v3330, %v3494
      %v3559 = vadd.f32 %v3331, %v3495
      %v3560 = vadd.f32 %v3332, %v3496
      %v3561 = vadd.f32 %v3333, %v3497
      %v3562 = vadd.f32 %v3334, %v3498
      %v3563 = vadd.f32 %v3335, %v3499
      %v3564 = vadd.f32 %v3336, %v3500
      %v3565 = vadd.f32 %v3337, %v3501
      %v3566 = vadd.f32 %v3338, %v3502
      %v3567 = vadd.f32 %v3339, %v3503
      %v3568 = vadd.f32 %v3340, %v3504
      %v3569 = vadd.f32 %v3341, %v3505
      %v3570 = vadd.f32 %v3342, %v3506
      %v3571 = vadd.f32 %v3343, %v3507
      %v3572 = vadd.f32 %v3344, %v3508
      %v3573 = vadd.f32 %v3345, %v3509
      %v3574 = vld [vmem:[%s9] sm:$0xf]
      %v3576 = vlaneseq
      %v3577 = vshrl.u32 %v3576, 7
      %v3578 = vsub.s32 0, %v3577
      %v3579 = vrot.slane %v3574, %v3578
      %v3580 = vlaneseq
      %v3581 = vshrl.u32 %v3580, 7
      %v3582 = vsub.s32 1, %v3581
      %v3583 = vrot.slane %v3574, %v3582
      %v3584 = vlaneseq
      %v3585 = vshrl.u32 %v3584, 7
      %v3586 = vsub.s32 2, %v3585
      %v3587 = vrot.slane %v3574, %v3586
      %v3588 = vlaneseq
      %v3589 = vshrl.u32 %v3588, 7
      %v3590 = vsub.s32 3, %v3589
      %v3591 = vrot.slane %v3574, %v3590
      %v3596 = vadd.f32 %v3510, %v3579
      %v3597 = vadd.f32 %v3511, %v3583
      %v3598 = vadd.f32 %v3512, %v3587
      %v3599 = vadd.f32 %v3513, %v3591
      %v3600 = vadd.f32 %v3514, %v3579
      %v3601 = vadd.f32 %v3515, %v3583
      %v3602 = vadd.f32 %v3516, %v3587
      %v3603 = vadd.f32 %v3517, %v3591
      %v3604 = vadd.f32 %v3518, %v3579
      %v3605 = vadd.f32 %v3519, %v3583
      %v3606 = vadd.f32 %v3520, %v3587
      %v3607 = vadd.f32 %v3521, %v3591
      %v3608 = vadd.f32 %v3522, %v3579
      %v3609 = vadd.f32 %v3523, %v3583
      %v3610 = vadd.f32 %v3524, %v3587
      %v3611 = vadd.f32 %v3525, %v3591
      %v3612 = vadd.f32 %v3526, %v3579
      %v3613 = vadd.f32 %v3527, %v3583
      %v3614 = vadd.f32 %v3528, %v3587
      %v3615 = vadd.f32 %v3529, %v3591
      %v3616 = vadd.f32 %v3530, %v3579
      %v3617 = vadd.f32 %v3531, %v3583
      %v3618 = vadd.f32 %v3532, %v3587
      %v3619 = vadd.f32 %v3533, %v3591
      %v3620 = vadd.f32 %v3534, %v3579
      %v3621 = vadd.f32 %v3535, %v3583
      %v3622 = vadd.f32 %v3536, %v3587
      %v3623 = vadd.f32 %v3537, %v3591
      %v3624 = vadd.f32 %v3538, %v3579
      %v3625 = vadd.f32 %v3539, %v3583
      %v3626 = vadd.f32 %v3540, %v3587
      %v3627 = vadd.f32 %v3541, %v3591
      %v3628 = vadd.f32 %v3542, %v3579
      %v3629 = vadd.f32 %v3543, %v3583
      %v3630 = vadd.f32 %v3544, %v3587
      %v3631 = vadd.f32 %v3545, %v3591
      %v3632 = vadd.f32 %v3546, %v3579
      %v3633 = vadd.f32 %v3547, %v3583
      %v3634 = vadd.f32 %v3548, %v3587
      %v3635 = vadd.f32 %v3549, %v3591
      %v3636 = vadd.f32 %v3550, %v3579
      %v3637 = vadd.f32 %v3551, %v3583
      %v3638 = vadd.f32 %v3552, %v3587
      %v3639 = vadd.f32 %v3553, %v3591
      %v3640 = vadd.f32 %v3554, %v3579
      %v3641 = vadd.f32 %v3555, %v3583
      %v3642 = vadd.f32 %v3556, %v3587
      %v3643 = vadd.f32 %v3557, %v3591
      %v3644 = vadd.f32 %v3558, %v3579
      %v3645 = vadd.f32 %v3559, %v3583
      %v3646 = vadd.f32 %v3560, %v3587
      %v3647 = vadd.f32 %v3561, %v3591
      %v3648 = vadd.f32 %v3562, %v3579
      %v3649 = vadd.f32 %v3563, %v3583
      %v3650 = vadd.f32 %v3564, %v3587
      %v3651 = vadd.f32 %v3565, %v3591
      %v3652 = vadd.f32 %v3566, %v3579
      %v3653 = vadd.f32 %v3567, %v3583
      %v3654 = vadd.f32 %v3568, %v3587
      %v3655 = vadd.f32 %v3569, %v3591
      %v3656 = vadd.f32 %v3570, %v3579
      %v3657 = vadd.f32 %v3571, %v3583
      %v3658 = vadd.f32 %v3572, %v3587
      %v3659 = vadd.f32 %v3573, %v3591
      %v3660 = vmax.f32 %v3596, 0.0
      %v3661 = vmax.f32 %v3597, 0.0
      %v3662 = vmax.f32 %v3598, 0.0
      %v3663 = vmax.f32 %v3599, 0.0
      %v3664 = vmax.f32 %v3600, 0.0
      %v3665 = vmax.f32 %v3601, 0.0
      %v3666 = vmax.f32 %v3602, 0.0
      %v3667 = vmax.f32 %v3603, 0.0
      %v3668 = vmax.f32 %v3604, 0.0
      %v3669 = vmax.f32 %v3605, 0.0
      %v3670 = vmax.f32 %v3606, 0.0
      %v3671 = vmax.f32 %v3607, 0.0
      %v3672 = vmax.f32 %v3608, 0.0
      %v3673 = vmax.f32 %v3609, 0.0
      %v3674 = vmax.f32 %v3610, 0.0
      %v3675 = vmax.f32 %v3611, 0.0
      %v3676 = vmax.f32 %v3612, 0.0
      %v3677 = vmax.f32 %v3613, 0.0
      %v3678 = vmax.f32 %v3614, 0.0
      %v3679 = vmax.f32 %v3615, 0.0
      %v3680 = vmax.f32 %v3616, 0.0
      %v3681 = vmax.f32 %v3617, 0.0
      %v3682 = vmax.f32 %v3618, 0.0
      %v3683 = vmax.f32 %v3619, 0.0
      %v3684 = vmax.f32 %v3620, 0.0
      %v3685 = vmax.f32 %v3621, 0.0
      %v3686 = vmax.f32 %v3622, 0.0
      %v3687 = vmax.f32 %v3623, 0.0
      %v3688 = vmax.f32 %v3624, 0.0
      %v3689 = vmax.f32 %v3625, 0.0
      %v3690 = vmax.f32 %v3626, 0.0
      %v3691 = vmax.f32 %v3627, 0.0
      %v3692 = vmax.f32 %v3628, 0.0
      %v3693 = vmax.f32 %v3629, 0.0
      %v3694 = vmax.f32 %v3630, 0.0
      %v3695 = vmax.f32 %v3631, 0.0
      %v3696 = vmax.f32 %v3632, 0.0
      %v3697 = vmax.f32 %v3633, 0.0
      %v3698 = vmax.f32 %v3634, 0.0
      %v3699 = vmax.f32 %v3635, 0.0
      %v3700 = vmax.f32 %v3636, 0.0
      %v3701 = vmax.f32 %v3637, 0.0
      %v3702 = vmax.f32 %v3638, 0.0
      %v3703 = vmax.f32 %v3639, 0.0
      %v3704 = vmax.f32 %v3640, 0.0
      %v3705 = vmax.f32 %v3641, 0.0
      %v3706 = vmax.f32 %v3642, 0.0
      %v3707 = vmax.f32 %v3643, 0.0
      %v3708 = vmax.f32 %v3644, 0.0
      %v3709 = vmax.f32 %v3645, 0.0
      %v3710 = vmax.f32 %v3646, 0.0
      %v3711 = vmax.f32 %v3647, 0.0
      %v3712 = vmax.f32 %v3648, 0.0
      %v3713 = vmax.f32 %v3649, 0.0
      %v3714 = vmax.f32 %v3650, 0.0
      %v3715 = vmax.f32 %v3651, 0.0
      %v3716 = vmax.f32 %v3652, 0.0
      %v3717 = vmax.f32 %v3653, 0.0
      %v3718 = vmax.f32 %v3654, 0.0
      %v3719 = vmax.f32 %v3655, 0.0
      %v3720 = vmax.f32 %v3656, 0.0
      %v3721 = vmax.f32 %v3657, 0.0
      %v3722 = vmax.f32 %v3658, 0.0
      %v3723 = vmax.f32 %v3659, 0.0
      %v3724 = vpack.c.bf16 %v3664, %v3660
      %v3725 = vpack.c.bf16 %v3665, %v3661
      %v3726 = vpack.c.bf16 %v3666, %v3662
      %v3727 = vpack.c.bf16 %v3667, %v3663
      %v3728 = vpack.c.bf16 %v3672, %v3668
      %v3729 = vpack.c.bf16 %v3673, %v3669
      %v3730 = vpack.c.bf16 %v3674, %v3670
      %v3731 = vpack.c.bf16 %v3675, %v3671
      %v3732 = vpack.c.bf16 %v3680, %v3676
      %v3733 = vpack.c.bf16 %v3681, %v3677
      %v3734 = vpack.c.bf16 %v3682, %v3678
      %v3735 = vpack.c.bf16 %v3683, %v3679
      %v3736 = vpack.c.bf16 %v3688, %v3684
      %v3737 = vpack.c.bf16 %v3689, %v3685
      %v3738 = vpack.c.bf16 %v3690, %v3686
      %v3739 = vpack.c.bf16 %v3691, %v3687
      %v3740 = vpack.c.bf16 %v3696, %v3692
      %v3741 = vpack.c.bf16 %v3697, %v3693
      %v3742 = vpack.c.bf16 %v3698, %v3694
      %v3743 = vpack.c.bf16 %v3699, %v3695
      %v3744 = vpack.c.bf16 %v3704, %v3700
      %v3745 = vpack.c.bf16 %v3705, %v3701
      %v3746 = vpack.c.bf16 %v3706, %v3702
      %v3747 = vpack.c.bf16 %v3707, %v3703
      %v3748 = vpack.c.bf16 %v3712, %v3708
      %v3749 = vpack.c.bf16 %v3713, %v3709
      %v3750 = vpack.c.bf16 %v3714, %v3710
      %v3751 = vpack.c.bf16 %v3715, %v3711
      %v3752 = vpack.c.bf16 %v3720, %v3716
      %v3753 = vpack.c.bf16 %v3721, %v3717
      %v3754 = vpack.c.bf16 %v3722, %v3718
      %v3755 = vpack.c.bf16 %v3723, %v3719
      %v3756 = vld [vmem:[%s10] sm:$0xff]
      %v3757 = vld [vmem:[%s10 + $0x8] sm:$0xff]
      %v3758 = vld [vmem:[%s10 + $0x10] sm:$0xff]
      %v3759 = vld [vmem:[%s10 + $0x18] sm:$0xf]
      %v3760 = vld [vmem:[%s10 + $0x1c] sm:$0xff]
      %v3761 = vld [vmem:[%s10 + $0x24] sm:$0xff]
      %v3762 = vld [vmem:[%s10 + $0x2c] sm:$0xff]
      %v3763 = vld [vmem:[%s10 + $0x34] sm:$0xf]
      %v3764 = vld [vmem:[%s10 + $0x38] sm:$0xff]
      %v3765 = vld [vmem:[%s10 + $0x40] sm:$0xff]
      %v3766 = vld [vmem:[%s10 + $0x48] sm:$0xff]
      %v3767 = vld [vmem:[%s10 + $0x50] sm:$0xf]
      %v3768 = vld [vmem:[%s10 + $0x54] sm:$0xff]
      %v3769 = vld [vmem:[%s10 + $0x5c] sm:$0xff]
      %v3770 = vld [vmem:[%s10 + $0x64] sm:$0xff]
      %v3771 = vld [vmem:[%s10 + $0x6c] sm:$0xf]
      %v3772 = vld [vmem:[%s10 + $0x70] sm:$0xff]
      %v3773 = vld [vmem:[%s10 + $0x78] sm:$0xff]
      %v3774 = vld [vmem:[%s10 + $0x80] sm:$0xff]
      %v3775 = vld [vmem:[%s10 + $0x88] sm:$0xf]
      %v3776 = vld [vmem:[%s10 + $0x8c] sm:$0xff]
      %v3777 = vld [vmem:[%s10 + $0x94] sm:$0xff]
      %v3778 = vld [vmem:[%s10 + $0x9c] sm:$0xff]
      %v3779 = vld [vmem:[%s10 + $0xa4] sm:$0xf]
      %v3780 = vld [vmem:[%s10 + $0xa8] sm:$0xff]
      %v3781 = vld [vmem:[%s10 + $0xb0] sm:$0xff]
      %v3782 = vld [vmem:[%s10 + $0xb8] sm:$0xff]
      %v3783 = vld [vmem:[%s10 + $0xc0] sm:$0xf]
      %v3784 = vld [vmem:[%s10 + $0xc4] sm:$0xff]
      %v3785 = vld [vmem:[%s10 + $0xcc] sm:$0xff]
      %v3786 = vld [vmem:[%s10 + $0xd4] sm:$0xff]
      %v3787 = vld [vmem:[%s10 + $0xdc] sm:$0xf]
      %v3788 = vld [vmem:[%s10 + $0xe0] sm:$0xff]
      %v3789 = vld [vmem:[%s10 + $0xe8] sm:$0xff]
      %v3790 = vld [vmem:[%s10 + $0xf0] sm:$0xff]
      %v3791 = vld [vmem:[%s10 + $0xf8] sm:$0xf]
      %v3792 = vld [vmem:[%s10 + $0xfc] sm:$0xff]
      %v3793 = vld [vmem:[%s10 + $0x104] sm:$0xff]
      %v3794 = vld [vmem:[%s10 + $0x10c] sm:$0xff]
      %v3795 = vld [vmem:[%s10 + $0x114] sm:$0xf]
      %v3796 = vld [vmem:[%s10 + $0x118] sm:$0xff]
      %v3797 = vld [vmem:[%s10 + $0x120] sm:$0xff]
      %v3798 = vld [vmem:[%s10 + $0x128] sm:$0xff]
      %v3799 = vld [vmem:[%s10 + $0x130] sm:$0xf]
      %v3800 = vld [vmem:[%s10 + $0x134] sm:$0xff]
      %v3801 = vld [vmem:[%s10 + $0x13c] sm:$0xff]
      %v3802 = vld [vmem:[%s10 + $0x144] sm:$0xff]
      %v3803 = vld [vmem:[%s10 + $0x14c] sm:$0xf]
      %v3804 = vld [vmem:[%s10 + $0x150] sm:$0xff]
      %v3805 = vld [vmem:[%s10 + $0x158] sm:$0xff]
      %v3806 = vld [vmem:[%s10 + $0x160] sm:$0xff]
      %v3807 = vld [vmem:[%s10 + $0x168] sm:$0xf]
      %v3808 = vld [vmem:[%s10 + $0x16c] sm:$0xff]
      %v3809 = vld [vmem:[%s10 + $0x174] sm:$0xff]
      %v3810 = vld [vmem:[%s10 + $0x17c] sm:$0xff]
      %v3811 = vld [vmem:[%s10 + $0x184] sm:$0xf]
      %v3812 = vld [vmem:[%s10 + $0x188] sm:$0xff]
      %v3813 = vld [vmem:[%s10 + $0x190] sm:$0xff]
      %v3814 = vld [vmem:[%s10 + $0x198] sm:$0xff]
      %v3815 = vld [vmem:[%s10 + $0x1a0] sm:$0xf]
      %v3816 = vld [vmem:[%s10 + $0x1a4] sm:$0xff]
      %v3817 = vld [vmem:[%s10 + $0x1ac] sm:$0xff]
      %v3818 = vld [vmem:[%s10 + $0x1b4] sm:$0xff]
      %v3819 = vld [vmem:[%s10 + $0x1bc] sm:$0xf]
      %v3820 = vld [vmem:[%s10 + $0x1c0] sm:$0xff]
      %v3821 = vld [vmem:[%s10 + $0x1c8] sm:$0xff]
      %v3822 = vld [vmem:[%s10 + $0x1d0] sm:$0xff]
      %v3823 = vld [vmem:[%s10 + $0x1d8] sm:$0xf]
      %v3824 = vld [vmem:[%s10 + $0x1dc] sm:$0xff]
      %v3825 = vld [vmem:[%s10 + $0x1e4] sm:$0xff]
      %v3826 = vld [vmem:[%s10 + $0x1ec] sm:$0xff]
      %v3827 = vld [vmem:[%s10 + $0x1f4] sm:$0xf]
      %v3828 = vld [vmem:[%s10 + $0x1f8] sm:$0xff]
      %v3829 = vld [vmem:[%s10 + $0x200] sm:$0xff]
      %v3830 = vld [vmem:[%s10 + $0x208] sm:$0xff]
      %v3831 = vld [vmem:[%s10 + $0x210] sm:$0xf]
      %v3832 = vld [vmem:[%s10 + $0x214] sm:$0xff]
      %v3833 = vld [vmem:[%s10 + $0x21c] sm:$0xff]
      %v3834 = vld [vmem:[%s10 + $0x224] sm:$0xff]
      %v3835 = vld [vmem:[%s10 + $0x22c] sm:$0xf]
      %v3836 = vld [vmem:[%s10 + $0x230] sm:$0xff]
      %v3837 = vld [vmem:[%s10 + $0x238] sm:$0xff]
      %v3838 = vld [vmem:[%s10 + $0x240] sm:$0xff]
      %v3839 = vld [vmem:[%s10 + $0x248] sm:$0xf]
      %v3840 = vld [vmem:[%s10 + $0x24c] sm:$0xff]
      %v3841 = vld [vmem:[%s10 + $0x254] sm:$0xff]
      %v3842 = vld [vmem:[%s10 + $0x25c] sm:$0xff]
      %v3843 = vld [vmem:[%s10 + $0x264] sm:$0xf]
      %v3844 = vld [vmem:[%s10 + $0x268] sm:$0xff]
      %v3845 = vld [vmem:[%s10 + $0x270] sm:$0xff]
      %v3846 = vld [vmem:[%s10 + $0x278] sm:$0xff]
      %v3847 = vld [vmem:[%s10 + $0x280] sm:$0xf]
      %v3848 = vld [vmem:[%s10 + $0x284] sm:$0xff]
      %v3849 = vld [vmem:[%s10 + $0x28c] sm:$0xff]
      %v3850 = vld [vmem:[%s10 + $0x294] sm:$0xff]
      %v3851 = vld [vmem:[%s10 + $0x29c] sm:$0xf]
      %v3852 = vld [vmem:[%s10 + $0x2a0] sm:$0xff]
      %v3853 = vld [vmem:[%s10 + $0x2a8] sm:$0xff]
      %v3854 = vld [vmem:[%s10 + $0x2b0] sm:$0xff]
      %v3855 = vld [vmem:[%s10 + $0x2b8] sm:$0xf]
      %v3856 = vld [vmem:[%s10 + $0x2bc] sm:$0xff]
      %v3857 = vld [vmem:[%s10 + $0x2c4] sm:$0xff]
      %v3858 = vld [vmem:[%s10 + $0x2cc] sm:$0xff]
      %v3859 = vld [vmem:[%s10 + $0x2d4] sm:$0xf]
      %v3860 = vld [vmem:[%s10 + $0x2d8] sm:$0xff]
      %v3861 = vld [vmem:[%s10 + $0x2e0] sm:$0xff]
      %v3862 = vld [vmem:[%s10 + $0x2e8] sm:$0xff]
      %v3863 = vld [vmem:[%s10 + $0x2f0] sm:$0xf]
      %v3864 = vld [vmem:[%s10 + $0x2f4] sm:$0xff]
      %v3865 = vld [vmem:[%s10 + $0x2fc] sm:$0xff]
      %v3866 = vld [vmem:[%s10 + $0x304] sm:$0xff]
      %v3867 = vld [vmem:[%s10 + $0x30c] sm:$0xf]
      %v3868 = vld [vmem:[%s10 + $0x310] sm:$0xff]
      %v3869 = vld [vmem:[%s10 + $0x318] sm:$0xff]
      %v3870 = vld [vmem:[%s10 + $0x320] sm:$0xff]
      %v3871 = vld [vmem:[%s10 + $0x328] sm:$0xf]
      %v3872 = vld [vmem:[%s10 + $0x32c] sm:$0xff]
      %v3873 = vld [vmem:[%s10 + $0x334] sm:$0xff]
      %v3874 = vld [vmem:[%s10 + $0x33c] sm:$0xff]
      %v3875 = vld [vmem:[%s10 + $0x344] sm:$0xf]
      %v3876 = vld [vmem:[%s10 + $0x348] sm:$0xff]
      %v3877 = vld [vmem:[%s10 + $0x350] sm:$0xff]
      %v3878 = vld [vmem:[%s10 + $0x358] sm:$0xff]
      %v3879 = vld [vmem:[%s10 + $0x360] sm:$0xf]
      %v3880 = vld [vmem:[%s10 + $0x364] sm:$0xff]
      %v3881 = vld [vmem:[%s10 + $0x36c] sm:$0xff]
      %v3882 = vld [vmem:[%s10 + $0x374] sm:$0xff]
      %v3883 = vld [vmem:[%s10 + $0x37c] sm:$0xf]
      %v3884 = vld [vmem:[%s10 + $0x380] sm:$0xff]
      %v3885 = vld [vmem:[%s10 + $0x388] sm:$0xff]
      %v3886 = vld [vmem:[%s10 + $0x390] sm:$0xff]
      %v3887 = vld [vmem:[%s10 + $0x398] sm:$0xf]
      %v3888 = vld [vmem:[%s10 + $0x39c] sm:$0xff]
      %v3889 = vld [vmem:[%s10 + $0x3a4] sm:$0xff]
      %v3890 = vld [vmem:[%s10 + $0x3ac] sm:$0xff]
      %v3891 = vld [vmem:[%s10 + $0x3b4] sm:$0xf]
      %v3892 = vld [vmem:[%s10 + $0x3b8] sm:$0xff]
      %v3893 = vld [vmem:[%s10 + $0x3c0] sm:$0xff]
      %v3894 = vld [vmem:[%s10 + $0x3c8] sm:$0xff]
      %v3895 = vld [vmem:[%s10 + $0x3d0] sm:$0xf]
      %v3896 = vld [vmem:[%s10 + $0x3d4] sm:$0xff]
      %v3897 = vld [vmem:[%s10 + $0x3dc] sm:$0xff]
      %v3898 = vld [vmem:[%s10 + $0x3e4] sm:$0xff]
      %v3899 = vld [vmem:[%s10 + $0x3ec] sm:$0xf]
      %v3900 = vld [vmem:[%s10 + $0x3f0] sm:$0xff]
      %v3901 = vld [vmem:[%s10 + $0x3f8] sm:$0xff]
      %v3902 = vld [vmem:[%s10 + $0x400] sm:$0xff]
      %v3903 = vld [vmem:[%s10 + $0x408] sm:$0xf]
      %v3904 = vld [vmem:[%s10 + $0x40c] sm:$0xff]
      %v3905 = vld [vmem:[%s10 + $0x414] sm:$0xff]
      %v3906 = vld [vmem:[%s10 + $0x41c] sm:$0xff]
      %v3907 = vld [vmem:[%s10 + $0x424] sm:$0xf]
      %v3908 = vld [vmem:[%s10 + $0x428] sm:$0xff]
      %v3909 = vld [vmem:[%s10 + $0x430] sm:$0xff]
      %v3910 = vld [vmem:[%s10 + $0x438] sm:$0xff]
      %v3911 = vld [vmem:[%s10 + $0x440] sm:$0xf]
      %v3912 = vld [vmem:[%s10 + $0x444] sm:$0xff]
      %v3913 = vld [vmem:[%s10 + $0x44c] sm:$0xff]
      %v3914 = vld [vmem:[%s10 + $0x454] sm:$0xff]
      %v3915 = vld [vmem:[%s10 + $0x45c] sm:$0xf]
      %v3916 = vld [vmem:[%s10 + $0x460] sm:$0xff]
      %v3917 = vld [vmem:[%s10 + $0x468] sm:$0xff]
      %v3918 = vld [vmem:[%s10 + $0x470] sm:$0xff]
      %v3919 = vld [vmem:[%s10 + $0x478] sm:$0xf]
      %v3920 = vld [vmem:[%s10 + $0x47c] sm:$0xff]
      %v3921 = vld [vmem:[%s10 + $0x484] sm:$0xff]
      %v3922 = vld [vmem:[%s10 + $0x48c] sm:$0xff]
      %v3923 = vld [vmem:[%s10 + $0x494] sm:$0xf]
      %v3924 = vld [vmem:[%s10 + $0x498] sm:$0xff]
      %v3925 = vld [vmem:[%s10 + $0x4a0] sm:$0xff]
      %v3926 = vld [vmem:[%s10 + $0x4a8] sm:$0xff]
      %v3927 = vld [vmem:[%s10 + $0x4b0] sm:$0xf]
      %v3928 = vld [vmem:[%s10 + $0x4b4] sm:$0xff]
      %v3929 = vld [vmem:[%s10 + $0x4bc] sm:$0xff]
      %v3930 = vld [vmem:[%s10 + $0x4c4] sm:$0xff]
      %v3931 = vld [vmem:[%s10 + $0x4cc] sm:$0xf]
      %v3932 = vld [vmem:[%s10 + $0x4d0] sm:$0xff]
      %v3933 = vld [vmem:[%s10 + $0x4d8] sm:$0xff]
      %v3934 = vld [vmem:[%s10 + $0x4e0] sm:$0xff]
      %v3935 = vld [vmem:[%s10 + $0x4e8] sm:$0xf]
      %v3936 = vld [vmem:[%s10 + $0x4ec] sm:$0xff]
      %v3937 = vld [vmem:[%s10 + $0x4f4] sm:$0xff]
      %v3938 = vld [vmem:[%s10 + $0x4fc] sm:$0xff]
      %v3939 = vld [vmem:[%s10 + $0x504] sm:$0xf]
      %v3940 = vld [vmem:[%s10 + $0x508] sm:$0xff]
      %v3941 = vld [vmem:[%s10 + $0x510] sm:$0xff]
      %v3942 = vld [vmem:[%s10 + $0x518] sm:$0xff]
      %v3943 = vld [vmem:[%s10 + $0x520] sm:$0xf]
      %v3944 = vld [vmem:[%s10 + $0x524] sm:$0xff]
      %v3945 = vld [vmem:[%s10 + $0x52c] sm:$0xff]
      %v3946 = vld [vmem:[%s10 + $0x534] sm:$0xff]
      %v3947 = vld [vmem:[%s10 + $0x53c] sm:$0xf]
      %v3948 = vld [vmem:[%s10 + $0x540] sm:$0xff]
      %v3949 = vld [vmem:[%s10 + $0x548] sm:$0xff]
      %v3950 = vld [vmem:[%s10 + $0x550] sm:$0xff]
      %v3951 = vld [vmem:[%s10 + $0x558] sm:$0xf]
      %v3952 = vld [vmem:[%s10 + $0x55c] sm:$0xff]
      %v3953 = vld [vmem:[%s10 + $0x564] sm:$0xff]
      %v3954 = vld [vmem:[%s10 + $0x56c] sm:$0xff]
      %v3955 = vld [vmem:[%s10 + $0x574] sm:$0xf]
      %v3956 = vld [vmem:[%s10 + $0x578] sm:$0xff]
      %v3957 = vld [vmem:[%s10 + $0x580] sm:$0xff]
      %v3958 = vld [vmem:[%s10 + $0x588] sm:$0xff]
      %v3959 = vld [vmem:[%s10 + $0x590] sm:$0xf]
      %v3960 = vld [vmem:[%s10 + $0x594] sm:$0xff]
      %v3961 = vld [vmem:[%s10 + $0x59c] sm:$0xff]
      %v3962 = vld [vmem:[%s10 + $0x5a4] sm:$0xff]
      %v3963 = vld [vmem:[%s10 + $0x5ac] sm:$0xf]
      %v3964 = vld [vmem:[%s10 + $0x5b0] sm:$0xff]
      %v3965 = vld [vmem:[%s10 + $0x5b8] sm:$0xff]
      %v3966 = vld [vmem:[%s10 + $0x5c0] sm:$0xff]
      %v3967 = vld [vmem:[%s10 + $0x5c8] sm:$0xf]
      %v3968 = vld [vmem:[%s10 + $0x5cc] sm:$0xff]
      %v3969 = vld [vmem:[%s10 + $0x5d4] sm:$0xff]
      %v3970 = vld [vmem:[%s10 + $0x5dc] sm:$0xff]
      %v3971 = vld [vmem:[%s10 + $0x5e4] sm:$0xf]
      %v3972 = vld [vmem:[%s10 + $0x5e8] sm:$0xff]
      %v3973 = vld [vmem:[%s10 + $0x5f0] sm:$0xff]
      %v3974 = vld [vmem:[%s10 + $0x5f8] sm:$0xff]
      %v3975 = vld [vmem:[%s10 + $0x600] sm:$0xf]
      %v3976 = vld [vmem:[%s10 + $0x604] sm:$0xff]
      %v3977 = vld [vmem:[%s10 + $0x60c] sm:$0xff]
      %v3978 = vld [vmem:[%s10 + $0x614] sm:$0xff]
      %v3979 = vld [vmem:[%s10 + $0x61c] sm:$0xf]
      %v3980 = vld [vmem:[%s10 + $0x620] sm:$0xff]
      %v3981 = vld [vmem:[%s10 + $0x628] sm:$0xff]
      %v3982 = vld [vmem:[%s10 + $0x630] sm:$0xff]
      %v3983 = vld [vmem:[%s10 + $0x638] sm:$0xf]
      %v3984 = vld [vmem:[%s10 + $0x63c] sm:$0xff]
      %v3985 = vld [vmem:[%s10 + $0x644] sm:$0xff]
      %v3986 = vld [vmem:[%s10 + $0x64c] sm:$0xff]
      %v3987 = vld [vmem:[%s10 + $0x654] sm:$0xf]
      %v3988 = vld [vmem:[%s10 + $0x658] sm:$0xff]
      %v3989 = vld [vmem:[%s10 + $0x660] sm:$0xff]
      %v3990 = vld [vmem:[%s10 + $0x668] sm:$0xff]
      %v3991 = vld [vmem:[%s10 + $0x670] sm:$0xf]
      %v3992 = vld [vmem:[%s10 + $0x674] sm:$0xff]
      %v3993 = vld [vmem:[%s10 + $0x67c] sm:$0xff]
      %v3994 = vld [vmem:[%s10 + $0x684] sm:$0xff]
      %v3995 = vld [vmem:[%s10 + $0x68c] sm:$0xf]
      %v3996 = vld [vmem:[%s10 + $0x690] sm:$0xff]
      %v3997 = vld [vmem:[%s10 + $0x698] sm:$0xff]
      %v3998 = vld [vmem:[%s10 + $0x6a0] sm:$0xff]
      %v3999 = vld [vmem:[%s10 + $0x6a8] sm:$0xf]
      %v4000 = vld [vmem:[%s10 + $0x6ac] sm:$0xff]
      %v4001 = vld [vmem:[%s10 + $0x6b4] sm:$0xff]
      %v4002 = vld [vmem:[%s10 + $0x6bc] sm:$0xff]
      %v4003 = vld [vmem:[%s10 + $0x6c4] sm:$0xf]
      %v4004 = vld [vmem:[%s10 + $0x6c8] sm:$0xff]
      %v4005 = vld [vmem:[%s10 + $0x6d0] sm:$0xff]
      %v4006 = vld [vmem:[%s10 + $0x6d8] sm:$0xff]
      %v4007 = vld [vmem:[%s10 + $0x6e0] sm:$0xf]
      %v4008 = vld [vmem:[%s10 + $0x6e4] sm:$0xff]
      %v4009 = vld [vmem:[%s10 + $0x6ec] sm:$0xff]
      %v4010 = vld [vmem:[%s10 + $0x6f4] sm:$0xff]
      %v4011 = vld [vmem:[%s10 + $0x6fc] sm:$0xf]
      %v4012 = vld [vmem:[%s11] sm:$0x7f]
      %v4014 = vlaneseq
      %v4015 = vshrl.u32 %v4014, 7
      %v4016 = vsub.s32 0, %v4015
      %v4017 = vrot.slane %v4012, %v4016
      %v4018 = vlaneseq
      %v4019 = vshrl.u32 %v4018, 7
      %v4020 = vsub.s32 1, %v4019
      %v4021 = vrot.slane %v4012, %v4020
      %v4022 = vlaneseq
      %v4023 = vshrl.u32 %v4022, 7
      %v4024 = vsub.s32 2, %v4023
      %v4025 = vrot.slane %v4012, %v4024
      %v4026 = vlaneseq
      %v4027 = vshrl.u32 %v4026, 7
      %v4028 = vsub.s32 3, %v4027
      %v4029 = vrot.slane %v4012, %v4028
      %v4030 = vlaneseq
      %v4031 = vshrl.u32 %v4030, 7
      %v4032 = vsub.s32 4, %v4031
      %v4033 = vrot.slane %v4012, %v4032
      %v4034 = vlaneseq
      %v4035 = vshrl.u32 %v4034, 7
      %v4036 = vsub.s32 5, %v4035
      %v4037 = vrot.slane %v4012, %v4036
      %v4038 = vlaneseq
      %v4039 = vshrl.u32 %v4038, 7
      %v4040 = vsub.s32 6, %v4039
      %v4041 = vrot.slane %v4012, %v4040
      %v4305 = vunpack.c.l.b16 %v3756
      %v4306 = vunpack.c.h.b16 %v3756
      %v4307 = vunpack.c.l.b16 %v3757
      %v4308 = vunpack.c.h.b16 %v3757
      %v4309 = vunpack.c.l.b16 %v3758
      %v4310 = vunpack.c.h.b16 %v3758
      %v4311 = vunpack.c.l.b16 %v3759
      %v4312 = vunpack.c.l.b16 %v3760
      %v4313 = vunpack.c.h.b16 %v3760
      %v4314 = vunpack.c.l.b16 %v3761
      %v4315 = vunpack.c.h.b16 %v3761
      %v4316 = vunpack.c.l.b16 %v3762
      %v4317 = vunpack.c.h.b16 %v3762
      %v4318 = vunpack.c.l.b16 %v3763
      %v4319 = vunpack.c.l.b16 %v3764
      %v4320 = vunpack.c.h.b16 %v3764
      %v4321 = vunpack.c.l.b16 %v3765
      %v4322 = vunpack.c.h.b16 %v3765
      %v4323 = vunpack.c.l.b16 %v3766
      %v4324 = vunpack.c.h.b16 %v3766
      %v4325 = vunpack.c.l.b16 %v3767
      %v4326 = vunpack.c.l.b16 %v3768
      %v4327 = vunpack.c.h.b16 %v3768
      %v4328 = vunpack.c.l.b16 %v3769
      %v4329 = vunpack.c.h.b16 %v3769
      %v4330 = vunpack.c.l.b16 %v3770
      %v4331 = vunpack.c.h.b16 %v3770
      %v4332 = vunpack.c.l.b16 %v3771
      %v4333 = vunpack.c.l.b16 %v3772
      %v4334 = vunpack.c.h.b16 %v3772
      %v4335 = vunpack.c.l.b16 %v3773
      %v4336 = vunpack.c.h.b16 %v3773
      %v4337 = vunpack.c.l.b16 %v3774
      %v4338 = vunpack.c.h.b16 %v3774
      %v4339 = vunpack.c.l.b16 %v3775
      %v4340 = vunpack.c.l.b16 %v3776
      %v4341 = vunpack.c.h.b16 %v3776
      %v4342 = vunpack.c.l.b16 %v3777
      %v4343 = vunpack.c.h.b16 %v3777
      %v4344 = vunpack.c.l.b16 %v3778
      %v4345 = vunpack.c.h.b16 %v3778
      %v4346 = vunpack.c.l.b16 %v3779
      %v4347 = vunpack.c.l.b16 %v3780
      %v4348 = vunpack.c.h.b16 %v3780
      %v4349 = vunpack.c.l.b16 %v3781
      %v4350 = vunpack.c.h.b16 %v3781
      %v4351 = vunpack.c.l.b16 %v3782
      %v4352 = vunpack.c.h.b16 %v3782
      %v4353 = vunpack.c.l.b16 %v3783
      %v4354 = vunpack.c.l.b16 %v3784
      %v4355 = vunpack.c.h.b16 %v3784
      %v4356 = vunpack.c.l.b16 %v3785
      %v4357 = vunpack.c.h.b16 %v3785
      %v4358 = vunpack.c.l.b16 %v3786
      %v4359 = vunpack.c.h.b16 %v3786
      %v4360 = vunpack.c.l.b16 %v3787
      %v4361 = vunpack.c.l.b16 %v3788
      %v4362 = vunpack.c.h.b16 %v3788
      %v4363 = vunpack.c.l.b16 %v3789
      %v4364 = vunpack.c.h.b16 %v3789
      %v4365 = vunpack.c.l.b16 %v3790
      %v4366 = vunpack.c.h.b16 %v3790
      %v4367 = vunpack.c.l.b16 %v3791
      %v4368 = vunpack.c.l.b16 %v3792
      %v4369 = vunpack.c.h.b16 %v3792
      %v4370 = vunpack.c.l.b16 %v3793
      %v4371 = vunpack.c.h.b16 %v3793
      %v4372 = vunpack.c.l.b16 %v3794
      %v4373 = vunpack.c.h.b16 %v3794
      %v4374 = vunpack.c.l.b16 %v3795
      %v4375 = vunpack.c.l.b16 %v3796
      %v4376 = vunpack.c.h.b16 %v3796
      %v4377 = vunpack.c.l.b16 %v3797
      %v4378 = vunpack.c.h.b16 %v3797
      %v4379 = vunpack.c.l.b16 %v3798
      %v4380 = vunpack.c.h.b16 %v3798
      %v4381 = vunpack.c.l.b16 %v3799
      %v4382 = vunpack.c.l.b16 %v3800
      %v4383 = vunpack.c.h.b16 %v3800
      %v4384 = vunpack.c.l.b16 %v3801
      %v4385 = vunpack.c.h.b16 %v3801
      %v4386 = vunpack.c.l.b16 %v3802
      %v4387 = vunpack.c.h.b16 %v3802
      %v4388 = vunpack.c.l.b16 %v3803
      %v4389 = vunpack.c.l.b16 %v3804
      %v4390 = vunpack.c.h.b16 %v3804
      %v4391 = vunpack.c.l.b16 %v3805
      %v4392 = vunpack.c.h.b16 %v3805
      %v4393 = vunpack.c.l.b16 %v3806
      %v4394 = vunpack.c.h.b16 %v3806
      %v4395 = vunpack.c.l.b16 %v3807
      %v4396 = vunpack.c.l.b16 %v3808
      %v4397 = vunpack.c.h.b16 %v3808
      %v4398 = vunpack.c.l.b16 %v3809
      %v4399 = vunpack.c.h.b16 %v3809
      %v4400 = vunpack.c.l.b16 %v3810
      %v4401 = vunpack.c.h.b16 %v3810
      %v4402 = vunpack.c.l.b16 %v3811
      %v4403 = vunpack.c.l.b16 %v3812
      %v4404 = vunpack.c.h.b16 %v3812
      %v4405 = vunpack.c.l.b16 %v3813
      %v4406 = vunpack.c.h.b16 %v3813
      %v4407 = vunpack.c.l.b16 %v3814
      %v4408 = vunpack.c.h.b16 %v3814
      %v4409 = vunpack.c.l.b16 %v3815
      %v4410 = vunpack.c.l.b16 %v3816
      %v4411 = vunpack.c.h.b16 %v3816
      %v4412 = vunpack.c.l.b16 %v3817
      %v4413 = vunpack.c.h.b16 %v3817
      %v4414 = vunpack.c.l.b16 %v3818
      %v4415 = vunpack.c.h.b16 %v3818
      %v4416 = vunpack.c.l.b16 %v3819
      %v4417 = vunpack.c.l.b16 %v3820
      %v4418 = vunpack.c.h.b16 %v3820
      %v4419 = vunpack.c.l.b16 %v3821
      %v4420 = vunpack.c.h.b16 %v3821
      %v4421 = vunpack.c.l.b16 %v3822
      %v4422 = vunpack.c.h.b16 %v3822
      %v4423 = vunpack.c.l.b16 %v3823
      %v4424 = vunpack.c.l.b16 %v3824
      %v4425 = vunpack.c.h.b16 %v3824
      %v4426 = vunpack.c.l.b16 %v3825
      %v4427 = vunpack.c.h.b16 %v3825
      %v4428 = vunpack.c.l.b16 %v3826
      %v4429 = vunpack.c.h.b16 %v3826
      %v4430 = vunpack.c.l.b16 %v3827
      %v4431 = vunpack.c.l.b16 %v3828
      %v4432 = vunpack.c.h.b16 %v3828
      %v4433 = vunpack.c.l.b16 %v3829
      %v4434 = vunpack.c.h.b16 %v3829
      %v4435 = vunpack.c.l.b16 %v3830
      %v4436 = vunpack.c.h.b16 %v3830
      %v4437 = vunpack.c.l.b16 %v3831
      %v4438 = vunpack.c.l.b16 %v3832
      %v4439 = vunpack.c.h.b16 %v3832
      %v4440 = vunpack.c.l.b16 %v3833
      %v4441 = vunpack.c.h.b16 %v3833
      %v4442 = vunpack.c.l.b16 %v3834
      %v4443 = vunpack.c.h.b16 %v3834
      %v4444 = vunpack.c.l.b16 %v3835
      %v4445 = vunpack.c.l.b16 %v3836
      %v4446 = vunpack.c.h.b16 %v3836
      %v4447 = vunpack.c.l.b16 %v3837
      %v4448 = vunpack.c.h.b16 %v3837
      %v4449 = vunpack.c.l.b16 %v3838
      %v4450 = vunpack.c.h.b16 %v3838
      %v4451 = vunpack.c.l.b16 %v3839
      %v4452 = vunpack.c.l.b16 %v3840
      %v4453 = vunpack.c.h.b16 %v3840
      %v4454 = vunpack.c.l.b16 %v3841
      %v4455 = vunpack.c.h.b16 %v3841
      %v4456 = vunpack.c.l.b16 %v3842
      %v4457 = vunpack.c.h.b16 %v3842
      %v4458 = vunpack.c.l.b16 %v3843
      %v4459 = vunpack.c.l.b16 %v3844
      %v4460 = vunpack.c.h.b16 %v3844
      %v4461 = vunpack.c.l.b16 %v3845
      %v4462 = vunpack.c.h.b16 %v3845
      %v4463 = vunpack.c.l.b16 %v3846
      %v4464 = vunpack.c.h.b16 %v3846
      %v4465 = vunpack.c.l.b16 %v3847
      %v4466 = vunpack.c.l.b16 %v3848
      %v4467 = vunpack.c.h.b16 %v3848
      %v4468 = vunpack.c.l.b16 %v3849
      %v4469 = vunpack.c.h.b16 %v3849
      %v4470 = vunpack.c.l.b16 %v3850
      %v4471 = vunpack.c.h.b16 %v3850
      %v4472 = vunpack.c.l.b16 %v3851
      %v4473 = vunpack.c.l.b16 %v3852
      %v4474 = vunpack.c.h.b16 %v3852
      %v4475 = vunpack.c.l.b16 %v3853
      %v4476 = vunpack.c.h.b16 %v3853
      %v4477 = vunpack.c.l.b16 %v3854
      %v4478 = vunpack.c.h.b16 %v3854
      %v4479 = vunpack.c.l.b16 %v3855
      %v4480 = vunpack.c.l.b16 %v3856
      %v4481 = vunpack.c.h.b16 %v3856
      %v4482 = vunpack.c.l.b16 %v3857
      %v4483 = vunpack.c.h.b16 %v3857
      %v4484 = vunpack.c.l.b16 %v3858
      %v4485 = vunpack.c.h.b16 %v3858
      %v4486 = vunpack.c.l.b16 %v3859
      %v4487 = vunpack.c.l.b16 %v3860
      %v4488 = vunpack.c.h.b16 %v3860
      %v4489 = vunpack.c.l.b16 %v3861
      %v4490 = vunpack.c.h.b16 %v3861
      %v4491 = vunpack.c.l.b16 %v3862
      %v4492 = vunpack.c.h.b16 %v3862
      %v4493 = vunpack.c.l.b16 %v3863
      %v4494 = vunpack.c.l.b16 %v3864
      %v4495 = vunpack.c.h.b16 %v3864
      %v4496 = vunpack.c.l.b16 %v3865
      %v4497 = vunpack.c.h.b16 %v3865
      %v4498 = vunpack.c.l.b16 %v3866
      %v4499 = vunpack.c.h.b16 %v3866
      %v4500 = vunpack.c.l.b16 %v3867
      %v4501 = vunpack.c.l.b16 %v3868
      %v4502 = vunpack.c.h.b16 %v3868
      %v4503 = vunpack.c.l.b16 %v3869
      %v4504 = vunpack.c.h.b16 %v3869
      %v4505 = vunpack.c.l.b16 %v3870
      %v4506 = vunpack.c.h.b16 %v3870
      %v4507 = vunpack.c.l.b16 %v3871
      %v4508 = vunpack.c.l.b16 %v3872
      %v4509 = vunpack.c.h.b16 %v3872
      %v4510 = vunpack.c.l.b16 %v3873
      %v4511 = vunpack.c.h.b16 %v3873
      %v4512 = vunpack.c.l.b16 %v3874
      %v4513 = vunpack.c.h.b16 %v3874
      %v4514 = vunpack.c.l.b16 %v3875
      %v4515 = vunpack.c.l.b16 %v3876
      %v4516 = vunpack.c.h.b16 %v3876
      %v4517 = vunpack.c.l.b16 %v3877
      %v4518 = vunpack.c.h.b16 %v3877
      %v4519 = vunpack.c.l.b16 %v3878
      %v4520 = vunpack.c.h.b16 %v3878
      %v4521 = vunpack.c.l.b16 %v3879
      %v4522 = vunpack.c.l.b16 %v3880
      %v4523 = vunpack.c.h.b16 %v3880
      %v4524 = vunpack.c.l.b16 %v3881
      %v4525 = vunpack.c.h.b16 %v3881
      %v4526 = vunpack.c.l.b16 %v3882
      %v4527 = vunpack.c.h.b16 %v3882
      %v4528 = vunpack.c.l.b16 %v3883
      %v4529 = vunpack.c.l.b16 %v3884
      %v4530 = vunpack.c.h.b16 %v3884
      %v4531 = vunpack.c.l.b16 %v3885
      %v4532 = vunpack.c.h.b16 %v3885
      %v4533 = vunpack.c.l.b16 %v3886
      %v4534 = vunpack.c.h.b16 %v3886
      %v4535 = vunpack.c.l.b16 %v3887
      %v4536 = vunpack.c.l.b16 %v3888
      %v4537 = vunpack.c.h.b16 %v3888
      %v4538 = vunpack.c.l.b16 %v3889
      %v4539 = vunpack.c.h.b16 %v3889
      %v4540 = vunpack.c.l.b16 %v3890
      %v4541 = vunpack.c.h.b16 %v3890
      %v4542 = vunpack.c.l.b16 %v3891
      %v4543 = vunpack.c.l.b16 %v3892
      %v4544 = vunpack.c.h.b16 %v3892
      %v4545 = vunpack.c.l.b16 %v3893
      %v4546 = vunpack.c.h.b16 %v3893
      %v4547 = vunpack.c.l.b16 %v3894
      %v4548 = vunpack.c.h.b16 %v3894
      %v4549 = vunpack.c.l.b16 %v3895
      %v4550 = vunpack.c.l.b16 %v3896
      %v4551 = vunpack.c.h.b16 %v3896
      %v4552 = vunpack.c.l.b16 %v3897
      %v4553 = vunpack.c.h.b16 %v3897
      %v4554 = vunpack.c.l.b16 %v3898
      %v4555 = vunpack.c.h.b16 %v3898
      %v4556 = vunpack.c.l.b16 %v3899
      %v4557 = vunpack.c.l.b16 %v3900
      %v4558 = vunpack.c.h.b16 %v3900
      %v4559 = vunpack.c.l.b16 %v3901
      %v4560 = vunpack.c.h.b16 %v3901
      %v4561 = vunpack.c.l.b16 %v3902
      %v4562 = vunpack.c.h.b16 %v3902
      %v4563 = vunpack.c.l.b16 %v3903
      %v4564 = vunpack.c.l.b16 %v3904
      %v4565 = vunpack.c.h.b16 %v3904
      %v4566 = vunpack.c.l.b16 %v3905
      %v4567 = vunpack.c.h.b16 %v3905
      %v4568 = vunpack.c.l.b16 %v3906
      %v4569 = vunpack.c.h.b16 %v3906
      %v4570 = vunpack.c.l.b16 %v3907
      %v4571 = vunpack.c.l.b16 %v3908
      %v4572 = vunpack.c.h.b16 %v3908
      %v4573 = vunpack.c.l.b16 %v3909
      %v4574 = vunpack.c.h.b16 %v3909
      %v4575 = vunpack.c.l.b16 %v3910
      %v4576 = vunpack.c.h.b16 %v3910
      %v4577 = vunpack.c.l.b16 %v3911
      %v4578 = vunpack.c.l.b16 %v3912
      %v4579 = vunpack.c.h.b16 %v3912
      %v4580 = vunpack.c.l.b16 %v3913
      %v4581 = vunpack.c.h.b16 %v3913
      %v4582 = vunpack.c.l.b16 %v3914
      %v4583 = vunpack.c.h.b16 %v3914
      %v4584 = vunpack.c.l.b16 %v3915
      %v4585 = vunpack.c.l.b16 %v3916
      %v4586 = vunpack.c.h.b16 %v3916
      %v4587 = vunpack.c.l.b16 %v3917
      %v4588 = vunpack.c.h.b16 %v3917
      %v4589 = vunpack.c.l.b16 %v3918
      %v4590 = vunpack.c.h.b16 %v3918
      %v4591 = vunpack.c.l.b16 %v3919
      %v4592 = vunpack.c.l.b16 %v3920
      %v4593 = vunpack.c.h.b16 %v3920
      %v4594 = vunpack.c.l.b16 %v3921
      %v4595 = vunpack.c.h.b16 %v3921
      %v4596 = vunpack.c.l.b16 %v3922
      %v4597 = vunpack.c.h.b16 %v3922
      %v4598 = vunpack.c.l.b16 %v3923
      %v4599 = vunpack.c.l.b16 %v3924
      %v4600 = vunpack.c.h.b16 %v3924
      %v4601 = vunpack.c.l.b16 %v3925
      %v4602 = vunpack.c.h.b16 %v3925
      %v4603 = vunpack.c.l.b16 %v3926
      %v4604 = vunpack.c.h.b16 %v3926
      %v4605 = vunpack.c.l.b16 %v3927
      %v4606 = vunpack.c.l.b16 %v3928
      %v4607 = vunpack.c.h.b16 %v3928
      %v4608 = vunpack.c.l.b16 %v3929
      %v4609 = vunpack.c.h.b16 %v3929
      %v4610 = vunpack.c.l.b16 %v3930
      %v4611 = vunpack.c.h.b16 %v3930
      %v4612 = vunpack.c.l.b16 %v3931
      %v4613 = vunpack.c.l.b16 %v3932
      %v4614 = vunpack.c.h.b16 %v3932
      %v4615 = vunpack.c.l.b16 %v3933
      %v4616 = vunpack.c.h.b16 %v3933
      %v4617 = vunpack.c.l.b16 %v3934
      %v4618 = vunpack.c.h.b16 %v3934
      %v4619 = vunpack.c.l.b16 %v3935
      %v4620 = vunpack.c.l.b16 %v3936
      %v4621 = vunpack.c.h.b16 %v3936
      %v4622 = vunpack.c.l.b16 %v3937
      %v4623 = vunpack.c.h.b16 %v3937
      %v4624 = vunpack.c.l.b16 %v3938
      %v4625 = vunpack.c.h.b16 %v3938
      %v4626 = vunpack.c.l.b16 %v3939
      %v4627 = vunpack.c.l.b16 %v3940
      %v4628 = vunpack.c.h.b16 %v3940
      %v4629 = vunpack.c.l.b16 %v3941
      %v4630 = vunpack.c.h.b16 %v3941
      %v4631 = vunpack.c.l.b16 %v3942
      %v4632 = vunpack.c.h.b16 %v3942
      %v4633 = vunpack.c.l.b16 %v3943
      %v4634 = vunpack.c.l.b16 %v3944
      %v4635 = vunpack.c.h.b16 %v3944
      %v4636 = vunpack.c.l.b16 %v3945
      %v4637 = vunpack.c.h.b16 %v3945
      %v4638 = vunpack.c.l.b16 %v3946
      %v4639 = vunpack.c.h.b16 %v3946
      %v4640 = vunpack.c.l.b16 %v3947
      %v4641 = vunpack.c.l.b16 %v3948
      %v4642 = vunpack.c.h.b16 %v3948
      %v4643 = vunpack.c.l.b16 %v3949
      %v4644 = vunpack.c.h.b16 %v3949
      %v4645 = vunpack.c.l.b16 %v3950
      %v4646 = vunpack.c.h.b16 %v3950
      %v4647 = vunpack.c.l.b16 %v3951
      %v4648 = vunpack.c.l.b16 %v3952
      %v4649 = vunpack.c.h.b16 %v3952
      %v4650 = vunpack.c.l.b16 %v3953
      %v4651 = vunpack.c.h.b16 %v3953
      %v4652 = vunpack.c.l.b16 %v3954
      %v4653 = vunpack.c.h.b16 %v3954
      %v4654 = vunpack.c.l.b16 %v3955
      %v4655 = vunpack.c.l.b16 %v3956
      %v4656 = vunpack.c.h.b16 %v3956
      %v4657 = vunpack.c.l.b16 %v3957
      %v4658 = vunpack.c.h.b16 %v3957
      %v4659 = vunpack.c.l.b16 %v3958
      %v4660 = vunpack.c.h.b16 %v3958
      %v4661 = vunpack.c.l.b16 %v3959
      %v4662 = vunpack.c.l.b16 %v3960
      %v4663 = vunpack.c.h.b16 %v3960
      %v4664 = vunpack.c.l.b16 %v3961
      %v4665 = vunpack.c.h.b16 %v3961
      %v4666 = vunpack.c.l.b16 %v3962
      %v4667 = vunpack.c.h.b16 %v3962
      %v4668 = vunpack.c.l.b16 %v3963
      %v4669 = vunpack.c.l.b16 %v3964
      %v4670 = vunpack.c.h.b16 %v3964
      %v4671 = vunpack.c.l.b16 %v3965
      %v4672 = vunpack.c.h.b16 %v3965
      %v4673 = vunpack.c.l.b16 %v3966
      %v4674 = vunpack.c.h.b16 %v3966
      %v4675 = vunpack.c.l.b16 %v3967
      %v4676 = vunpack.c.l.b16 %v3968
      %v4677 = vunpack.c.h.b16 %v3968
      %v4678 = vunpack.c.l.b16 %v3969
      %v4679 = vunpack.c.h.b16 %v3969
      %v4680 = vunpack.c.l.b16 %v3970
      %v4681 = vunpack.c.h.b16 %v3970
      %v4682 = vunpack.c.l.b16 %v3971
      %v4683 = vunpack.c.l.b16 %v3972
      %v4684 = vunpack.c.h.b16 %v3972
      %v4685 = vunpack.c.l.b16 %v3973
      %v4686 = vunpack.c.h.b16 %v3973
      %v4687 = vunpack.c.l.b16 %v3974
      %v4688 = vunpack.c.h.b16 %v3974
      %v4689 = vunpack.c.l.b16 %v3975
      %v4690 = vunpack.c.l.b16 %v3976
      %v4691 = vunpack.c.h.b16 %v3976
      %v4692 = vunpack.c.l.b16 %v3977
      %v4693 = vunpack.c.h.b16 %v3977
      %v4694 = vunpack.c.l.b16 %v3978
      %v4695 = vunpack.c.h.b16 %v3978
      %v4696 = vunpack.c.l.b16 %v3979
      %v4697 = vunpack.c.l.b16 %v3980
      %v4698 = vunpack.c.h.b16 %v3980
      %v4699 = vunpack.c.l.b16 %v3981
      %v4700 = vunpack.c.h.b16 %v3981
      %v4701 = vunpack.c.l.b16 %v3982
      %v4702 = vunpack.c.h.b16 %v3982
      %v4703 = vunpack.c.l.b16 %v3983
      %v4704 = vunpack.c.l.b16 %v3984
      %v4705 = vunpack.c.h.b16 %v3984
      %v4706 = vunpack.c.l.b16 %v3985
      %v4707 = vunpack.c.h.b16 %v3985
      %v4708 = vunpack.c.l.b16 %v3986
      %v4709 = vunpack.c.h.b16 %v3986
      %v4710 = vunpack.c.l.b16 %v3987
      %v4711 = vunpack.c.l.b16 %v3988
      %v4712 = vunpack.c.h.b16 %v3988
      %v4713 = vunpack.c.l.b16 %v3989
      %v4714 = vunpack.c.h.b16 %v3989
      %v4715 = vunpack.c.l.b16 %v3990
      %v4716 = vunpack.c.h.b16 %v3990
      %v4717 = vunpack.c.l.b16 %v3991
      %v4718 = vunpack.c.l.b16 %v3992
      %v4719 = vunpack.c.h.b16 %v3992
      %v4720 = vunpack.c.l.b16 %v3993
      %v4721 = vunpack.c.h.b16 %v3993
      %v4722 = vunpack.c.l.b16 %v3994
      %v4723 = vunpack.c.h.b16 %v3994
      %v4724 = vunpack.c.l.b16 %v3995
      %v4725 = vunpack.c.l.b16 %v3996
      %v4726 = vunpack.c.h.b16 %v3996
      %v4727 = vunpack.c.l.b16 %v3997
      %v4728 = vunpack.c.h.b16 %v3997
      %v4729 = vunpack.c.l.b16 %v3998
      %v4730 = vunpack.c.h.b16 %v3998
      %v4731 = vunpack.c.l.b16 %v3999
      %v4732 = vunpack.c.l.b16 %v4000
      %v4733 = vunpack.c.h.b16 %v4000
      %v4734 = vunpack.c.l.b16 %v4001
      %v4735 = vunpack.c.h.b16 %v4001
      %v4736 = vunpack.c.l.b16 %v4002
      %v4737 = vunpack.c.h.b16 %v4002
      %v4738 = vunpack.c.l.b16 %v4003
      %v4739 = vunpack.c.l.b16 %v4004
      %v4740 = vunpack.c.h.b16 %v4004
      %v4741 = vunpack.c.l.b16 %v4005
      %v4742 = vunpack.c.h.b16 %v4005
      %v4743 = vunpack.c.l.b16 %v4006
      %v4744 = vunpack.c.h.b16 %v4006
      %v4745 = vunpack.c.l.b16 %v4007
      %v4746 = vunpack.c.l.b16 %v4008
      %v4747 = vunpack.c.h.b16 %v4008
      %v4748 = vunpack.c.l.b16 %v4009
      %v4749 = vunpack.c.h.b16 %v4009
      %v4750 = vunpack.c.l.b16 %v4010
      %v4751 = vunpack.c.h.b16 %v4010
      %v4752 = vunpack.c.l.b16 %v4011
      %v4753 = vpack.c.b16 %v4312, %v4305
      %v4754 = vpack.c.b16 %v4313, %v4306
      %v4755 = vpack.c.b16 %v4314, %v4307
      %v4756 = vpack.c.b16 %v4315, %v4308
      %v4757 = vpack.c.b16 %v4316, %v4309
      %v4758 = vpack.c.b16 %v4317, %v4310
      %v4759 = vpack.c.b16 %v4318, %v4311
      %v4760 = vpack.c.b16 %v4326, %v4319
      %v4761 = vpack.c.b16 %v4327, %v4320
      %v4762 = vpack.c.b16 %v4328, %v4321
      %v4763 = vpack.c.b16 %v4329, %v4322
      %v4764 = vpack.c.b16 %v4330, %v4323
      %v4765 = vpack.c.b16 %v4331, %v4324
      %v4766 = vpack.c.b16 %v4332, %v4325
      %v4767 = vpack.c.b16 %v4340, %v4333
      %v4768 = vpack.c.b16 %v4341, %v4334
      %v4769 = vpack.c.b16 %v4342, %v4335
      %v4770 = vpack.c.b16 %v4343, %v4336
      %v4771 = vpack.c.b16 %v4344, %v4337
      %v4772 = vpack.c.b16 %v4345, %v4338
      %v4773 = vpack.c.b16 %v4346, %v4339
      %v4774 = vpack.c.b16 %v4354, %v4347
      %v4775 = vpack.c.b16 %v4355, %v4348
      %v4776 = vpack.c.b16 %v4356, %v4349
      %v4777 = vpack.c.b16 %v4357, %v4350
      %v4778 = vpack.c.b16 %v4358, %v4351
      %v4779 = vpack.c.b16 %v4359, %v4352
      %v4780 = vpack.c.b16 %v4360, %v4353
      %v4781 = vpack.c.b16 %v4368, %v4361
      %v4782 = vpack.c.b16 %v4369, %v4362
      %v4783 = vpack.c.b16 %v4370, %v4363
      %v4784 = vpack.c.b16 %v4371, %v4364
      %v4785 = vpack.c.b16 %v4372, %v4365
      %v4786 = vpack.c.b16 %v4373, %v4366
      %v4787 = vpack.c.b16 %v4374, %v4367
      %v4788 = vpack.c.b16 %v4382, %v4375
      %v4789 = vpack.c.b16 %v4383, %v4376
      %v4790 = vpack.c.b16 %v4384, %v4377
      %v4791 = vpack.c.b16 %v4385, %v4378
      %v4792 = vpack.c.b16 %v4386, %v4379
      %v4793 = vpack.c.b16 %v4387, %v4380
      %v4794 = vpack.c.b16 %v4388, %v4381
      %v4795 = vpack.c.b16 %v4396, %v4389
      %v4796 = vpack.c.b16 %v4397, %v4390
      %v4797 = vpack.c.b16 %v4398, %v4391
      %v4798 = vpack.c.b16 %v4399, %v4392
      %v4799 = vpack.c.b16 %v4400, %v4393
      %v4800 = vpack.c.b16 %v4401, %v4394
      %v4801 = vpack.c.b16 %v4402, %v4395
      %v4802 = vpack.c.b16 %v4410, %v4403
      %v4803 = vpack.c.b16 %v4411, %v4404
      %v4804 = vpack.c.b16 %v4412, %v4405
      %v4805 = vpack.c.b16 %v4413, %v4406
      %v4806 = vpack.c.b16 %v4414, %v4407
      %v4807 = vpack.c.b16 %v4415, %v4408
      %v4808 = vpack.c.b16 %v4416, %v4409
      %v4809 = vpack.c.b16 %v4424, %v4417
      %v4810 = vpack.c.b16 %v4425, %v4418
      %v4811 = vpack.c.b16 %v4426, %v4419
      %v4812 = vpack.c.b16 %v4427, %v4420
      %v4813 = vpack.c.b16 %v4428, %v4421
      %v4814 = vpack.c.b16 %v4429, %v4422
      %v4815 = vpack.c.b16 %v4430, %v4423
      %v4816 = vpack.c.b16 %v4438, %v4431
      %v4817 = vpack.c.b16 %v4439, %v4432
      %v4818 = vpack.c.b16 %v4440, %v4433
      %v4819 = vpack.c.b16 %v4441, %v4434
      %v4820 = vpack.c.b16 %v4442, %v4435
      %v4821 = vpack.c.b16 %v4443, %v4436
      %v4822 = vpack.c.b16 %v4444, %v4437
      %v4823 = vpack.c.b16 %v4452, %v4445
      %v4824 = vpack.c.b16 %v4453, %v4446
      %v4825 = vpack.c.b16 %v4454, %v4447
      %v4826 = vpack.c.b16 %v4455, %v4448
      %v4827 = vpack.c.b16 %v4456, %v4449
      %v4828 = vpack.c.b16 %v4457, %v4450
      %v4829 = vpack.c.b16 %v4458, %v4451
      %v4830 = vpack.c.b16 %v4466, %v4459
      %v4831 = vpack.c.b16 %v4467, %v4460
      %v4832 = vpack.c.b16 %v4468, %v4461
      %v4833 = vpack.c.b16 %v4469, %v4462
      %v4834 = vpack.c.b16 %v4470, %v4463
      %v4835 = vpack.c.b16 %v4471, %v4464
      %v4836 = vpack.c.b16 %v4472, %v4465
      %v4837 = vpack.c.b16 %v4480, %v4473
      %v4838 = vpack.c.b16 %v4481, %v4474
      %v4839 = vpack.c.b16 %v4482, %v4475
      %v4840 = vpack.c.b16 %v4483, %v4476
      %v4841 = vpack.c.b16 %v4484, %v4477
      %v4842 = vpack.c.b16 %v4485, %v4478
      %v4843 = vpack.c.b16 %v4486, %v4479
      %v4844 = vpack.c.b16 %v4494, %v4487
      %v4845 = vpack.c.b16 %v4495, %v4488
      %v4846 = vpack.c.b16 %v4496, %v4489
      %v4847 = vpack.c.b16 %v4497, %v4490
      %v4848 = vpack.c.b16 %v4498, %v4491
      %v4849 = vpack.c.b16 %v4499, %v4492
      %v4850 = vpack.c.b16 %v4500, %v4493
      %v4851 = vpack.c.b16 %v4508, %v4501
      %v4852 = vpack.c.b16 %v4509, %v4502
      %v4853 = vpack.c.b16 %v4510, %v4503
      %v4854 = vpack.c.b16 %v4511, %v4504
      %v4855 = vpack.c.b16 %v4512, %v4505
      %v4856 = vpack.c.b16 %v4513, %v4506
      %v4857 = vpack.c.b16 %v4514, %v4507
      %v4858 = vpack.c.b16 %v4522, %v4515
      %v4859 = vpack.c.b16 %v4523, %v4516
      %v4860 = vpack.c.b16 %v4524, %v4517
      %v4861 = vpack.c.b16 %v4525, %v4518
      %v4862 = vpack.c.b16 %v4526, %v4519
      %v4863 = vpack.c.b16 %v4527, %v4520
      %v4864 = vpack.c.b16 %v4528, %v4521
      %v4865 = vpack.c.b16 %v4536, %v4529
      %v4866 = vpack.c.b16 %v4537, %v4530
      %v4867 = vpack.c.b16 %v4538, %v4531
      %v4868 = vpack.c.b16 %v4539, %v4532
      %v4869 = vpack.c.b16 %v4540, %v4533
      %v4870 = vpack.c.b16 %v4541, %v4534
      %v4871 = vpack.c.b16 %v4542, %v4535
      %v4872 = vpack.c.b16 %v4550, %v4543
      %v4873 = vpack.c.b16 %v4551, %v4544
      %v4874 = vpack.c.b16 %v4552, %v4545
      %v4875 = vpack.c.b16 %v4553, %v4546
      %v4876 = vpack.c.b16 %v4554, %v4547
      %v4877 = vpack.c.b16 %v4555, %v4548
      %v4878 = vpack.c.b16 %v4556, %v4549
      %v4879 = vpack.c.b16 %v4564, %v4557
      %v4880 = vpack.c.b16 %v4565, %v4558
      %v4881 = vpack.c.b16 %v4566, %v4559
      %v4882 = vpack.c.b16 %v4567, %v4560
      %v4883 = vpack.c.b16 %v4568, %v4561
      %v4884 = vpack.c.b16 %v4569, %v4562
      %v4885 = vpack.c.b16 %v4570, %v4563
      %v4886 = vpack.c.b16 %v4578, %v4571
      %v4887 = vpack.c.b16 %v4579, %v4572
      %v4888 = vpack.c.b16 %v4580, %v4573
      %v4889 = vpack.c.b16 %v4581, %v4574
      %v4890 = vpack.c.b16 %v4582, %v4575
      %v4891 = vpack.c.b16 %v4583, %v4576
      %v4892 = vpack.c.b16 %v4584, %v4577
      %v4893 = vpack.c.b16 %v4592, %v4585
      %v4894 = vpack.c.b16 %v4593, %v4586
      %v4895 = vpack.c.b16 %v4594, %v4587
      %v4896 = vpack.c.b16 %v4595, %v4588
      %v4897 = vpack.c.b16 %v4596, %v4589
      %v4898 = vpack.c.b16 %v4597, %v4590
      %v4899 = vpack.c.b16 %v4598, %v4591
      %v4900 = vpack.c.b16 %v4606, %v4599
      %v4901 = vpack.c.b16 %v4607, %v4600
      %v4902 = vpack.c.b16 %v4608, %v4601
      %v4903 = vpack.c.b16 %v4609, %v4602
      %v4904 = vpack.c.b16 %v4610, %v4603
      %v4905 = vpack.c.b16 %v4611, %v4604
      %v4906 = vpack.c.b16 %v4612, %v4605
      %v4907 = vpack.c.b16 %v4620, %v4613
      %v4908 = vpack.c.b16 %v4621, %v4614
      %v4909 = vpack.c.b16 %v4622, %v4615
      %v4910 = vpack.c.b16 %v4623, %v4616
      %v4911 = vpack.c.b16 %v4624, %v4617
      %v4912 = vpack.c.b16 %v4625, %v4618
      %v4913 = vpack.c.b16 %v4626, %v4619
      %v4914 = vpack.c.b16 %v4634, %v4627
      %v4915 = vpack.c.b16 %v4635, %v4628
      %v4916 = vpack.c.b16 %v4636, %v4629
      %v4917 = vpack.c.b16 %v4637, %v4630
      %v4918 = vpack.c.b16 %v4638, %v4631
      %v4919 = vpack.c.b16 %v4639, %v4632
      %v4920 = vpack.c.b16 %v4640, %v4633
      %v4921 = vpack.c.b16 %v4648, %v4641
      %v4922 = vpack.c.b16 %v4649, %v4642
      %v4923 = vpack.c.b16 %v4650, %v4643
      %v4924 = vpack.c.b16 %v4651, %v4644
      %v4925 = vpack.c.b16 %v4652, %v4645
      %v4926 = vpack.c.b16 %v4653, %v4646
      %v4927 = vpack.c.b16 %v4654, %v4647
      %v4928 = vpack.c.b16 %v4662, %v4655
      %v4929 = vpack.c.b16 %v4663, %v4656
      %v4930 = vpack.c.b16 %v4664, %v4657
      %v4931 = vpack.c.b16 %v4665, %v4658
      %v4932 = vpack.c.b16 %v4666, %v4659
      %v4933 = vpack.c.b16 %v4667, %v4660
      %v4934 = vpack.c.b16 %v4668, %v4661
      %v4935 = vpack.c.b16 %v4676, %v4669
      %v4936 = vpack.c.b16 %v4677, %v4670
      %v4937 = vpack.c.b16 %v4678, %v4671
      %v4938 = vpack.c.b16 %v4679, %v4672
      %v4939 = vpack.c.b16 %v4680, %v4673
      %v4940 = vpack.c.b16 %v4681, %v4674
      %v4941 = vpack.c.b16 %v4682, %v4675
      %v4942 = vpack.c.b16 %v4690, %v4683
      %v4943 = vpack.c.b16 %v4691, %v4684
      %v4944 = vpack.c.b16 %v4692, %v4685
      %v4945 = vpack.c.b16 %v4693, %v4686
      %v4946 = vpack.c.b16 %v4694, %v4687
      %v4947 = vpack.c.b16 %v4695, %v4688
      %v4948 = vpack.c.b16 %v4696, %v4689
      %v4949 = vpack.c.b16 %v4704, %v4697
      %v4950 = vpack.c.b16 %v4705, %v4698
      %v4951 = vpack.c.b16 %v4706, %v4699
      %v4952 = vpack.c.b16 %v4707, %v4700
      %v4953 = vpack.c.b16 %v4708, %v4701
      %v4954 = vpack.c.b16 %v4709, %v4702
      %v4955 = vpack.c.b16 %v4710, %v4703
      %v4956 = vpack.c.b16 %v4718, %v4711
      %v4957 = vpack.c.b16 %v4719, %v4712
      %v4958 = vpack.c.b16 %v4720, %v4713
      %v4959 = vpack.c.b16 %v4721, %v4714
      %v4960 = vpack.c.b16 %v4722, %v4715
      %v4961 = vpack.c.b16 %v4723, %v4716
      %v4962 = vpack.c.b16 %v4724, %v4717
      %v4963 = vpack.c.b16 %v4732, %v4725
      %v4964 = vpack.c.b16 %v4733, %v4726
      %v4965 = vpack.c.b16 %v4734, %v4727
      %v4966 = vpack.c.b16 %v4735, %v4728
      %v4967 = vpack.c.b16 %v4736, %v4729
      %v4968 = vpack.c.b16 %v4737, %v4730
      %v4969 = vpack.c.b16 %v4738, %v4731
      %v4970 = vpack.c.b16 %v4746, %v4739
      %v4971 = vpack.c.b16 %v4747, %v4740
      %v4972 = vpack.c.b16 %v4748, %v4741
      %v4973 = vpack.c.b16 %v4749, %v4742
      %v4974 = vpack.c.b16 %v4750, %v4743
      %v4975 = vpack.c.b16 %v4751, %v4744
      %v4976 = vpack.c.b16 %v4752, %v4745
      %5201 = vmatprep.subr.bf16.mxu0 %v4803
      %5202 = vmatpush1.bf16.msra.mxu0 %v4802
      %5203 = vmatprep.subr.bf16.mxu0 %v4796
      %5204 = vmatpush1.bf16.msra.mxu0 %v4795
      %5205 = vmatprep.subr.bf16.mxu0 %v4789
      %5206 = vmatpush1.bf16.msra.mxu0 %v4788
      %5207 = vmatprep.subr.bf16.mxu0 %v4782
      %5208 = vmatpush1.bf16.msra.mxu0 %v4781
      %5209 = vmatprep.subr.bf16.mxu0 %v4775
      %5210 = vmatpush1.bf16.msra.mxu0 %v4774
      %5211 = vmatprep.subr.bf16.mxu0 %v4768
      %5212 = vmatpush1.bf16.msra.mxu0 %v4767
      %5213 = vmatprep.subr.bf16.mxu0 %v4761
      %5214 = vmatpush1.bf16.msra.mxu0 %v4760
      %5215 = vmatprep.subr.bf16.mxu0 %v4754
      %5216 = vmatpush1.bf16.msra.mxu0 %v4753
      %5217 = vmatprep.subr.bf16.mxu0 %v4859
      %5218 = vmatpush2.bf16.msra.mxu0 %v4858
      %5219 = vmatprep.subr.bf16.mxu0 %v4852
      %5220 = vmatpush2.bf16.msra.mxu0 %v4851
      %5221 = vmatprep.subr.bf16.mxu0 %v4845
      %5222 = vmatpush2.bf16.msra.mxu0 %v4844
      %5223 = vmatprep.subr.bf16.mxu0 %v4838
      %5224 = vmatpush2.bf16.msra.mxu0 %v4837
      %5225 = vmatprep.subr.bf16.mxu0 %v4831
      %5226 = vmatpush2.bf16.msra.mxu0 %v4830
      %5227 = vmatprep.subr.bf16.mxu0 %v4824
      %5228 = vmatpush2.bf16.msra.mxu0 %v4823
      %5229 = vmatprep.subr.bf16.mxu0 %v4817
      %5230 = vmatpush2.bf16.msra.mxu0 %v4816
      %5231 = vmatprep.subr.bf16.mxu0 %v4810
      %5232 = vmatpush2.bf16.msra.mxu0 %v4809
      %5233 = vmatprep.mubr.bf16.mxu0 %v3725
      %5234 = vmatmul.mubr.bf16.gmra.mxu0 %v3724
      %v5235 = vpop.f32.mrf.mxu0
      %v5236 = vadd.f32 %v4017, %v5235
      %v5237 = vpop.f32.mrf.mxu0
      %v5238 = vadd.f32 %v4021, %v5237
      %v5239 = vpop.f32.mrf.mxu0
      %v5240 = vadd.f32 %v4017, %v5239
      %v5241 = vpop.f32.mrf.mxu0
      %v5242 = vadd.f32 %v4021, %v5241
      %5243 = vmatprep.mubr.bf16.mxu0 %v3729
      %5244 = vmatmul.mubr.bf16.gmra.mxu0 %v3728
      %v5245 = vpop.f32.mrf.mxu0
      %v5246 = vadd.f32 %v4017, %v5245
      %v5247 = vpop.f32.mrf.mxu0
      %v5248 = vadd.f32 %v4021, %v5247
      %v5249 = vpop.f32.mrf.mxu0
      %v5250 = vadd.f32 %v4017, %v5249
      %v5251 = vpop.f32.mrf.mxu0
      %v5252 = vadd.f32 %v4021, %v5251
      %5253 = vmatprep.mubr.bf16.mxu0 %v3733
      %5254 = vmatmul.mubr.bf16.gmra.mxu0 %v3732
      %v5255 = vpop.f32.mrf.mxu0
      %v5256 = vadd.f32 %v4017, %v5255
      %v5257 = vpop.f32.mrf.mxu0
      %v5258 = vadd.f32 %v4021, %v5257
      %v5259 = vpop.f32.mrf.mxu0
      %v5260 = vadd.f32 %v4017, %v5259
      %v5261 = vpop.f32.mrf.mxu0
      %v5262 = vadd.f32 %v4021, %v5261
      %5263 = vmatprep.mubr.bf16.mxu0 %v3737
      %5264 = vmatmul.mubr.bf16.gmra.mxu0 %v3736
      %v5265 = vpop.f32.mrf.mxu0
      %v5266 = vadd.f32 %v4017, %v5265
      %v5267 = vpop.f32.mrf.mxu0
      %v5268 = vadd.f32 %v4021, %v5267
      %v5269 = vpop.f32.mrf.mxu0
      %v5270 = vadd.f32 %v4017, %v5269
      %v5271 = vpop.f32.mrf.mxu0
      %v5272 = vadd.f32 %v4021, %v5271
      %5273 = vmatprep.mubr.bf16.mxu0 %v3741
      %5274 = vmatmul.mubr.bf16.gmra.mxu0 %v3740
      %v5275 = vpop.f32.mrf.mxu0
      %v5276 = vadd.f32 %v4017, %v5275
      %v5277 = vpop.f32.mrf.mxu0
      %v5278 = vadd.f32 %v4021, %v5277
      %v5279 = vpop.f32.mrf.mxu0
      %v5280 = vadd.f32 %v4017, %v5279
      %v5281 = vpop.f32.mrf.mxu0
      %v5282 = vadd.f32 %v4021, %v5281
      %5283 = vmatprep.mubr.bf16.mxu0 %v3745
      %5284 = vmatmul.mubr.bf16.gmra.mxu0 %v3744
      %v5285 = vpop.f32.mrf.mxu0
      %v5286 = vadd.f32 %v4017, %v5285
      %v5287 = vpop.f32.mrf.mxu0
      %v5288 = vadd.f32 %v4021, %v5287
      %v5289 = vpop.f32.mrf.mxu0
      %v5290 = vadd.f32 %v4017, %v5289
      %v5291 = vpop.f32.mrf.mxu0
      %v5292 = vadd.f32 %v4021, %v5291
      %5293 = vmatprep.mubr.bf16.mxu0 %v3749
      %5294 = vmatmul.mubr.bf16.gmra.mxu0 %v3748
      %v5295 = vpop.f32.mrf.mxu0
      %v5296 = vadd.f32 %v4017, %v5295
      %v5297 = vpop.f32.mrf.mxu0
      %v5298 = vadd.f32 %v4021, %v5297
      %v5299 = vpop.f32.mrf.mxu0
      %v5300 = vadd.f32 %v4017, %v5299
      %v5301 = vpop.f32.mrf.mxu0
      %v5302 = vadd.f32 %v4021, %v5301
      %5303 = vmatprep.mubr.bf16.mxu0 %v3753
      %5304 = vmatmul.mubr.bf16.gmra.mxu0 %v3752
      %v5305 = vpop.f32.mrf.mxu0
      %v5306 = vadd.f32 %v4017, %v5305
      %v5307 = vpop.f32.mrf.mxu0
      %v5308 = vadd.f32 %v4021, %v5307
      %v5309 = vpop.f32.mrf.mxu0
      %v5310 = vadd.f32 %v4017, %v5309
      %v5311 = vpop.f32.mrf.mxu0
      %v5312 = vadd.f32 %v4021, %v5311
      %5313 = vdwg.mxu0
      %5314 = vmatprep.subr.bf16.mxu0 %v4915
      %5315 = vmatpush1.bf16.msra.mxu0 %v4914
      %5316 = vmatprep.subr.bf16.mxu0 %v4908
      %5317 = vmatpush1.bf16.msra.mxu0 %v4907
      %5318 = vmatprep.subr.bf16.mxu0 %v4901
      %5319 = vmatpush1.bf16.msra.mxu0 %v4900
      %5320 = vmatprep.subr.bf16.mxu0 %v4894
      %5321 = vmatpush1.bf16.msra.mxu0 %v4893
      %5322 = vmatprep.subr.bf16.mxu0 %v4887
      %5323 = vmatpush1.bf16.msra.mxu0 %v4886
      %5324 = vmatprep.subr.bf16.mxu0 %v4880
      %5325 = vmatpush1.bf16.msra.mxu0 %v4879
      %5326 = vmatprep.subr.bf16.mxu0 %v4873
      %5327 = vmatpush1.bf16.msra.mxu0 %v4872
      %5328 = vmatprep.subr.bf16.mxu0 %v4866
      %5329 = vmatpush1.bf16.msra.mxu0 %v4865
      %5330 = vmatprep.subr.bf16.mxu0 %v4971
      %5331 = vmatpush2.bf16.msra.mxu0 %v4970
      %5332 = vmatprep.subr.bf16.mxu0 %v4964
      %5333 = vmatpush2.bf16.msra.mxu0 %v4963
      %5334 = vmatprep.subr.bf16.mxu0 %v4957
      %5335 = vmatpush2.bf16.msra.mxu0 %v4956
      %5336 = vmatprep.subr.bf16.mxu0 %v4950
      %5337 = vmatpush2.bf16.msra.mxu0 %v4949
      %5338 = vmatprep.subr.bf16.mxu0 %v4943
      %5339 = vmatpush2.bf16.msra.mxu0 %v4942
      %5340 = vmatprep.subr.bf16.mxu0 %v4936
      %5341 = vmatpush2.bf16.msra.mxu0 %v4935
      %5342 = vmatprep.subr.bf16.mxu0 %v4929
      %5343 = vmatpush2.bf16.msra.mxu0 %v4928
      %5344 = vmatprep.subr.bf16.mxu0 %v4922
      %5345 = vmatpush2.bf16.msra.mxu0 %v4921
      %5346 = vmatprep.mubr.bf16.mxu0 %v3727
      %5347 = vmatmul.mubr.bf16.gmra.mxu0 %v3726
      %v5348 = vpop.f32.mrf.mxu0
      %v5349 = vadd.f32 %v5236, %v5348
      %v5350 = vpop.f32.mrf.mxu0
      %v5351 = vadd.f32 %v5238, %v5350
      %v5352 = vpop.f32.mrf.mxu0
      %v5353 = vadd.f32 %v5240, %v5352
      %v5354 = vpop.f32.mrf.mxu0
      %v5355 = vadd.f32 %v5242, %v5354
      %5356 = vmatprep.mubr.bf16.mxu0 %v3731
      %5357 = vmatmul.mubr.bf16.gmra.mxu0 %v3730
      %v5358 = vpop.f32.mrf.mxu0
      %v5359 = vadd.f32 %v5246, %v5358
      %v5360 = vpop.f32.mrf.mxu0
      %v5361 = vadd.f32 %v5248, %v5360
      %v5362 = vpop.f32.mrf.mxu0
      %v5363 = vadd.f32 %v5250, %v5362
      %v5364 = vpop.f32.mrf.mxu0
      %v5365 = vadd.f32 %v5252, %v5364
      %5366 = vmatprep.mubr.bf16.mxu0 %v3735
      %5367 = vmatmul.mubr.bf16.gmra.mxu0 %v3734
      %v5368 = vpop.f32.mrf.mxu0
      %v5369 = vadd.f32 %v5256, %v5368
      %v5370 = vpop.f32.mrf.mxu0
      %v5371 = vadd.f32 %v5258, %v5370
      %v5372 = vpop.f32.mrf.mxu0
      %v5373 = vadd.f32 %v5260, %v5372
      %v5374 = vpop.f32.mrf.mxu0
      %v5375 = vadd.f32 %v5262, %v5374
      %5376 = vmatprep.mubr.bf16.mxu0 %v3739
      %5377 = vmatmul.mubr.bf16.gmra.mxu0 %v3738
      %v5378 = vpop.f32.mrf.mxu0
      %v5379 = vadd.f32 %v5266, %v5378
      %v5380 = vpop.f32.mrf.mxu0
      %v5381 = vadd.f32 %v5268, %v5380
      %v5382 = vpop.f32.mrf.mxu0
      %v5383 = vadd.f32 %v5270, %v5382
      %v5384 = vpop.f32.mrf.mxu0
      %v5385 = vadd.f32 %v5272, %v5384
      %5386 = vmatprep.mubr.bf16.mxu0 %v3743
      %5387 = vmatmul.mubr.bf16.gmra.mxu0 %v3742
      %v5388 = vpop.f32.mrf.mxu0
      %v5389 = vadd.f32 %v5276, %v5388
      %v5390 = vpop.f32.mrf.mxu0
      %v5391 = vadd.f32 %v5278, %v5390
      %v5392 = vpop.f32.mrf.mxu0
      %v5393 = vadd.f32 %v5280, %v5392
      %v5394 = vpop.f32.mrf.mxu0
      %v5395 = vadd.f32 %v5282, %v5394
      %5396 = vmatprep.mubr.bf16.mxu0 %v3747
      %5397 = vmatmul.mubr.bf16.gmra.mxu0 %v3746
      %v5398 = vpop.f32.mrf.mxu0
      %v5399 = vadd.f32 %v5286, %v5398
      %v5400 = vpop.f32.mrf.mxu0
      %v5401 = vadd.f32 %v5288, %v5400
      %v5402 = vpop.f32.mrf.mxu0
      %v5403 = vadd.f32 %v5290, %v5402
      %v5404 = vpop.f32.mrf.mxu0
      %v5405 = vadd.f32 %v5292, %v5404
      %5406 = vmatprep.mubr.bf16.mxu0 %v3751
      %5407 = vmatmul.mubr.bf16.gmra.mxu0 %v3750
      %v5408 = vpop.f32.mrf.mxu0
      %v5409 = vadd.f32 %v5296, %v5408
      %v5410 = vpop.f32.mrf.mxu0
      %v5411 = vadd.f32 %v5298, %v5410
      %v5412 = vpop.f32.mrf.mxu0
      %v5413 = vadd.f32 %v5300, %v5412
      %v5414 = vpop.f32.mrf.mxu0
      %v5415 = vadd.f32 %v5302, %v5414
      %5416 = vmatprep.mubr.bf16.mxu0 %v3755
      %5417 = vmatmul.mubr.bf16.gmra.mxu0 %v3754
      %v5418 = vpop.f32.mrf.mxu0
      %v5419 = vadd.f32 %v5306, %v5418
      %v5420 = vpop.f32.mrf.mxu0
      %v5421 = vadd.f32 %v5308, %v5420
      %v5422 = vpop.f32.mrf.mxu0
      %v5423 = vadd.f32 %v5310, %v5422
      %v5424 = vpop.f32.mrf.mxu0
      %v5425 = vadd.f32 %v5312, %v5424
      %5426 = vdwg.mxu0
      %5427 = vmatprep.subr.bf16.mxu0 %v4805
      %5428 = vmatpush1.bf16.msra.mxu0 %v4804
      %5429 = vmatprep.subr.bf16.mxu0 %v4798
      %5430 = vmatpush1.bf16.msra.mxu0 %v4797
      %5431 = vmatprep.subr.bf16.mxu0 %v4791
      %5432 = vmatpush1.bf16.msra.mxu0 %v4790
      %5433 = vmatprep.subr.bf16.mxu0 %v4784
      %5434 = vmatpush1.bf16.msra.mxu0 %v4783
      %5435 = vmatprep.subr.bf16.mxu0 %v4777
      %5436 = vmatpush1.bf16.msra.mxu0 %v4776
      %5437 = vmatprep.subr.bf16.mxu0 %v4770
      %5438 = vmatpush1.bf16.msra.mxu0 %v4769
      %5439 = vmatprep.subr.bf16.mxu0 %v4763
      %5440 = vmatpush1.bf16.msra.mxu0 %v4762
      %5441 = vmatprep.subr.bf16.mxu0 %v4756
      %5442 = vmatpush1.bf16.msra.mxu0 %v4755
      %5443 = vmatprep.subr.bf16.mxu0 %v4861
      %5444 = vmatpush2.bf16.msra.mxu0 %v4860
      %5445 = vmatprep.subr.bf16.mxu0 %v4854
      %5446 = vmatpush2.bf16.msra.mxu0 %v4853
      %5447 = vmatprep.subr.bf16.mxu0 %v4847
      %5448 = vmatpush2.bf16.msra.mxu0 %v4846
      %5449 = vmatprep.subr.bf16.mxu0 %v4840
      %5450 = vmatpush2.bf16.msra.mxu0 %v4839
      %5451 = vmatprep.subr.bf16.mxu0 %v4833
      %5452 = vmatpush2.bf16.msra.mxu0 %v4832
      %5453 = vmatprep.subr.bf16.mxu0 %v4826
      %5454 = vmatpush2.bf16.msra.mxu0 %v4825
      %5455 = vmatprep.subr.bf16.mxu0 %v4819
      %5456 = vmatpush2.bf16.msra.mxu0 %v4818
      %5457 = vmatprep.subr.bf16.mxu0 %v4812
      %5458 = vmatpush2.bf16.msra.mxu0 %v4811
      %5459 = vmatprep.mubr.bf16.mxu0 %v3725
      %5460 = vmatmul.mubr.bf16.gmra.mxu0 %v3724
      %v5461 = vpop.f32.mrf.mxu0
      %v5462 = vadd.f32 %v4025, %v5461
      %v5463 = vpop.f32.mrf.mxu0
      %v5464 = vadd.f32 %v4029, %v5463
      %v5465 = vpop.f32.mrf.mxu0
      %v5466 = vadd.f32 %v4025, %v5465
      %v5467 = vpop.f32.mrf.mxu0
      %v5468 = vadd.f32 %v4029, %v5467
      %5469 = vmatprep.mubr.bf16.mxu0 %v3729
      %5470 = vmatmul.mubr.bf16.gmra.mxu0 %v3728
      %v5471 = vpop.f32.mrf.mxu0
      %v5472 = vadd.f32 %v4025, %v5471
      %v5473 = vpop.f32.mrf.mxu0
      %v5474 = vadd.f32 %v4029, %v5473
      %v5475 = vpop.f32.mrf.mxu0
      %v5476 = vadd.f32 %v4025, %v5475
      %v5477 = vpop.f32.mrf.mxu0
      %v5478 = vadd.f32 %v4029, %v5477
      %5479 = vmatprep.mubr.bf16.mxu0 %v3733
      %5480 = vmatmul.mubr.bf16.gmra.mxu0 %v3732
      %v5481 = vpop.f32.mrf.mxu0
      %v5482 = vadd.f32 %v4025, %v5481
      %v5483 = vpop.f32.mrf.mxu0
      %v5484 = vadd.f32 %v4029, %v5483
      %v5485 = vpop.f32.mrf.mxu0
      %v5486 = vadd.f32 %v4025, %v5485
      %v5487 = vpop.f32.mrf.mxu0
      %v5488 = vadd.f32 %v4029, %v5487
      %5489 = vmatprep.mubr.bf16.mxu0 %v3737
      %5490 = vmatmul.mubr.bf16.gmra.mxu0 %v3736
      %v5491 = vpop.f32.mrf.mxu0
      %v5492 = vadd.f32 %v4025, %v5491
      %v5493 = vpop.f32.mrf.mxu0
      %v5494 = vadd.f32 %v4029, %v5493
      %v5495 = vpop.f32.mrf.mxu0
      %v5496 = vadd.f32 %v4025, %v5495
      %v5497 = vpop.f32.mrf.mxu0
      %v5498 = vadd.f32 %v4029, %v5497
      %5499 = vmatprep.mubr.bf16.mxu0 %v3741
      %5500 = vmatmul.mubr.bf16.gmra.mxu0 %v3740
      %v5501 = vpop.f32.mrf.mxu0
      %v5502 = vadd.f32 %v4025, %v5501
      %v5503 = vpop.f32.mrf.mxu0
      %v5504 = vadd.f32 %v4029, %v5503
      %v5505 = vpop.f32.mrf.mxu0
      %v5506 = vadd.f32 %v4025, %v5505
      %v5507 = vpop.f32.mrf.mxu0
      %v5508 = vadd.f32 %v4029, %v5507
      %5509 = vmatprep.mubr.bf16.mxu0 %v3745
      %5510 = vmatmul.mubr.bf16.gmra.mxu0 %v3744
      %v5511 = vpop.f32.mrf.mxu0
      %v5512 = vadd.f32 %v4025, %v5511
      %v5513 = vpop.f32.mrf.mxu0
      %v5514 = vadd.f32 %v4029, %v5513
      %v5515 = vpop.f32.mrf.mxu0
      %v5516 = vadd.f32 %v4025, %v5515
      %v5517 = vpop.f32.mrf.mxu0
      %v5518 = vadd.f32 %v4029, %v5517
      %5519 = vmatprep.mubr.bf16.mxu0 %v3749
      %5520 = vmatmul.mubr.bf16.gmra.mxu0 %v3748
      %v5521 = vpop.f32.mrf.mxu0
      %v5522 = vadd.f32 %v4025, %v5521
      %v5523 = vpop.f32.mrf.mxu0
      %v5524 = vadd.f32 %v4029, %v5523
      %v5525 = vpop.f32.mrf.mxu0
      %v5526 = vadd.f32 %v4025, %v5525
      %v5527 = vpop.f32.mrf.mxu0
      %v5528 = vadd.f32 %v4029, %v5527
      %5529 = vmatprep.mubr.bf16.mxu0 %v3753
      %5530 = vmatmul.mubr.bf16.gmra.mxu0 %v3752
      %v5531 = vpop.f32.mrf.mxu0
      %v5532 = vadd.f32 %v4025, %v5531
      %v5533 = vpop.f32.mrf.mxu0
      %v5534 = vadd.f32 %v4029, %v5533
      %v5535 = vpop.f32.mrf.mxu0
      %v5536 = vadd.f32 %v4025, %v5535
      %v5537 = vpop.f32.mrf.mxu0
      %v5538 = vadd.f32 %v4029, %v5537
      %5539 = vdwg.mxu0
      %5540 = vmatprep.subr.bf16.mxu0 %v4917
      %5541 = vmatpush1.bf16.msra.mxu0 %v4916
      %5542 = vmatprep.subr.bf16.mxu0 %v4910
      %5543 = vmatpush1.bf16.msra.mxu0 %v4909
      %5544 = vmatprep.subr.bf16.mxu0 %v4903
      %5545 = vmatpush1.bf16.msra.mxu0 %v4902
      %5546 = vmatprep.subr.bf16.mxu0 %v4896
      %5547 = vmatpush1.bf16.msra.mxu0 %v4895
      %5548 = vmatprep.subr.bf16.mxu0 %v4889
      %5549 = vmatpush1.bf16.msra.mxu0 %v4888
      %5550 = vmatprep.subr.bf16.mxu0 %v4882
      %5551 = vmatpush1.bf16.msra.mxu0 %v4881
      %5552 = vmatprep.subr.bf16.mxu0 %v4875
      %5553 = vmatpush1.bf16.msra.mxu0 %v4874
      %5554 = vmatprep.subr.bf16.mxu0 %v4868
      %5555 = vmatpush1.bf16.msra.mxu0 %v4867
      %5556 = vmatprep.subr.bf16.mxu0 %v4973
      %5557 = vmatpush2.bf16.msra.mxu0 %v4972
      %5558 = vmatprep.subr.bf16.mxu0 %v4966
      %5559 = vmatpush2.bf16.msra.mxu0 %v4965
      %5560 = vmatprep.subr.bf16.mxu0 %v4959
      %5561 = vmatpush2.bf16.msra.mxu0 %v4958
      %5562 = vmatprep.subr.bf16.mxu0 %v4952
      %5563 = vmatpush2.bf16.msra.mxu0 %v4951
      %5564 = vmatprep.subr.bf16.mxu0 %v4945
      %5565 = vmatpush2.bf16.msra.mxu0 %v4944
      %5566 = vmatprep.subr.bf16.mxu0 %v4938
      %5567 = vmatpush2.bf16.msra.mxu0 %v4937
      %5568 = vmatprep.subr.bf16.mxu0 %v4931
      %5569 = vmatpush2.bf16.msra.mxu0 %v4930
      %5570 = vmatprep.subr.bf16.mxu0 %v4924
      %5571 = vmatpush2.bf16.msra.mxu0 %v4923
      %5572 = vmatprep.mubr.bf16.mxu0 %v3727
      %5573 = vmatmul.mubr.bf16.gmra.mxu0 %v3726
      %v5574 = vpop.f32.mrf.mxu0
      %v5575 = vadd.f32 %v5462, %v5574
      %v5576 = vpop.f32.mrf.mxu0
      %v5577 = vadd.f32 %v5464, %v5576
      %v5578 = vpop.f32.mrf.mxu0
      %v5579 = vadd.f32 %v5466, %v5578
      %v5580 = vpop.f32.mrf.mxu0
      %v5581 = vadd.f32 %v5468, %v5580
      %5582 = vmatprep.mubr.bf16.mxu0 %v3731
      %5583 = vmatmul.mubr.bf16.gmra.mxu0 %v3730
      %v5584 = vpop.f32.mrf.mxu0
      %v5585 = vadd.f32 %v5472, %v5584
      %v5586 = vpop.f32.mrf.mxu0
      %v5587 = vadd.f32 %v5474, %v5586
      %v5588 = vpop.f32.mrf.mxu0
      %v5589 = vadd.f32 %v5476, %v5588
      %v5590 = vpop.f32.mrf.mxu0
      %v5591 = vadd.f32 %v5478, %v5590
      %5592 = vmatprep.mubr.bf16.mxu0 %v3735
      %5593 = vmatmul.mubr.bf16.gmra.mxu0 %v3734
      %v5594 = vpop.f32.mrf.mxu0
      %v5595 = vadd.f32 %v5482, %v5594
      %v5596 = vpop.f32.mrf.mxu0
      %v5597 = vadd.f32 %v5484, %v5596
      %v5598 = vpop.f32.mrf.mxu0
      %v5599 = vadd.f32 %v5486, %v5598
      %v5600 = vpop.f32.mrf.mxu0
      %v5601 = vadd.f32 %v5488, %v5600
      %5602 = vmatprep.mubr.bf16.mxu0 %v3739
      %5603 = vmatmul.mubr.bf16.gmra.mxu0 %v3738
      %v5604 = vpop.f32.mrf.mxu0
      %v5605 = vadd.f32 %v5492, %v5604
      %v5606 = vpop.f32.mrf.mxu0
      %v5607 = vadd.f32 %v5494, %v5606
      %v5608 = vpop.f32.mrf.mxu0
      %v5609 = vadd.f32 %v5496, %v5608
      %v5610 = vpop.f32.mrf.mxu0
      %v5611 = vadd.f32 %v5498, %v5610
      %5612 = vmatprep.mubr.bf16.mxu0 %v3743
      %5613 = vmatmul.mubr.bf16.gmra.mxu0 %v3742
      %v5614 = vpop.f32.mrf.mxu0
      %v5615 = vadd.f32 %v5502, %v5614
      %v5616 = vpop.f32.mrf.mxu0
      %v5617 = vadd.f32 %v5504, %v5616
      %v5618 = vpop.f32.mrf.mxu0
      %v5619 = vadd.f32 %v5506, %v5618
      %v5620 = vpop.f32.mrf.mxu0
      %v5621 = vadd.f32 %v5508, %v5620
      %5622 = vmatprep.mubr.bf16.mxu0 %v3747
      %5623 = vmatmul.mubr.bf16.gmra.mxu0 %v3746
      %v5624 = vpop.f32.mrf.mxu0
      %v5625 = vadd.f32 %v5512, %v5624
      %v5626 = vpop.f32.mrf.mxu0
      %v5627 = vadd.f32 %v5514, %v5626
      %v5628 = vpop.f32.mrf.mxu0
      %v5629 = vadd.f32 %v5516, %v5628
      %v5630 = vpop.f32.mrf.mxu0
      %v5631 = vadd.f32 %v5518, %v5630
      %5632 = vmatprep.mubr.bf16.mxu0 %v3751
      %5633 = vmatmul.mubr.bf16.gmra.mxu0 %v3750
      %v5634 = vpop.f32.mrf.mxu0
      %v5635 = vadd.f32 %v5522, %v5634
      %v5636 = vpop.f32.mrf.mxu0
      %v5637 = vadd.f32 %v5524, %v5636
      %v5638 = vpop.f32.mrf.mxu0
      %v5639 = vadd.f32 %v5526, %v5638
      %v5640 = vpop.f32.mrf.mxu0
      %v5641 = vadd.f32 %v5528, %v5640
      %5642 = vmatprep.mubr.bf16.mxu0 %v3755
      %5643 = vmatmul.mubr.bf16.gmra.mxu0 %v3754
      %v5644 = vpop.f32.mrf.mxu0
      %v5645 = vadd.f32 %v5532, %v5644
      %v5646 = vpop.f32.mrf.mxu0
      %v5647 = vadd.f32 %v5534, %v5646
      %v5648 = vpop.f32.mrf.mxu0
      %v5649 = vadd.f32 %v5536, %v5648
      %v5650 = vpop.f32.mrf.mxu0
      %v5651 = vadd.f32 %v5538, %v5650
      %5652 = vdwg.mxu0
      %5653 = vmatprep.subr.bf16.mxu0 %v4807
      %5654 = vmatpush1.bf16.msra.mxu0 %v4806
      %5655 = vmatprep.subr.bf16.mxu0 %v4800
      %5656 = vmatpush1.bf16.msra.mxu0 %v4799
      %5657 = vmatprep.subr.bf16.mxu0 %v4793
      %5658 = vmatpush1.bf16.msra.mxu0 %v4792
      %5659 = vmatprep.subr.bf16.mxu0 %v4786
      %5660 = vmatpush1.bf16.msra.mxu0 %v4785
      %5661 = vmatprep.subr.bf16.mxu0 %v4779
      %5662 = vmatpush1.bf16.msra.mxu0 %v4778
      %5663 = vmatprep.subr.bf16.mxu0 %v4772
      %5664 = vmatpush1.bf16.msra.mxu0 %v4771
      %5665 = vmatprep.subr.bf16.mxu0 %v4765
      %5666 = vmatpush1.bf16.msra.mxu0 %v4764
      %5667 = vmatprep.subr.bf16.mxu0 %v4758
      %5668 = vmatpush1.bf16.msra.mxu0 %v4757
      %5669 = vmatprep.subr.bf16.mxu0 %v4863
      %5670 = vmatpush2.bf16.msra.mxu0 %v4862
      %5671 = vmatprep.subr.bf16.mxu0 %v4856
      %5672 = vmatpush2.bf16.msra.mxu0 %v4855
      %5673 = vmatprep.subr.bf16.mxu0 %v4849
      %5674 = vmatpush2.bf16.msra.mxu0 %v4848
      %5675 = vmatprep.subr.bf16.mxu0 %v4842
      %5676 = vmatpush2.bf16.msra.mxu0 %v4841
      %5677 = vmatprep.subr.bf16.mxu0 %v4835
      %5678 = vmatpush2.bf16.msra.mxu0 %v4834
      %5679 = vmatprep.subr.bf16.mxu0 %v4828
      %5680 = vmatpush2.bf16.msra.mxu0 %v4827
      %5681 = vmatprep.subr.bf16.mxu0 %v4821
      %5682 = vmatpush2.bf16.msra.mxu0 %v4820
      %5683 = vmatprep.subr.bf16.mxu0 %v4814
      %5684 = vmatpush2.bf16.msra.mxu0 %v4813
      %5685 = vmatprep.mubr.bf16.mxu0 %v3725
      %5686 = vmatmul.mubr.bf16.gmra.mxu0 %v3724
      %v5687 = vpop.f32.mrf.mxu0
      %v5688 = vadd.f32 %v4033, %v5687
      %v5689 = vpop.f32.mrf.mxu0
      %v5690 = vadd.f32 %v4037, %v5689
      %v5691 = vpop.f32.mrf.mxu0
      %v5692 = vadd.f32 %v4033, %v5691
      %v5693 = vpop.f32.mrf.mxu0
      %v5694 = vadd.f32 %v4037, %v5693
      %5695 = vmatprep.mubr.bf16.mxu0 %v3729
      %5696 = vmatmul.mubr.bf16.gmra.mxu0 %v3728
      %v5697 = vpop.f32.mrf.mxu0
      %v5698 = vadd.f32 %v4033, %v5697
      %v5699 = vpop.f32.mrf.mxu0
      %v5700 = vadd.f32 %v4037, %v5699
      %v5701 = vpop.f32.mrf.mxu0
      %v5702 = vadd.f32 %v4033, %v5701
      %v5703 = vpop.f32.mrf.mxu0
      %v5704 = vadd.f32 %v4037, %v5703
      %5705 = vmatprep.mubr.bf16.mxu0 %v3733
      %5706 = vmatmul.mubr.bf16.gmra.mxu0 %v3732
      %v5707 = vpop.f32.mrf.mxu0
      %v5708 = vadd.f32 %v4033, %v5707
      %v5709 = vpop.f32.mrf.mxu0
      %v5710 = vadd.f32 %v4037, %v5709
      %v5711 = vpop.f32.mrf.mxu0
      %v5712 = vadd.f32 %v4033, %v5711
      %v5713 = vpop.f32.mrf.mxu0
      %v5714 = vadd.f32 %v4037, %v5713
      %5715 = vmatprep.mubr.bf16.mxu0 %v3737
      %5716 = vmatmul.mubr.bf16.gmra.mxu0 %v3736
      %v5717 = vpop.f32.mrf.mxu0
      %v5718 = vadd.f32 %v4033, %v5717
      %v5719 = vpop.f32.mrf.mxu0
      %v5720 = vadd.f32 %v4037, %v5719
      %v5721 = vpop.f32.mrf.mxu0
      %v5722 = vadd.f32 %v4033, %v5721
      %v5723 = vpop.f32.mrf.mxu0
      %v5724 = vadd.f32 %v4037, %v5723
      %5725 = vmatprep.mubr.bf16.mxu0 %v3741
      %5726 = vmatmul.mubr.bf16.gmra.mxu0 %v3740
      %v5727 = vpop.f32.mrf.mxu0
      %v5728 = vadd.f32 %v4033, %v5727
      %v5729 = vpop.f32.mrf.mxu0
      %v5730 = vadd.f32 %v4037, %v5729
      %v5731 = vpop.f32.mrf.mxu0
      %v5732 = vadd.f32 %v4033, %v5731
      %v5733 = vpop.f32.mrf.mxu0
      %v5734 = vadd.f32 %v4037, %v5733
      %5735 = vmatprep.mubr.bf16.mxu0 %v3745
      %5736 = vmatmul.mubr.bf16.gmra.mxu0 %v3744
      %v5737 = vpop.f32.mrf.mxu0
      %v5738 = vadd.f32 %v4033, %v5737
      %v5739 = vpop.f32.mrf.mxu0
      %v5740 = vadd.f32 %v4037, %v5739
      %v5741 = vpop.f32.mrf.mxu0
      %v5742 = vadd.f32 %v4033, %v5741
      %v5743 = vpop.f32.mrf.mxu0
      %v5744 = vadd.f32 %v4037, %v5743
      %5745 = vmatprep.mubr.bf16.mxu0 %v3749
      %5746 = vmatmul.mubr.bf16.gmra.mxu0 %v3748
      %v5747 = vpop.f32.mrf.mxu0
      %v5748 = vadd.f32 %v4033, %v5747
      %v5749 = vpop.f32.mrf.mxu0
      %v5750 = vadd.f32 %v4037, %v5749
      %v5751 = vpop.f32.mrf.mxu0
      %v5752 = vadd.f32 %v4033, %v5751
      %v5753 = vpop.f32.mrf.mxu0
      %v5754 = vadd.f32 %v4037, %v5753
      %5755 = vmatprep.mubr.bf16.mxu0 %v3753
      %5756 = vmatmul.mubr.bf16.gmra.mxu0 %v3752
      %v5757 = vpop.f32.mrf.mxu0
      %v5758 = vadd.f32 %v4033, %v5757
      %v5759 = vpop.f32.mrf.mxu0
      %v5760 = vadd.f32 %v4037, %v5759
      %v5761 = vpop.f32.mrf.mxu0
      %v5762 = vadd.f32 %v4033, %v5761
      %v5763 = vpop.f32.mrf.mxu0
      %v5764 = vadd.f32 %v4037, %v5763
      %5765 = vdwg.mxu0
      %5766 = vmatprep.subr.bf16.mxu0 %v4919
      %5767 = vmatpush1.bf16.msra.mxu0 %v4918
      %5768 = vmatprep.subr.bf16.mxu0 %v4912
      %5769 = vmatpush1.bf16.msra.mxu0 %v4911
      %5770 = vmatprep.subr.bf16.mxu0 %v4905
      %5771 = vmatpush1.bf16.msra.mxu0 %v4904
      %5772 = vmatprep.subr.bf16.mxu0 %v4898
      %5773 = vmatpush1.bf16.msra.mxu0 %v4897
      %5774 = vmatprep.subr.bf16.mxu0 %v4891
      %5775 = vmatpush1.bf16.msra.mxu0 %v4890
      %5776 = vmatprep.subr.bf16.mxu0 %v4884
      %5777 = vmatpush1.bf16.msra.mxu0 %v4883
      %5778 = vmatprep.subr.bf16.mxu0 %v4877
      %5779 = vmatpush1.bf16.msra.mxu0 %v4876
      %5780 = vmatprep.subr.bf16.mxu0 %v4870
      %5781 = vmatpush1.bf16.msra.mxu0 %v4869
      %5782 = vmatprep.subr.bf16.mxu0 %v4975
      %5783 = vmatpush2.bf16.msra.mxu0 %v4974
      %5784 = vmatprep.subr.bf16.mxu0 %v4968
      %5785 = vmatpush2.bf16.msra.mxu0 %v4967
      %5786 = vmatprep.subr.bf16.mxu0 %v4961
      %5787 = vmatpush2.bf16.msra.mxu0 %v4960
      %5788 = vmatprep.subr.bf16.mxu0 %v4954
      %5789 = vmatpush2.bf16.msra.mxu0 %v4953
      %5790 = vmatprep.subr.bf16.mxu0 %v4947
      %5791 = vmatpush2.bf16.msra.mxu0 %v4946
      %5792 = vmatprep.subr.bf16.mxu0 %v4940
      %5793 = vmatpush2.bf16.msra.mxu0 %v4939
      %5794 = vmatprep.subr.bf16.mxu0 %v4933
      %5795 = vmatpush2.bf16.msra.mxu0 %v4932
      %5796 = vmatprep.subr.bf16.mxu0 %v4926
      %5797 = vmatpush2.bf16.msra.mxu0 %v4925
      %5798 = vmatprep.mubr.bf16.mxu0 %v3727
      %5799 = vmatmul.mubr.bf16.gmra.mxu0 %v3726
      %v5800 = vpop.f32.mrf.mxu0
      %v5801 = vadd.f32 %v5688, %v5800
      %v5802 = vpop.f32.mrf.mxu0
      %v5803 = vadd.f32 %v5690, %v5802
      %v5804 = vpop.f32.mrf.mxu0
      %v5805 = vadd.f32 %v5692, %v5804
      %v5806 = vpop.f32.mrf.mxu0
      %v5807 = vadd.f32 %v5694, %v5806
      %5808 = vmatprep.mubr.bf16.mxu0 %v3731
      %5809 = vmatmul.mubr.bf16.gmra.mxu0 %v3730
      %v5810 = vpop.f32.mrf.mxu0
      %v5811 = vadd.f32 %v5698, %v5810
      %v5812 = vpop.f32.mrf.mxu0
      %v5813 = vadd.f32 %v5700, %v5812
      %v5814 = vpop.f32.mrf.mxu0
      %v5815 = vadd.f32 %v5702, %v5814
      %v5816 = vpop.f32.mrf.mxu0
      %v5817 = vadd.f32 %v5704, %v5816
      %5818 = vmatprep.mubr.bf16.mxu0 %v3735
      %5819 = vmatmul.mubr.bf16.gmra.mxu0 %v3734
      %v5820 = vpop.f32.mrf.mxu0
      %v5821 = vadd.f32 %v5708, %v5820
      %v5822 = vpop.f32.mrf.mxu0
      %v5823 = vadd.f32 %v5710, %v5822
      %v5824 = vpop.f32.mrf.mxu0
      %v5825 = vadd.f32 %v5712, %v5824
      %v5826 = vpop.f32.mrf.mxu0
      %v5827 = vadd.f32 %v5714, %v5826
      %5828 = vmatprep.mubr.bf16.mxu0 %v3739
      %5829 = vmatmul.mubr.bf16.gmra.mxu0 %v3738
      %v5830 = vpop.f32.mrf.mxu0
      %v5831 = vadd.f32 %v5718, %v5830
      %v5832 = vpop.f32.mrf.mxu0
      %v5833 = vadd.f32 %v5720, %v5832
      %v5834 = vpop.f32.mrf.mxu0
      %v5835 = vadd.f32 %v5722, %v5834
      %v5836 = vpop.f32.mrf.mxu0
      %v5837 = vadd.f32 %v5724, %v5836
      %5838 = vmatprep.mubr.bf16.mxu0 %v3743
      %5839 = vmatmul.mubr.bf16.gmra.mxu0 %v3742
      %v5840 = vpop.f32.mrf.mxu0
      %v5841 = vadd.f32 %v5728, %v5840
      %v5842 = vpop.f32.mrf.mxu0
      %v5843 = vadd.f32 %v5730, %v5842
      %v5844 = vpop.f32.mrf.mxu0
      %v5845 = vadd.f32 %v5732, %v5844
      %v5846 = vpop.f32.mrf.mxu0
      %v5847 = vadd.f32 %v5734, %v5846
      %5848 = vmatprep.mubr.bf16.mxu0 %v3747
      %5849 = vmatmul.mubr.bf16.gmra.mxu0 %v3746
      %v5850 = vpop.f32.mrf.mxu0
      %v5851 = vadd.f32 %v5738, %v5850
      %v5852 = vpop.f32.mrf.mxu0
      %v5853 = vadd.f32 %v5740, %v5852
      %v5854 = vpop.f32.mrf.mxu0
      %v5855 = vadd.f32 %v5742, %v5854
      %v5856 = vpop.f32.mrf.mxu0
      %v5857 = vadd.f32 %v5744, %v5856
      %5858 = vmatprep.mubr.bf16.mxu0 %v3751
      %5859 = vmatmul.mubr.bf16.gmra.mxu0 %v3750
      %v5860 = vpop.f32.mrf.mxu0
      %v5861 = vadd.f32 %v5748, %v5860
      %v5862 = vpop.f32.mrf.mxu0
      %v5863 = vadd.f32 %v5750, %v5862
      %v5864 = vpop.f32.mrf.mxu0
      %v5865 = vadd.f32 %v5752, %v5864
      %v5866 = vpop.f32.mrf.mxu0
      %v5867 = vadd.f32 %v5754, %v5866
      %5868 = vmatprep.mubr.bf16.mxu0 %v3755
      %5869 = vmatmul.mubr.bf16.gmra.mxu0 %v3754
      %v5870 = vpop.f32.mrf.mxu0
      %v5871 = vadd.f32 %v5758, %v5870
      %v5872 = vpop.f32.mrf.mxu0
      %v5873 = vadd.f32 %v5760, %v5872
      %v5874 = vpop.f32.mrf.mxu0
      %v5875 = vadd.f32 %v5762, %v5874
      %v5876 = vpop.f32.mrf.mxu0
      %v5877 = vadd.f32 %v5764, %v5876
      %5878 = vdwg.mxu0
      %5879 = vmatprep.subr.bf16.mxu0 0
      %5880 = vmatpush1.bf16.msra.mxu0 %v4808
      %5881 = vmatprep.subr.bf16.mxu0 0
      %5882 = vmatpush1.bf16.msra.mxu0 %v4801
      %5883 = vmatprep.subr.bf16.mxu0 0
      %5884 = vmatpush1.bf16.msra.mxu0 %v4794
      %5885 = vmatprep.subr.bf16.mxu0 0
      %5886 = vmatpush1.bf16.msra.mxu0 %v4787
      %5887 = vmatprep.subr.bf16.mxu0 0
      %5888 = vmatpush1.bf16.msra.mxu0 %v4780
      %5889 = vmatprep.subr.bf16.mxu0 0
      %5890 = vmatpush1.bf16.msra.mxu0 %v4773
      %5891 = vmatprep.subr.bf16.mxu0 0
      %5892 = vmatpush1.bf16.msra.mxu0 %v4766
      %5893 = vmatprep.subr.bf16.mxu0 0
      %5894 = vmatpush1.bf16.msra.mxu0 %v4759
      %5895 = vmatprep.subr.bf16.mxu0 0
      %5896 = vmatpush2.bf16.msra.mxu0 %v4864
      %5897 = vmatprep.subr.bf16.mxu0 0
      %5898 = vmatpush2.bf16.msra.mxu0 %v4857
      %5899 = vmatprep.subr.bf16.mxu0 0
      %5900 = vmatpush2.bf16.msra.mxu0 %v4850
      %5901 = vmatprep.subr.bf16.mxu0 0
      %5902 = vmatpush2.bf16.msra.mxu0 %v4843
      %5903 = vmatprep.subr.bf16.mxu0 0
      %5904 = vmatpush2.bf16.msra.mxu0 %v4836
      %5905 = vmatprep.subr.bf16.mxu0 0
      %5906 = vmatpush2.bf16.msra.mxu0 %v4829
      %5907 = vmatprep.subr.bf16.mxu0 0
      %5908 = vmatpush2.bf16.msra.mxu0 %v4822
      %5909 = vmatprep.subr.bf16.mxu0 0
      %5910 = vmatpush2.bf16.msra.mxu0 %v4815
      %5911 = vmatprep.mubr.bf16.mxu0 %v3725
      %5912 = vmatmul.mubr.bf16.gmra.mxu0 %v3724
      %v5913 = vpop.f32.mrf.mxu0
      %v5914 = vadd.f32 %v4041, %v5913
      %v5915 = vpop.f32.mrf.mxu0
      %v5916 = vpop.f32.mrf.mxu0
      %v5917 = vadd.f32 %v4041, %v5916
      %v5918 = vpop.f32.mrf.mxu0
      %5919 = vmatprep.mubr.bf16.mxu0 %v3729
      %5920 = vmatmul.mubr.bf16.gmra.mxu0 %v3728
      %v5921 = vpop.f32.mrf.mxu0
      %v5922 = vadd.f32 %v4041, %v5921
      %v5923 = vpop.f32.mrf.mxu0
      %v5924 = vpop.f32.mrf.mxu0
      %v5925 = vadd.f32 %v4041, %v5924
      %v5926 = vpop.f32.mrf.mxu0
      %5927 = vmatprep.mubr.bf16.mxu0 %v3733
      %5928 = vmatmul.mubr.bf16.gmra.mxu0 %v3732
      %v5929 = vpop.f32.mrf.mxu0
      %v5930 = vadd.f32 %v4041, %v5929
      %v5931 = vpop.f32.mrf.mxu0
      %v5932 = vpop.f32.mrf.mxu0
      %v5933 = vadd.f32 %v4041, %v5932
      %v5934 = vpop.f32.mrf.mxu0
      %5935 = vmatprep.mubr.bf16.mxu0 %v3737
      %5936 = vmatmul.mubr.bf16.gmra.mxu0 %v3736
      %v5937 = vpop.f32.mrf.mxu0
      %v5938 = vadd.f32 %v4041, %v5937
      %v5939 = vpop.f32.mrf.mxu0
      %v5940 = vpop.f32.mrf.mxu0
      %v5941 = vadd.f32 %v4041, %v5940
      %v5942 = vpop.f32.mrf.mxu0
      %5943 = vmatprep.mubr.bf16.mxu0 %v3741
      %5944 = vmatmul.mubr.bf16.gmra.mxu0 %v3740
      %v5945 = vpop.f32.mrf.mxu0
      %v5946 = vadd.f32 %v4041, %v5945
      %v5947 = vpop.f32.mrf.mxu0
      %v5948 = vpop.f32.mrf.mxu0
      %v5949 = vadd.f32 %v4041, %v5948
      %v5950 = vpop.f32.mrf.mxu0
      %5951 = vmatprep.mubr.bf16.mxu0 %v3745
      %5952 = vmatmul.mubr.bf16.gmra.mxu0 %v3744
      %v5953 = vpop.f32.mrf.mxu0
      %v5954 = vadd.f32 %v4041, %v5953
      %v5955 = vpop.f32.mrf.mxu0
      %v5956 = vpop.f32.mrf.mxu0
      %v5957 = vadd.f32 %v4041, %v5956
      %v5958 = vpop.f32.mrf.mxu0
      %5959 = vmatprep.mubr.bf16.mxu0 %v3749
      %5960 = vmatmul.mubr.bf16.gmra.mxu0 %v3748
      %v5961 = vpop.f32.mrf.mxu0
      %v5962 = vadd.f32 %v4041, %v5961
      %v5963 = vpop.f32.mrf.mxu0
      %v5964 = vpop.f32.mrf.mxu0
      %v5965 = vadd.f32 %v4041, %v5964
      %v5966 = vpop.f32.mrf.mxu0
      %5967 = vmatprep.mubr.bf16.mxu0 %v3753
      %5968 = vmatmul.mubr.bf16.gmra.mxu0 %v3752
      %v5969 = vpop.f32.mrf.mxu0
      %v5970 = vadd.f32 %v4041, %v5969
      %v5971 = vpop.f32.mrf.mxu0
      %v5972 = vpop.f32.mrf.mxu0
      %v5973 = vadd.f32 %v4041, %v5972
      %v5974 = vpop.f32.mrf.mxu0
      %5975 = vdwg.mxu0
      %5976 = vmatprep.subr.bf16.mxu0 0
      %5977 = vmatpush1.bf16.msra.mxu0 %v4920
      %5978 = vmatprep.subr.bf16.mxu0 0
      %5979 = vmatpush1.bf16.msra.mxu0 %v4913
      %5980 = vmatprep.subr.bf16.mxu0 0
      %5981 = vmatpush1.bf16.msra.mxu0 %v4906
      %5982 = vmatprep.subr.bf16.mxu0 0
      %5983 = vmatpush1.bf16.msra.mxu0 %v4899
      %5984 = vmatprep.subr.bf16.mxu0 0
      %5985 = vmatpush1.bf16.msra.mxu0 %v4892
      %5986 = vmatprep.subr.bf16.mxu0 0
      %5987 = vmatpush1.bf16.msra.mxu0 %v4885
      %5988 = vmatprep.subr.bf16.mxu0 0
      %5989 = vmatpush1.bf16.msra.mxu0 %v4878
      %5990 = vmatprep.subr.bf16.mxu0 0
      %5991 = vmatpush1.bf16.msra.mxu0 %v4871
      %5992 = vmatprep.subr.bf16.mxu0 0
      %5993 = vmatpush2.bf16.msra.mxu0 %v4976
      %5994 = vmatprep.subr.bf16.mxu0 0
      %5995 = vmatpush2.bf16.msra.mxu0 %v4969
      %5996 = vmatprep.subr.bf16.mxu0 0
      %5997 = vmatpush2.bf16.msra.mxu0 %v4962
      %5998 = vmatprep.subr.bf16.mxu0 0
      %5999 = vmatpush2.bf16.msra.mxu0 %v4955
      %6000 = vmatprep.subr.bf16.mxu0 0
      %6001 = vmatpush2.bf16.msra.mxu0 %v4948
      %6002 = vmatprep.subr.bf16.mxu0 0
      %6003 = vmatpush2.bf16.msra.mxu0 %v4941
      %6004 = vmatprep.subr.bf16.mxu0 0
      %6005 = vmatpush2.bf16.msra.mxu0 %v4934
      %6006 = vmatprep.subr.bf16.mxu0 0
      %6007 = vmatpush2.bf16.msra.mxu0 %v4927
      %6008 = vmatprep.mubr.bf16.mxu0 %v3727
      %6009 = vmatmul.mubr.bf16.gmra.mxu0 %v3726
      %v6010 = vpop.f32.mrf.mxu0
      %v6011 = vadd.f32 %v5914, %v6010
      %v6012 = vpop.f32.mrf.mxu0
      %v6013 = vpop.f32.mrf.mxu0
      %v6014 = vadd.f32 %v5917, %v6013
      %v6015 = vpop.f32.mrf.mxu0
      %6016 = vmatprep.mubr.bf16.mxu0 %v3731
      %6017 = vmatmul.mubr.bf16.gmra.mxu0 %v3730
      %v6018 = vpop.f32.mrf.mxu0
      %v6019 = vadd.f32 %v5922, %v6018
      %v6020 = vpop.f32.mrf.mxu0
      %v6021 = vpop.f32.mrf.mxu0
      %v6022 = vadd.f32 %v5925, %v6021
      %v6023 = vpop.f32.mrf.mxu0
      %6024 = vmatprep.mubr.bf16.mxu0 %v3735
      %6025 = vmatmul.mubr.bf16.gmra.mxu0 %v3734
      %v6026 = vpop.f32.mrf.mxu0
      %v6027 = vadd.f32 %v5930, %v6026
      %v6028 = vpop.f32.mrf.mxu0
      %v6029 = vpop.f32.mrf.mxu0
      %v6030 = vadd.f32 %v5933, %v6029
      %v6031 = vpop.f32.mrf.mxu0
      %6032 = vmatprep.mubr.bf16.mxu0 %v3739
      %6033 = vmatmul.mubr.bf16.gmra.mxu0 %v3738
      %v6034 = vpop.f32.mrf.mxu0
      %v6035 = vadd.f32 %v5938, %v6034
      %v6036 = vpop.f32.mrf.mxu0
      %v6037 = vpop.f32.mrf.mxu0
      %v6038 = vadd.f32 %v5941, %v6037
      %v6039 = vpop.f32.mrf.mxu0
      %6040 = vmatprep.mubr.bf16.mxu0 %v3743
      %6041 = vmatmul.mubr.bf16.gmra.mxu0 %v3742
      %v6042 = vpop.f32.mrf.mxu0
      %v6043 = vadd.f32 %v5946, %v6042
      %v6044 = vpop.f32.mrf.mxu0
      %v6045 = vpop.f32.mrf.mxu0
      %v6046 = vadd.f32 %v5949, %v6045
      %v6047 = vpop.f32.mrf.mxu0
      %6048 = vmatprep.mubr.bf16.mxu0 %v3747
      %6049 = vmatmul.mubr.bf16.gmra.mxu0 %v3746
      %v6050 = vpop.f32.mrf.mxu0
      %v6051 = vadd.f32 %v5954, %v6050
      %v6052 = vpop.f32.mrf.mxu0
      %v6053 = vpop.f32.mrf.mxu0
      %v6054 = vadd.f32 %v5957, %v6053
      %v6055 = vpop.f32.mrf.mxu0
      %6056 = vmatprep.mubr.bf16.mxu0 %v3751
      %6057 = vmatmul.mubr.bf16.gmra.mxu0 %v3750
      %v6058 = vpop.f32.mrf.mxu0
      %v6059 = vadd.f32 %v5962, %v6058
      %v6060 = vpop.f32.mrf.mxu0
      %v6061 = vpop.f32.mrf.mxu0
      %v6062 = vadd.f32 %v5965, %v6061
      %v6063 = vpop.f32.mrf.mxu0
      %6064 = vmatprep.mubr.bf16.mxu0 %v3755
      %6065 = vmatmul.mubr.bf16.gmra.mxu0 %v3754
      %v6066 = vpop.f32.mrf.mxu0
      %v6067 = vadd.f32 %v5970, %v6066
      %v6068 = vpop.f32.mrf.mxu0
      %v6069 = vpop.f32.mrf.mxu0
      %v6070 = vadd.f32 %v5973, %v6069
      %v6071 = vpop.f32.mrf.mxu0
      %6072 = vdwg.mxu0
      %v6073 = vxor.u32 %v5349, 2147483648
      %v6074 = vxor.u32 %v5351, 2147483648
      %v6075 = vxor.u32 %v5575, 2147483648
      %v6076 = vxor.u32 %v5577, 2147483648
      %v6077 = vxor.u32 %v5801, 2147483648
      %v6078 = vxor.u32 %v5803, 2147483648
      %v6079 = vxor.u32 %v6011, 2147483648
      %v6080 = vxor.u32 %v5353, 2147483648
      %v6081 = vxor.u32 %v5355, 2147483648
      %v6082 = vxor.u32 %v5579, 2147483648
      %v6083 = vxor.u32 %v5581, 2147483648
      %v6084 = vxor.u32 %v5805, 2147483648
      %v6085 = vxor.u32 %v5807, 2147483648
      %v6086 = vxor.u32 %v6014, 2147483648
      %v6087 = vxor.u32 %v5359, 2147483648
      %v6088 = vxor.u32 %v5361, 2147483648
      %v6089 = vxor.u32 %v5585, 2147483648
      %v6090 = vxor.u32 %v5587, 2147483648
      %v6091 = vxor.u32 %v5811, 2147483648
      %v6092 = vxor.u32 %v5813, 2147483648
      %v6093 = vxor.u32 %v6019, 2147483648
      %v6094 = vxor.u32 %v5363, 2147483648
      %v6095 = vxor.u32 %v5365, 2147483648
      %v6096 = vxor.u32 %v5589, 2147483648
      %v6097 = vxor.u32 %v5591, 2147483648
      %v6098 = vxor.u32 %v5815, 2147483648
      %v6099 = vxor.u32 %v5817, 2147483648
      %v6100 = vxor.u32 %v6022, 2147483648
      %v6101 = vxor.u32 %v5369, 2147483648
      %v6102 = vxor.u32 %v5371, 2147483648
      %v6103 = vxor.u32 %v5595, 2147483648
      %v6104 = vxor.u32 %v5597, 2147483648
      %v6105 = vxor.u32 %v5821, 2147483648
      %v6106 = vxor.u32 %v5823, 2147483648
      %v6107 = vxor.u32 %v6027, 2147483648
      %v6108 = vxor.u32 %v5373, 2147483648
      %v6109 = vxor.u32 %v5375, 2147483648
      %v6110 = vxor.u32 %v5599, 2147483648
      %v6111 = vxor.u32 %v5601, 2147483648
      %v6112 = vxor.u32 %v5825, 2147483648
      %v6113 = vxor.u32 %v5827, 2147483648
      %v6114 = vxor.u32 %v6030, 2147483648
      %v6115 = vxor.u32 %v5379, 2147483648
      %v6116 = vxor.u32 %v5381, 2147483648
      %v6117 = vxor.u32 %v5605, 2147483648
      %v6118 = vxor.u32 %v5607, 2147483648
      %v6119 = vxor.u32 %v5831, 2147483648
      %v6120 = vxor.u32 %v5833, 2147483648
      %v6121 = vxor.u32 %v6035, 2147483648
      %v6122 = vxor.u32 %v5383, 2147483648
      %v6123 = vxor.u32 %v5385, 2147483648
      %v6124 = vxor.u32 %v5609, 2147483648
      %v6125 = vxor.u32 %v5611, 2147483648
      %v6126 = vxor.u32 %v5835, 2147483648
      %v6127 = vxor.u32 %v5837, 2147483648
      %v6128 = vxor.u32 %v6038, 2147483648
      %v6129 = vxor.u32 %v5389, 2147483648
      %v6130 = vxor.u32 %v5391, 2147483648
      %v6131 = vxor.u32 %v5615, 2147483648
      %v6132 = vxor.u32 %v5617, 2147483648
      %v6133 = vxor.u32 %v5841, 2147483648
      %v6134 = vxor.u32 %v5843, 2147483648
      %v6135 = vxor.u32 %v6043, 2147483648
      %v6136 = vxor.u32 %v5393, 2147483648
      %v6137 = vxor.u32 %v5395, 2147483648
      %v6138 = vxor.u32 %v5619, 2147483648
      %v6139 = vxor.u32 %v5621, 2147483648
      %v6140 = vxor.u32 %v5845, 2147483648
      %v6141 = vxor.u32 %v5847, 2147483648
      %v6142 = vxor.u32 %v6046, 2147483648
      %v6143 = vxor.u32 %v5399, 2147483648
      %v6144 = vxor.u32 %v5401, 2147483648
      %v6145 = vxor.u32 %v5625, 2147483648
      %v6146 = vxor.u32 %v5627, 2147483648
      %v6147 = vxor.u32 %v5851, 2147483648
      %v6148 = vxor.u32 %v5853, 2147483648
      %v6149 = vxor.u32 %v6051, 2147483648
      %v6150 = vxor.u32 %v5403, 2147483648
      %v6151 = vxor.u32 %v5405, 2147483648
      %v6152 = vxor.u32 %v5629, 2147483648
      %v6153 = vxor.u32 %v5631, 2147483648
      %v6154 = vxor.u32 %v5855, 2147483648
      %v6155 = vxor.u32 %v5857, 2147483648
      %v6156 = vxor.u32 %v6054, 2147483648
      %v6157 = vxor.u32 %v5409, 2147483648
      %v6158 = vxor.u32 %v5411, 2147483648
      %v6159 = vxor.u32 %v5635, 2147483648
      %v6160 = vxor.u32 %v5637, 2147483648
      %v6161 = vxor.u32 %v5861, 2147483648
      %v6162 = vxor.u32 %v5863, 2147483648
      %v6163 = vxor.u32 %v6059, 2147483648
      %v6164 = vxor.u32 %v5413, 2147483648
      %v6165 = vxor.u32 %v5415, 2147483648
      %v6166 = vxor.u32 %v5639, 2147483648
      %v6167 = vxor.u32 %v5641, 2147483648
      %v6168 = vxor.u32 %v5865, 2147483648
      %v6169 = vxor.u32 %v5867, 2147483648
      %v6170 = vxor.u32 %v6062, 2147483648
      %v6171 = vxor.u32 %v5419, 2147483648
      %v6172 = vxor.u32 %v5421, 2147483648
      %v6173 = vxor.u32 %v5645, 2147483648
      %v6174 = vxor.u32 %v5647, 2147483648
      %v6175 = vxor.u32 %v5871, 2147483648
      %v6176 = vxor.u32 %v5873, 2147483648
      %v6177 = vxor.u32 %v6067, 2147483648
      %v6178 = vxor.u32 %v5423, 2147483648
      %v6179 = vxor.u32 %v5425, 2147483648
      %v6180 = vxor.u32 %v5649, 2147483648
      %v6181 = vxor.u32 %v5651, 2147483648
      %v6182 = vxor.u32 %v5875, 2147483648
      %v6183 = vxor.u32 %v5877, 2147483648
      %v6184 = vxor.u32 %v6070, 2147483648
      %v6185 = vmul.f32 %v6073, 1.442695
      %v6186 = vpow.pop %v6185
      %v6187 = vmul.f32 %v6074, 1.442695
      %v6188 = vpow.pop %v6187
      %v6189 = vmul.f32 %v6075, 1.442695
      %v6190 = vpow.pop %v6189
      %v6191 = vmul.f32 %v6076, 1.442695
      %v6192 = vpow.pop %v6191
      %v6193 = vmul.f32 %v6077, 1.442695
      %v6194 = vpow.pop %v6193
      %v6195 = vmul.f32 %v6078, 1.442695
      %v6196 = vpow.pop %v6195
      %v6197 = vmul.f32 %v6079, 1.442695
      %v6198 = vpow.pop %v6197
      %v6199 = vmul.f32 %v6080, 1.442695
      %v6200 = vpow.pop %v6199
      %v6201 = vmul.f32 %v6081, 1.442695
      %v6202 = vpow.pop %v6201
      %v6203 = vmul.f32 %v6082, 1.442695
      %v6204 = vpow.pop %v6203
      %v6205 = vmul.f32 %v6083, 1.442695
      %v6206 = vpow.pop %v6205
      %v6207 = vmul.f32 %v6084, 1.442695
      %v6208 = vpow.pop %v6207
      %v6209 = vmul.f32 %v6085, 1.442695
      %v6210 = vpow.pop %v6209
      %v6211 = vmul.f32 %v6086, 1.442695
      %v6212 = vpow.pop %v6211
      %v6213 = vmul.f32 %v6087, 1.442695
      %v6214 = vpow.pop %v6213
      %v6215 = vmul.f32 %v6088, 1.442695
      %v6216 = vpow.pop %v6215
      %v6217 = vmul.f32 %v6089, 1.442695
      %v6218 = vpow.pop %v6217
      %v6219 = vmul.f32 %v6090, 1.442695
      %v6220 = vpow.pop %v6219
      %v6221 = vmul.f32 %v6091, 1.442695
      %v6222 = vpow.pop %v6221
      %v6223 = vmul.f32 %v6092, 1.442695
      %v6224 = vpow.pop %v6223
      %v6225 = vmul.f32 %v6093, 1.442695
      %v6226 = vpow.pop %v6225
      %v6227 = vmul.f32 %v6094, 1.442695
      %v6228 = vpow.pop %v6227
      %v6229 = vmul.f32 %v6095, 1.442695
      %v6230 = vpow.pop %v6229
      %v6231 = vmul.f32 %v6096, 1.442695
      %v6232 = vpow.pop %v6231
      %v6233 = vmul.f32 %v6097, 1.442695
      %v6234 = vpow.pop %v6233
      %v6235 = vmul.f32 %v6098, 1.442695
      %v6236 = vpow.pop %v6235
      %v6237 = vmul.f32 %v6099, 1.442695
      %v6238 = vpow.pop %v6237
      %v6239 = vmul.f32 %v6100, 1.442695
      %v6240 = vpow.pop %v6239
      %v6241 = vmul.f32 %v6101, 1.442695
      %v6242 = vpow.pop %v6241
      %v6243 = vmul.f32 %v6102, 1.442695
      %v6244 = vpow.pop %v6243
      %v6245 = vmul.f32 %v6103, 1.442695
      %v6246 = vpow.pop %v6245
      %v6247 = vmul.f32 %v6104, 1.442695
      %v6248 = vpow.pop %v6247
      %v6249 = vmul.f32 %v6105, 1.442695
      %v6250 = vpow.pop %v6249
      %v6251 = vmul.f32 %v6106, 1.442695
      %v6252 = vpow.pop %v6251
      %v6253 = vmul.f32 %v6107, 1.442695
      %v6254 = vpow.pop %v6253
      %v6255 = vmul.f32 %v6108, 1.442695
      %v6256 = vpow.pop %v6255
      %v6257 = vmul.f32 %v6109, 1.442695
      %v6258 = vpow.pop %v6257
      %v6259 = vmul.f32 %v6110, 1.442695
      %v6260 = vpow.pop %v6259
      %v6261 = vmul.f32 %v6111, 1.442695
      %v6262 = vpow.pop %v6261
      %v6263 = vmul.f32 %v6112, 1.442695
      %v6264 = vpow.pop %v6263
      %v6265 = vmul.f32 %v6113, 1.442695
      %v6266 = vpow.pop %v6265
      %v6267 = vmul.f32 %v6114, 1.442695
      %v6268 = vpow.pop %v6267
      %v6269 = vmul.f32 %v6115, 1.442695
      %v6270 = vpow.pop %v6269
      %v6271 = vmul.f32 %v6116, 1.442695
      %v6272 = vpow.pop %v6271
      %v6273 = vmul.f32 %v6117, 1.442695
      %v6274 = vpow.pop %v6273
      %v6275 = vmul.f32 %v6118, 1.442695
      %v6276 = vpow.pop %v6275
      %v6277 = vmul.f32 %v6119, 1.442695
      %v6278 = vpow.pop %v6277
      %v6279 = vmul.f32 %v6120, 1.442695
      %v6280 = vpow.pop %v6279
      %v6281 = vmul.f32 %v6121, 1.442695
      %v6282 = vpow.pop %v6281
      %v6283 = vmul.f32 %v6122, 1.442695
      %v6284 = vpow.pop %v6283
      %v6285 = vmul.f32 %v6123, 1.442695
      %v6286 = vpow.pop %v6285
      %v6287 = vmul.f32 %v6124, 1.442695
      %v6288 = vpow.pop %v6287
      %v6289 = vmul.f32 %v6125, 1.442695
      %v6290 = vpow.pop %v6289
      %v6291 = vmul.f32 %v6126, 1.442695
      %v6292 = vpow.pop %v6291
      %v6293 = vmul.f32 %v6127, 1.442695
      %v6294 = vpow.pop %v6293
      %v6295 = vmul.f32 %v6128, 1.442695
      %v6296 = vpow.pop %v6295
      %v6297 = vmul.f32 %v6129, 1.442695
      %v6298 = vpow.pop %v6297
      %v6299 = vmul.f32 %v6130, 1.442695
      %v6300 = vpow.pop %v6299
      %v6301 = vmul.f32 %v6131, 1.442695
      %v6302 = vpow.pop %v6301
      %v6303 = vmul.f32 %v6132, 1.442695
      %v6304 = vpow.pop %v6303
      %v6305 = vmul.f32 %v6133, 1.442695
      %v6306 = vpow.pop %v6305
      %v6307 = vmul.f32 %v6134, 1.442695
      %v6308 = vpow.pop %v6307
      %v6309 = vmul.f32 %v6135, 1.442695
      %v6310 = vpow.pop %v6309
      %v6311 = vmul.f32 %v6136, 1.442695
      %v6312 = vpow.pop %v6311
      %v6313 = vmul.f32 %v6137, 1.442695
      %v6314 = vpow.pop %v6313
      %v6315 = vmul.f32 %v6138, 1.442695
      %v6316 = vpow.pop %v6315
      %v6317 = vmul.f32 %v6139, 1.442695
      %v6318 = vpow.pop %v6317
      %v6319 = vmul.f32 %v6140, 1.442695
      %v6320 = vpow.pop %v6319
      %v6321 = vmul.f32 %v6141, 1.442695
      %v6322 = vpow.pop %v6321
      %v6323 = vmul.f32 %v6142, 1.442695
      %v6324 = vpow.pop %v6323
      %v6325 = vmul.f32 %v6143, 1.442695
      %v6326 = vpow.pop %v6325
      %v6327 = vmul.f32 %v6144, 1.442695
      %v6328 = vpow.pop %v6327
      %v6329 = vmul.f32 %v6145, 1.442695
      %v6330 = vpow.pop %v6329
      %v6331 = vmul.f32 %v6146, 1.442695
      %v6332 = vpow.pop %v6331
      %v6333 = vmul.f32 %v6147, 1.442695
      %v6334 = vpow.pop %v6333
      %v6335 = vmul.f32 %v6148, 1.442695
      %v6336 = vpow.pop %v6335
      %v6337 = vmul.f32 %v6149, 1.442695
      %v6338 = vpow.pop %v6337
      %v6339 = vmul.f32 %v6150, 1.442695
      %v6340 = vpow.pop %v6339
      %v6341 = vmul.f32 %v6151, 1.442695
      %v6342 = vpow.pop %v6341
      %v6343 = vmul.f32 %v6152, 1.442695
      %v6344 = vpow.pop %v6343
      %v6345 = vmul.f32 %v6153, 1.442695
      %v6346 = vpow.pop %v6345
      %v6347 = vmul.f32 %v6154, 1.442695
      %v6348 = vpow.pop %v6347
      %v6349 = vmul.f32 %v6155, 1.442695
      %v6350 = vpow.pop %v6349
      %v6351 = vmul.f32 %v6156, 1.442695
      %v6352 = vpow.pop %v6351
      %v6353 = vmul.f32 %v6157, 1.442695
      %v6354 = vpow.pop %v6353
      %v6355 = vmul.f32 %v6158, 1.442695
      %v6356 = vpow.pop %v6355
      %v6357 = vmul.f32 %v6159, 1.442695
      %v6358 = vpow.pop %v6357
      %v6359 = vmul.f32 %v6160, 1.442695
      %v6360 = vpow.pop %v6359
      %v6361 = vmul.f32 %v6161, 1.442695
      %v6362 = vpow.pop %v6361
      %v6363 = vmul.f32 %v6162, 1.442695
      %v6364 = vpow.pop %v6363
      %v6365 = vmul.f32 %v6163, 1.442695
      %v6366 = vpow.pop %v6365
      %v6367 = vmul.f32 %v6164, 1.442695
      %v6368 = vpow.pop %v6367
      %v6369 = vmul.f32 %v6165, 1.442695
      %v6370 = vpow.pop %v6369
      %v6371 = vmul.f32 %v6166, 1.442695
      %v6372 = vpow.pop %v6371
      %v6373 = vmul.f32 %v6167, 1.442695
      %v6374 = vpow.pop %v6373
      %v6375 = vmul.f32 %v6168, 1.442695
      %v6376 = vpow.pop %v6375
      %v6377 = vmul.f32 %v6169, 1.442695
      %v6378 = vpow.pop %v6377
      %v6379 = vmul.f32 %v6170, 1.442695
      %v6380 = vpow.pop %v6379
      %v6381 = vmul.f32 %v6171, 1.442695
      %v6382 = vpow.pop %v6381
      %v6383 = vmul.f32 %v6172, 1.442695
      %v6384 = vpow.pop %v6383
      %v6385 = vmul.f32 %v6173, 1.442695
      %v6386 = vpow.pop %v6385
      %v6387 = vmul.f32 %v6174, 1.442695
      %v6388 = vpow.pop %v6387
      %v6389 = vmul.f32 %v6175, 1.442695
      %v6390 = vpow.pop %v6389
      %v6391 = vmul.f32 %v6176, 1.442695
      %v6392 = vpow.pop %v6391
      %v6393 = vmul.f32 %v6177, 1.442695
      %v6394 = vpow.pop %v6393
      %v6395 = vmul.f32 %v6178, 1.442695
      %v6396 = vpow.pop %v6395
      %v6397 = vmul.f32 %v6179, 1.442695
      %v6398 = vpow.pop %v6397
      %v6399 = vmul.f32 %v6180, 1.442695
      %v6400 = vpow.pop %v6399
      %v6401 = vmul.f32 %v6181, 1.442695
      %v6402 = vpow.pop %v6401
      %v6403 = vmul.f32 %v6182, 1.442695
      %v6404 = vpow.pop %v6403
      %v6405 = vmul.f32 %v6183, 1.442695
      %v6406 = vpow.pop %v6405
      %v6407 = vmul.f32 %v6184, 1.442695
      %v6408 = vpow.pop %v6407
      %v6409 = vadd.f32 %v6186, 1.0
      %v6410 = vadd.f32 %v6188, 1.0
      %v6411 = vadd.f32 %v6190, 1.0
      %v6412 = vadd.f32 %v6192, 1.0
      %v6413 = vadd.f32 %v6194, 1.0
      %v6414 = vadd.f32 %v6196, 1.0
      %v6415 = vadd.f32 %v6198, 1.0
      %v6416 = vadd.f32 %v6200, 1.0
      %v6417 = vadd.f32 %v6202, 1.0
      %v6418 = vadd.f32 %v6204, 1.0
      %v6419 = vadd.f32 %v6206, 1.0
      %v6420 = vadd.f32 %v6208, 1.0
      %v6421 = vadd.f32 %v6210, 1.0
      %v6422 = vadd.f32 %v6212, 1.0
      %v6423 = vadd.f32 %v6214, 1.0
      %v6424 = vadd.f32 %v6216, 1.0
      %v6425 = vadd.f32 %v6218, 1.0
      %v6426 = vadd.f32 %v6220, 1.0
      %v6427 = vadd.f32 %v6222, 1.0
      %v6428 = vadd.f32 %v6224, 1.0
      %v6429 = vadd.f32 %v6226, 1.0
      %v6430 = vadd.f32 %v6228, 1.0
      %v6431 = vadd.f32 %v6230, 1.0
      %v6432 = vadd.f32 %v6232, 1.0
      %v6433 = vadd.f32 %v6234, 1.0
      %v6434 = vadd.f32 %v6236, 1.0
      %v6435 = vadd.f32 %v6238, 1.0
      %v6436 = vadd.f32 %v6240, 1.0
      %v6437 = vadd.f32 %v6242, 1.0
      %v6438 = vadd.f32 %v6244, 1.0
      %v6439 = vadd.f32 %v6246, 1.0
      %v6440 = vadd.f32 %v6248, 1.0
      %v6441 = vadd.f32 %v6250, 1.0
      %v6442 = vadd.f32 %v6252, 1.0
      %v6443 = vadd.f32 %v6254, 1.0
      %v6444 = vadd.f32 %v6256, 1.0
      %v6445 = vadd.f32 %v6258, 1.0
      %v6446 = vadd.f32 %v6260, 1.0
      %v6447 = vadd.f32 %v6262, 1.0
      %v6448 = vadd.f32 %v6264, 1.0
      %v6449 = vadd.f32 %v6266, 1.0
      %v6450 = vadd.f32 %v6268, 1.0
      %v6451 = vadd.f32 %v6270, 1.0
      %v6452 = vadd.f32 %v6272, 1.0
      %v6453 = vadd.f32 %v6274, 1.0
      %v6454 = vadd.f32 %v6276, 1.0
      %v6455 = vadd.f32 %v6278, 1.0
      %v6456 = vadd.f32 %v6280, 1.0
      %v6457 = vadd.f32 %v6282, 1.0
      %v6458 = vadd.f32 %v6284, 1.0
      %v6459 = vadd.f32 %v6286, 1.0
      %v6460 = vadd.f32 %v6288, 1.0
      %v6461 = vadd.f32 %v6290, 1.0
      %v6462 = vadd.f32 %v6292, 1.0
      %v6463 = vadd.f32 %v6294, 1.0
      %v6464 = vadd.f32 %v6296, 1.0
      %v6465 = vadd.f32 %v6298, 1.0
      %v6466 = vadd.f32 %v6300, 1.0
      %v6467 = vadd.f32 %v6302, 1.0
      %v6468 = vadd.f32 %v6304, 1.0
      %v6469 = vadd.f32 %v6306, 1.0
      %v6470 = vadd.f32 %v6308, 1.0
      %v6471 = vadd.f32 %v6310, 1.0
      %v6472 = vadd.f32 %v6312, 1.0
      %v6473 = vadd.f32 %v6314, 1.0
      %v6474 = vadd.f32 %v6316, 1.0
      %v6475 = vadd.f32 %v6318, 1.0
      %v6476 = vadd.f32 %v6320, 1.0
      %v6477 = vadd.f32 %v6322, 1.0
      %v6478 = vadd.f32 %v6324, 1.0
      %v6479 = vadd.f32 %v6326, 1.0
      %v6480 = vadd.f32 %v6328, 1.0
      %v6481 = vadd.f32 %v6330, 1.0
      %v6482 = vadd.f32 %v6332, 1.0
      %v6483 = vadd.f32 %v6334, 1.0
      %v6484 = vadd.f32 %v6336, 1.0
      %v6485 = vadd.f32 %v6338, 1.0
      %v6486 = vadd.f32 %v6340, 1.0
      %v6487 = vadd.f32 %v6342, 1.0
      %v6488 = vadd.f32 %v6344, 1.0
      %v6489 = vadd.f32 %v6346, 1.0
      %v6490 = vadd.f32 %v6348, 1.0
      %v6491 = vadd.f32 %v6350, 1.0
      %v6492 = vadd.f32 %v6352, 1.0
      %v6493 = vadd.f32 %v6354, 1.0
      %v6494 = vadd.f32 %v6356, 1.0
      %v6495 = vadd.f32 %v6358, 1.0
      %v6496 = vadd.f32 %v6360, 1.0
      %v6497 = vadd.f32 %v6362, 1.0
      %v6498 = vadd.f32 %v6364, 1.0
      %v6499 = vadd.f32 %v6366, 1.0
      %v6500 = vadd.f32 %v6368, 1.0
      %v6501 = vadd.f32 %v6370, 1.0
      %v6502 = vadd.f32 %v6372, 1.0
      %v6503 = vadd.f32 %v6374, 1.0
      %v6504 = vadd.f32 %v6376, 1.0
      %v6505 = vadd.f32 %v6378, 1.0
      %v6506 = vadd.f32 %v6380, 1.0
      %v6507 = vadd.f32 %v6382, 1.0
      %v6508 = vadd.f32 %v6384, 1.0
      %v6509 = vadd.f32 %v6386, 1.0
      %v6510 = vadd.f32 %v6388, 1.0
      %v6511 = vadd.f32 %v6390, 1.0
      %v6512 = vadd.f32 %v6392, 1.0
      %v6513 = vadd.f32 %v6394, 1.0
      %v6514 = vadd.f32 %v6396, 1.0
      %v6515 = vadd.f32 %v6398, 1.0
      %v6516 = vadd.f32 %v6400, 1.0
      %v6517 = vadd.f32 %v6402, 1.0
      %v6518 = vadd.f32 %v6404, 1.0
      %v6519 = vadd.f32 %v6406, 1.0
      %v6520 = vadd.f32 %v6408, 1.0
      %v6521 = vrcp.pop %v6409
      %v6522 = vmul.f32 1.0, %v6521
      %v6523 = vrcp.pop %v6410
      %v6524 = vmul.f32 1.0, %v6523
      %v6525 = vrcp.pop %v6411
      %v6526 = vmul.f32 1.0, %v6525
      %v6527 = vrcp.pop %v6412
      %v6528 = vmul.f32 1.0, %v6527
      %v6529 = vrcp.pop %v6413
      %v6530 = vmul.f32 1.0, %v6529
      %v6531 = vrcp.pop %v6414
      %v6532 = vmul.f32 1.0, %v6531
      %v6533 = vrcp.pop %v6415
      %v6534 = vmul.f32 1.0, %v6533
      %v6535 = vrcp.pop %v6416
      %v6536 = vmul.f32 1.0, %v6535
      %v6537 = vrcp.pop %v6417
      %v6538 = vmul.f32 1.0, %v6537
      %v6539 = vrcp.pop %v6418
      %v6540 = vmul.f32 1.0, %v6539
      %v6541 = vrcp.pop %v6419
      %v6542 = vmul.f32 1.0, %v6541
      %v6543 = vrcp.pop %v6420
      %v6544 = vmul.f32 1.0, %v6543
      %v6545 = vrcp.pop %v6421
      %v6546 = vmul.f32 1.0, %v6545
      %v6547 = vrcp.pop %v6422
      %v6548 = vmul.f32 1.0, %v6547
      %v6549 = vrcp.pop %v6423
      %v6550 = vmul.f32 1.0, %v6549
      %v6551 = vrcp.pop %v6424
      %v6552 = vmul.f32 1.0, %v6551
      %v6553 = vrcp.pop %v6425
      %v6554 = vmul.f32 1.0, %v6553
      %v6555 = vrcp.pop %v6426
      %v6556 = vmul.f32 1.0, %v6555
      %v6557 = vrcp.pop %v6427
      %v6558 = vmul.f32 1.0, %v6557
      %v6559 = vrcp.pop %v6428
      %v6560 = vmul.f32 1.0, %v6559
      %v6561 = vrcp.pop %v6429
      %v6562 = vmul.f32 1.0, %v6561
      %v6563 = vrcp.pop %v6430
      %v6564 = vmul.f32 1.0, %v6563
      %v6565 = vrcp.pop %v6431
      %v6566 = vmul.f32 1.0, %v6565
      %v6567 = vrcp.pop %v6432
      %v6568 = vmul.f32 1.0, %v6567
      %v6569 = vrcp.pop %v6433
      %v6570 = vmul.f32 1.0, %v6569
      %v6571 = vrcp.pop %v6434
      %v6572 = vmul.f32 1.0, %v6571
      %v6573 = vrcp.pop %v6435
      %v6574 = vmul.f32 1.0, %v6573
      %v6575 = vrcp.pop %v6436
      %v6576 = vmul.f32 1.0, %v6575
      %v6577 = vrcp.pop %v6437
      %v6578 = vmul.f32 1.0, %v6577
      %v6579 = vrcp.pop %v6438
      %v6580 = vmul.f32 1.0, %v6579
      %v6581 = vrcp.pop %v6439
      %v6582 = vmul.f32 1.0, %v6581
      %v6583 = vrcp.pop %v6440
      %v6584 = vmul.f32 1.0, %v6583
      %v6585 = vrcp.pop %v6441
      %v6586 = vmul.f32 1.0, %v6585
      %v6587 = vrcp.pop %v6442
      %v6588 = vmul.f32 1.0, %v6587
      %v6589 = vrcp.pop %v6443
      %v6590 = vmul.f32 1.0, %v6589
      %v6591 = vrcp.pop %v6444
      %v6592 = vmul.f32 1.0, %v6591
      %v6593 = vrcp.pop %v6445
      %v6594 = vmul.f32 1.0, %v6593
      %v6595 = vrcp.pop %v6446
      %v6596 = vmul.f32 1.0, %v6595
      %v6597 = vrcp.pop %v6447
      %v6598 = vmul.f32 1.0, %v6597
      %v6599 = vrcp.pop %v6448
      %v6600 = vmul.f32 1.0, %v6599
      %v6601 = vrcp.pop %v6449
      %v6602 = vmul.f32 1.0, %v6601
      %v6603 = vrcp.pop %v6450
      %v6604 = vmul.f32 1.0, %v6603
      %v6605 = vrcp.pop %v6451
      %v6606 = vmul.f32 1.0, %v6605
      %v6607 = vrcp.pop %v6452
      %v6608 = vmul.f32 1.0, %v6607
      %v6609 = vrcp.pop %v6453
      %v6610 = vmul.f32 1.0, %v6609
      %v6611 = vrcp.pop %v6454
      %v6612 = vmul.f32 1.0, %v6611
      %v6613 = vrcp.pop %v6455
      %v6614 = vmul.f32 1.0, %v6613
      %v6615 = vrcp.pop %v6456
      %v6616 = vmul.f32 1.0, %v6615
      %v6617 = vrcp.pop %v6457
      %v6618 = vmul.f32 1.0, %v6617
      %v6619 = vrcp.pop %v6458
      %v6620 = vmul.f32 1.0, %v6619
      %v6621 = vrcp.pop %v6459
      %v6622 = vmul.f32 1.0, %v6621
      %v6623 = vrcp.pop %v6460
      %v6624 = vmul.f32 1.0, %v6623
      %v6625 = vrcp.pop %v6461
      %v6626 = vmul.f32 1.0, %v6625
      %v6627 = vrcp.pop %v6462
      %v6628 = vmul.f32 1.0, %v6627
      %v6629 = vrcp.pop %v6463
      %v6630 = vmul.f32 1.0, %v6629
      %v6631 = vrcp.pop %v6464
      %v6632 = vmul.f32 1.0, %v6631
      %v6633 = vrcp.pop %v6465
      %v6634 = vmul.f32 1.0, %v6633
      %v6635 = vrcp.pop %v6466
      %v6636 = vmul.f32 1.0, %v6635
      %v6637 = vrcp.pop %v6467
      %v6638 = vmul.f32 1.0, %v6637
      %v6639 = vrcp.pop %v6468
      %v6640 = vmul.f32 1.0, %v6639
      %v6641 = vrcp.pop %v6469
      %v6642 = vmul.f32 1.0, %v6641
      %v6643 = vrcp.pop %v6470
      %v6644 = vmul.f32 1.0, %v6643
      %v6645 = vrcp.pop %v6471
      %v6646 = vmul.f32 1.0, %v6645
      %v6647 = vrcp.pop %v6472
      %v6648 = vmul.f32 1.0, %v6647
      %v6649 = vrcp.pop %v6473
      %v6650 = vmul.f32 1.0, %v6649
      %v6651 = vrcp.pop %v6474
      %v6652 = vmul.f32 1.0, %v6651
      %v6653 = vrcp.pop %v6475
      %v6654 = vmul.f32 1.0, %v6653
      %v6655 = vrcp.pop %v6476
      %v6656 = vmul.f32 1.0, %v6655
      %v6657 = vrcp.pop %v6477
      %v6658 = vmul.f32 1.0, %v6657
      %v6659 = vrcp.pop %v6478
      %v6660 = vmul.f32 1.0, %v6659
      %v6661 = vrcp.pop %v6479
      %v6662 = vmul.f32 1.0, %v6661
      %v6663 = vrcp.pop %v6480
      %v6664 = vmul.f32 1.0, %v6663
      %v6665 = vrcp.pop %v6481
      %v6666 = vmul.f32 1.0, %v6665
      %v6667 = vrcp.pop %v6482
      %v6668 = vmul.f32 1.0, %v6667
      %v6669 = vrcp.pop %v6483
      %v6670 = vmul.f32 1.0, %v6669
      %v6671 = vrcp.pop %v6484
      %v6672 = vmul.f32 1.0, %v6671
      %v6673 = vrcp.pop %v6485
      %v6674 = vmul.f32 1.0, %v6673
      %v6675 = vrcp.pop %v6486
      %v6676 = vmul.f32 1.0, %v6675
      %v6677 = vrcp.pop %v6487
      %v6678 = vmul.f32 1.0, %v6677
      %v6679 = vrcp.pop %v6488
      %v6680 = vmul.f32 1.0, %v6679
      %v6681 = vrcp.pop %v6489
      %v6682 = vmul.f32 1.0, %v6681
      %v6683 = vrcp.pop %v6490
      %v6684 = vmul.f32 1.0, %v6683
      %v6685 = vrcp.pop %v6491
      %v6686 = vmul.f32 1.0, %v6685
      %v6687 = vrcp.pop %v6492
      %v6688 = vmul.f32 1.0, %v6687
      %v6689 = vrcp.pop %v6493
      %v6690 = vmul.f32 1.0, %v6689
      %v6691 = vrcp.pop %v6494
      %v6692 = vmul.f32 1.0, %v6691
      %v6693 = vrcp.pop %v6495
      %v6694 = vmul.f32 1.0, %v6693
      %v6695 = vrcp.pop %v6496
      %v6696 = vmul.f32 1.0, %v6695
      %v6697 = vrcp.pop %v6497
      %v6698 = vmul.f32 1.0, %v6697
      %v6699 = vrcp.pop %v6498
      %v6700 = vmul.f32 1.0, %v6699
      %v6701 = vrcp.pop %v6499
      %v6702 = vmul.f32 1.0, %v6701
      %v6703 = vrcp.pop %v6500
      %v6704 = vmul.f32 1.0, %v6703
      %v6705 = vrcp.pop %v6501
      %v6706 = vmul.f32 1.0, %v6705
      %v6707 = vrcp.pop %v6502
      %v6708 = vmul.f32 1.0, %v6707
      %v6709 = vrcp.pop %v6503
      %v6710 = vmul.f32 1.0, %v6709
      %v6711 = vrcp.pop %v6504
      %v6712 = vmul.f32 1.0, %v6711
      %v6713 = vrcp.pop %v6505
      %v6714 = vmul.f32 1.0, %v6713
      %v6715 = vrcp.pop %v6506
      %v6716 = vmul.f32 1.0, %v6715
      %v6717 = vrcp.pop %v6507
      %v6718 = vmul.f32 1.0, %v6717
      %v6719 = vrcp.pop %v6508
      %v6720 = vmul.f32 1.0, %v6719
      %v6721 = vrcp.pop %v6509
      %v6722 = vmul.f32 1.0, %v6721
      %v6723 = vrcp.pop %v6510
      %v6724 = vmul.f32 1.0, %v6723
      %v6725 = vrcp.pop %v6511
      %v6726 = vmul.f32 1.0, %v6725
      %v6727 = vrcp.pop %v6512
      %v6728 = vmul.f32 1.0, %v6727
      %v6729 = vrcp.pop %v6513
      %v6730 = vmul.f32 1.0, %v6729
      %v6731 = vrcp.pop %v6514
      %v6732 = vmul.f32 1.0, %v6731
      %v6733 = vrcp.pop %v6515
      %v6734 = vmul.f32 1.0, %v6733
      %v6735 = vrcp.pop %v6516
      %v6736 = vmul.f32 1.0, %v6735
      %v6737 = vrcp.pop %v6517
      %v6738 = vmul.f32 1.0, %v6737
      %v6739 = vrcp.pop %v6518
      %v6740 = vmul.f32 1.0, %v6739
      %v6741 = vrcp.pop %v6519
      %v6742 = vmul.f32 1.0, %v6741
      %v6743 = vrcp.pop %v6520
      %v6744 = vmul.f32 1.0, %v6743
      %6745 = vst [vmem:[%s511] sm:$0xff] %v6522
      %6746 = vst [vmem:[%s511 + $0x8] sm:$0xff] %v6524
      %6747 = vst [vmem:[%s511 + $0x10] sm:$0xff] %v6526
      %6748 = vst [vmem:[%s511 + $0x18] sm:$0xff] %v6528
      %6749 = vst [vmem:[%s511 + $0x20] sm:$0xff] %v6530
      %6750 = vst [vmem:[%s511 + $0x28] sm:$0xff] %v6532
      %6751 = vst.msk [vmem:[%s511 + $0x30] sm:$0xff] %vm1294, %v6534
      %6752 = vst [vmem:[%s511 + $0x38] sm:$0xff] %v6536
      %6753 = vst [vmem:[%s511 + $0x40] sm:$0xff] %v6538
      %6754 = vst [vmem:[%s511 + $0x48] sm:$0xff] %v6540
      %6755 = vst [vmem:[%s511 + $0x50] sm:$0xff] %v6542
      %6756 = vst [vmem:[%s511 + $0x58] sm:$0xff] %v6544
      %6757 = vst [vmem:[%s511 + $0x60] sm:$0xff] %v6546
      %6758 = vst.msk [vmem:[%s511 + $0x68] sm:$0xff] %vm1294, %v6548
      %6759 = vst [vmem:[%s511 + $0x70] sm:$0xff] %v6550
      %6760 = vst [vmem:[%s511 + $0x78] sm:$0xff] %v6552
      %6761 = vst [vmem:[%s511 + $0x80] sm:$0xff] %v6554
      %6762 = vst [vmem:[%s511 + $0x88] sm:$0xff] %v6556
      %6763 = vst [vmem:[%s511 + $0x90] sm:$0xff] %v6558
      %6764 = vst [vmem:[%s511 + $0x98] sm:$0xff] %v6560
      %6765 = vst.msk [vmem:[%s511 + $0xa0] sm:$0xff] %vm1294, %v6562
      %6766 = vst [vmem:[%s511 + $0xa8] sm:$0xff] %v6564
      %6767 = vst [vmem:[%s511 + $0xb0] sm:$0xff] %v6566
      %6768 = vst [vmem:[%s511 + $0xb8] sm:$0xff] %v6568
      %6769 = vst [vmem:[%s511 + $0xc0] sm:$0xff] %v6570
      %6770 = vst [vmem:[%s511 + $0xc8] sm:$0xff] %v6572
      %6771 = vst [vmem:[%s511 + $0xd0] sm:$0xff] %v6574
      %6772 = vst.msk [vmem:[%s511 + $0xd8] sm:$0xff] %vm1294, %v6576
      %6773 = vst [vmem:[%s511 + $0xe0] sm:$0xff] %v6578
      %6774 = vst [vmem:[%s511 + $0xe8] sm:$0xff] %v6580
      %6775 = vst [vmem:[%s511 + $0xf0] sm:$0xff] %v6582
      %6776 = vst [vmem:[%s511 + $0xf8] sm:$0xff] %v6584
      %6777 = vst [vmem:[%s511 + $0x100] sm:$0xff] %v6586
      %6778 = vst [vmem:[%s511 + $0x108] sm:$0xff] %v6588
      %6779 = vst.msk [vmem:[%s511 + $0x110] sm:$0xff] %vm1294, %v6590
      %6780 = vst [vmem:[%s511 + $0x118] sm:$0xff] %v6592
      %6781 = vst [vmem:[%s511 + $0x120] sm:$0xff] %v6594
      %6782 = vst [vmem:[%s511 + $0x128] sm:$0xff] %v6596
      %6783 = vst [vmem:[%s511 + $0x130] sm:$0xff] %v6598
      %6784 = vst [vmem:[%s511 + $0x138] sm:$0xff] %v6600
      %6785 = vst [vmem:[%s511 + $0x140] sm:$0xff] %v6602
      %6786 = vst.msk [vmem:[%s511 + $0x148] sm:$0xff] %vm1294, %v6604
      %6787 = vst [vmem:[%s511 + $0x150] sm:$0xff] %v6606
      %6788 = vst [vmem:[%s511 + $0x158] sm:$0xff] %v6608
      %6789 = vst [vmem:[%s511 + $0x160] sm:$0xff] %v6610
      %6790 = vst [vmem:[%s511 + $0x168] sm:$0xff] %v6612
      %6791 = vst [vmem:[%s511 + $0x170] sm:$0xff] %v6614
      %6792 = vst [vmem:[%s511 + $0x178] sm:$0xff] %v6616
      %6793 = vst.msk [vmem:[%s511 + $0x180] sm:$0xff] %vm1294, %v6618
      %6794 = vst [vmem:[%s511 + $0x188] sm:$0xff] %v6620
      %6795 = vst [vmem:[%s511 + $0x190] sm:$0xff] %v6622
      %6796 = vst [vmem:[%s511 + $0x198] sm:$0xff] %v6624
      %6797 = vst [vmem:[%s511 + $0x1a0] sm:$0xff] %v6626
      %6798 = vst [vmem:[%s511 + $0x1a8] sm:$0xff] %v6628
      %6799 = vst [vmem:[%s511 + $0x1b0] sm:$0xff] %v6630
      %6800 = vst.msk [vmem:[%s511 + $0x1b8] sm:$0xff] %vm1294, %v6632
      %6801 = vst [vmem:[%s511 + $0x1c0] sm:$0xff] %v6634
      %6802 = vst [vmem:[%s511 + $0x1c8] sm:$0xff] %v6636
      %6803 = vst [vmem:[%s511 + $0x1d0] sm:$0xff] %v6638
      %6804 = vst [vmem:[%s511 + $0x1d8] sm:$0xff] %v6640
      %6805 = vst [vmem:[%s511 + $0x1e0] sm:$0xff] %v6642
      %6806 = vst [vmem:[%s511 + $0x1e8] sm:$0xff] %v6644
      %6807 = vst.msk [vmem:[%s511 + $0x1f0] sm:$0xff] %vm1294, %v6646
      %6808 = vst [vmem:[%s511 + $0x1f8] sm:$0xff] %v6648
      %6809 = vst [vmem:[%s511 + $0x200] sm:$0xff] %v6650
      %6810 = vst [vmem:[%s511 + $0x208] sm:$0xff] %v6652
      %6811 = vst [vmem:[%s511 + $0x210] sm:$0xff] %v6654
      %6812 = vst [vmem:[%s511 + $0x218] sm:$0xff] %v6656
      %6813 = vst [vmem:[%s511 + $0x220] sm:$0xff] %v6658
      %6814 = vst.msk [vmem:[%s511 + $0x228] sm:$0xff] %vm1294, %v6660
      %6815 = vst [vmem:[%s511 + $0x230] sm:$0xff] %v6662
      %6816 = vst [vmem:[%s511 + $0x238] sm:$0xff] %v6664
      %6817 = vst [vmem:[%s511 + $0x240] sm:$0xff] %v6666
      %6818 = vst [vmem:[%s511 + $0x248] sm:$0xff] %v6668
      %6819 = vst [vmem:[%s511 + $0x250] sm:$0xff] %v6670
      %6820 = vst [vmem:[%s511 + $0x258] sm:$0xff] %v6672
      %6821 = vst.msk [vmem:[%s511 + $0x260] sm:$0xff] %vm1294, %v6674
      %6822 = vst [vmem:[%s511 + $0x268] sm:$0xff] %v6676
      %6823 = vst [vmem:[%s511 + $0x270] sm:$0xff] %v6678
      %6824 = vst [vmem:[%s511 + $0x278] sm:$0xff] %v6680
      %6825 = vst [vmem:[%s511 + $0x280] sm:$0xff] %v6682
      %6826 = vst [vmem:[%s511 + $0x288] sm:$0xff] %v6684
      %6827 = vst [vmem:[%s511 + $0x290] sm:$0xff] %v6686
      %6828 = vst.msk [vmem:[%s511 + $0x298] sm:$0xff] %vm1294, %v6688
      %6829 = vst [vmem:[%s511 + $0x2a0] sm:$0xff] %v6690
      %6830 = vst [vmem:[%s511 + $0x2a8] sm:$0xff] %v6692
      %6831 = vst [vmem:[%s511 + $0x2b0] sm:$0xff] %v6694
      %6832 = vst [vmem:[%s511 + $0x2b8] sm:$0xff] %v6696
      %6833 = vst [vmem:[%s511 + $0x2c0] sm:$0xff] %v6698
      %6834 = vst [vmem:[%s511 + $0x2c8] sm:$0xff] %v6700
      %6835 = vst.msk [vmem:[%s511 + $0x2d0] sm:$0xff] %vm1294, %v6702
      %6836 = vst [vmem:[%s511 + $0x2d8] sm:$0xff] %v6704
      %6837 = vst [vmem:[%s511 + $0x2e0] sm:$0xff] %v6706
      %6838 = vst [vmem:[%s511 + $0x2e8] sm:$0xff] %v6708
      %6839 = vst [vmem:[%s511 + $0x2f0] sm:$0xff] %v6710
      %6840 = vst [vmem:[%s511 + $0x2f8] sm:$0xff] %v6712
      %6841 = vst [vmem:[%s511 + $0x300] sm:$0xff] %v6714
      %6842 = vst.msk [vmem:[%s511 + $0x308] sm:$0xff] %vm1294, %v6716
      %6843 = vst [vmem:[%s511 + $0x310] sm:$0xff] %v6718
      %6844 = vst [vmem:[%s511 + $0x318] sm:$0xff] %v6720
      %6845 = vst [vmem:[%s511 + $0x320] sm:$0xff] %v6722
      %6846 = vst [vmem:[%s511 + $0x328] sm:$0xff] %v6724
      %6847 = vst [vmem:[%s511 + $0x330] sm:$0xff] %v6726
      %6848 = vst [vmem:[%s511 + $0x338] sm:$0xff] %v6728
      %6849 = vst.msk [vmem:[%s511 + $0x340] sm:$0xff] %vm1294, %v6730
      %6850 = vst [vmem:[%s511 + $0x348] sm:$0xff] %v6732
      %6851 = vst [vmem:[%s511 + $0x350] sm:$0xff] %v6734
      %6852 = vst [vmem:[%s511 + $0x358] sm:$0xff] %v6736
      %6853 = vst [vmem:[%s511 + $0x360] sm:$0xff] %v6738
      %6854 = vst [vmem:[%s511 + $0x368] sm:$0xff] %v6740
      %6855 = vst [vmem:[%s511 + $0x370] sm:$0xff] %v6742
      %6856 = vst.msk [vmem:[%s511 + $0x378] sm:$0xff] %vm1294, %v6744
      %vm6857 = vcmask 15360
      %6858 = vst.msk [vmem:[%s517] sm:$0xff] %vm6857, %v2942
      %6859 = vst.msk [vmem:[%s517 + $0x8] sm:$0xff] %vm6857, %v2945
      %6860 = vst.msk [vmem:[%s517 + $0x10] sm:$0xff] %vm6857, %v2950
      %6861 = vst.msk [vmem:[%s517 + $0x18] sm:$0xff] %vm6857, %v2953
      %6862 = vst.msk [vmem:[%s517 + $0x20] sm:$0xff] %vm6857, %v2958
      %6863 = vst.msk [vmem:[%s517 + $0x28] sm:$0xff] %vm6857, %v2961
      %6864 = vst.msk [vmem:[%s517 + $0x30] sm:$0xff] %vm6857, %v2966
      %6865 = vst.msk [vmem:[%s517 + $0x38] sm:$0xff] %vm6857, %v2969
      %6866 = vst.msk [vmem:[%s517 + $0x40] sm:$0xff] %vm6857, %v2974
      %6867 = vst.msk [vmem:[%s517 + $0x48] sm:$0xff] %vm6857, %v2977
      %6868 = vst.msk [vmem:[%s517 + $0x50] sm:$0xff] %vm6857, %v2982
      %6869 = vst.msk [vmem:[%s517 + $0x58] sm:$0xff] %vm6857, %v2985
      %6870 = vst.msk [vmem:[%s517 + $0x60] sm:$0xff] %vm6857, %v2990
      %6871 = vst.msk [vmem:[%s517 + $0x68] sm:$0xff] %vm6857, %v2993
      %6872 = vst.msk [vmem:[%s517 + $0x70] sm:$0xff] %vm6857, %v2998
      %6873 = vst.msk [vmem:[%s517 + $0x78] sm:$0xff] %vm6857, %v3001
      %6890 = vrot.lane.b32.xlu0 %v2942, 126
      %v6891 = vpop.permute.xlu0 %6890
      %6892 = vrot.lane.b32.xlu0 %v2945, 126
      %v6893 = vpop.permute.xlu0 %6892
      %6894 = vrot.lane.b32.xlu0 %v2950, 126
      %v6895 = vpop.permute.xlu0 %6894
      %6896 = vrot.lane.b32.xlu0 %v2953, 126
      %v6897 = vpop.permute.xlu0 %6896
      %6898 = vrot.lane.b32.xlu0 %v2958, 126
      %v6899 = vpop.permute.xlu0 %6898
      %6900 = vrot.lane.b32.xlu0 %v2961, 126
      %v6901 = vpop.permute.xlu0 %6900
      %6902 = vrot.lane.b32.xlu0 %v2966, 126
      %v6903 = vpop.permute.xlu0 %6902
      %6904 = vrot.lane.b32.xlu0 %v2969, 126
      %v6905 = vpop.permute.xlu0 %6904
      %6906 = vrot.lane.b32.xlu0 %v2974, 126
      %v6907 = vpop.permute.xlu0 %6906
      %6908 = vrot.lane.b32.xlu0 %v2977, 126
      %v6909 = vpop.permute.xlu0 %6908
      %6910 = vrot.lane.b32.xlu0 %v2982, 126
      %v6911 = vpop.permute.xlu0 %6910
      %6912 = vrot.lane.b32.xlu0 %v2985, 126
      %v6913 = vpop.permute.xlu0 %6912
      %6914 = vrot.lane.b32.xlu0 %v2990, 126
      %v6915 = vpop.permute.xlu0 %6914
      %6916 = vrot.lane.b32.xlu0 %v2993, 126
      %v6917 = vpop.permute.xlu0 %6916
      %6918 = vrot.lane.b32.xlu0 %v2998, 126
      %v6919 = vpop.permute.xlu0 %6918
      %6920 = vrot.lane.b32.xlu0 %v3001, 126
      %v6921 = vpop.permute.xlu0 %6920
      %6938 = vst.msk [vmem:[%s523] sm:$0xff] %vm6857, %v6891
      %6939 = vst.msk [vmem:[%s523 + $0x8] sm:$0xff] %vm6857, %v6893
      %6940 = vst.msk [vmem:[%s523 + $0x10] sm:$0xff] %vm6857, %v6895
      %6941 = vst.msk [vmem:[%s523 + $0x18] sm:$0xff] %vm6857, %v6897
      %6942 = vst.msk [vmem:[%s523 + $0x20] sm:$0xff] %vm6857, %v6899
      %6943 = vst.msk [vmem:[%s523 + $0x28] sm:$0xff] %vm6857, %v6901
      %6944 = vst.msk [vmem:[%s523 + $0x30] sm:$0xff] %vm6857, %v6903
      %6945 = vst.msk [vmem:[%s523 + $0x38] sm:$0xff] %vm6857, %v6905
      %6946 = vst.msk [vmem:[%s523 + $0x40] sm:$0xff] %vm6857, %v6907
      %6947 = vst.msk [vmem:[%s523 + $0x48] sm:$0xff] %vm6857, %v6909
      %6948 = vst.msk [vmem:[%s523 + $0x50] sm:$0xff] %vm6857, %v6911
      %6949 = vst.msk [vmem:[%s523 + $0x58] sm:$0xff] %vm6857, %v6913
      %6950 = vst.msk [vmem:[%s523 + $0x60] sm:$0xff] %vm6857, %v6915
      %6951 = vst.msk [vmem:[%s523 + $0x68] sm:$0xff] %vm6857, %v6917
      %6952 = vst.msk [vmem:[%s523 + $0x70] sm:$0xff] %vm6857, %v6919
      %6953 = vst.msk [vmem:[%s523 + $0x78] sm:$0xff] %vm6857, %v6921
      %s6954 = smul.u32 16, %s26
      %p6955 = scmp.lt.s32.totalorder %s6954, 31
      %s6956 = scalar_select %p6955, %s6954, 31
      %s6957 = smul.addr %s6956, 7
      %s6958 = smul.addr %s6957, 8
      %s6959 = scalar_lea.vmem %s12, %s6958
      %s6960 = smul.u32 16, %s26
      %p6961 = scmp.lt.s32.totalorder %s6960, 31
      %s6962 = scalar_select %p6961, %s6960, 31
      %s6963 = smul.addr %s6962, 8
      %s6964 = scalar_lea.vmem %s13, %s6963
      %s6965 = smul.u32 16, %s26
      %p6966 = scmp.lt.s32.totalorder %s6965, 31
      %s6967 = scalar_select %p6966, %s6965, 31
      %s6968 = smul.addr %s6967, 8
      %s6969 = scalar_lea.vmem %s14, %s6968
      // Predicated region
      $region69: #{_lambda_.1} parent=67 // pred_check
        %p6970 = pneg %p306
      $region70: #{_lambda_.1} parent=67 // pred_check_branch
        %6972 = sbr.rel (%p6970) target = $region72
      $region71: #{_lambda_.1} parent=67 // pred_region
        %s6973 = smul.u32 16, %s26
      $region72: #{_lambda_.1} parent=67 // pred_fallthru
        _
      // Predicated region
      $region73: #{_lambda_.1} parent=67 // pred_check
        %p6974 = pneg %p332
      $region74: #{_lambda_.1} parent=67 // pred_check_branch
        %6976 = sbr.rel (%p6974) target = $region76
      $region75: #{_lambda_.1} parent=67 // pred_region
        %s6977 = smul.u32 16, %s26
      $region76: #{_lambda_.1} parent=67 // pred_fallthru
        _
      // Predicated region
      $region77: #{_lambda_.1} parent=67 // pred_check
        %p6978 = pneg %p358
      $region78: #{_lambda_.1} parent=67 // pred_check_branch
        %6980 = sbr.rel (%p6978) target = $region80
      $region79: #{_lambda_.1} parent=67 // pred_region
        %s6981 = smul.u32 16, %s26
      $region80: #{_lambda_.1} parent=67 // pred_fallthru
        _
    $region68: #{_lambda_.1} parent=5 // pred_fallthru
      _
    %p6982 = scmp.le.s32.totalorder 2, %s21
    // Predicated region
    $region81: #{_lambda_.1} parent=5 // pred_check
      %p6983 = pneg %p6982
    $region82: #{_lambda_.1} parent=5 // pred_check_branch
      %6985 = sbr.rel (%p6983) target = $region84
    $region83: #{_lambda_.1} parent=5 // pred_region
      %s6986 = ssub.s32 %s21, 2
      // Predicated region
      $region85: #{_lambda_.1} parent=83 // pred_check
        %p6987 = pneg %p312
      $region86: #{_lambda_.1} parent=83 // pred_check_branch
        %6989 = sbr.rel (%p6987) target = $region88
      $region87: #{_lambda_.1} parent=83 // pred_region
        %s6990 = smul.u32 16, %s27
        %p6991 = scmp.lt.s32.totalorder %s6990, 31
        %s6992 = scalar_select %p6991, %s6990, 31
        %s6993 = smul.addr %s6992, 7
        %s6994 = smul.addr %s6993, 8
        %s6995 = scalar_lea.vmem %s12, %s6994
      $region88: #{_lambda_.1} parent=83 // pred_fallthru
        _
      // Predicated region
      $region89: #{_lambda_.1} parent=83 // pred_check
        %p6996 = pneg %p338
      $region90: #{_lambda_.1} parent=83 // pred_check_branch
        %6998 = sbr.rel (%p6996) target = $region92
      $region91: #{_lambda_.1} parent=83 // pred_region
        %s6999 = smul.u32 16, %s27
        %p7000 = scmp.lt.s32.totalorder %s6999, 31
        %s7001 = scalar_select %p7000, %s6999, 31
        %s7002 = smul.addr %s7001, 8
        %s7003 = scalar_lea.vmem %s13, %s7002
      $region92: #{_lambda_.1} parent=83 // pred_fallthru
        _
      // Predicated region
      $region93: #{_lambda_.1} parent=83 // pred_check
        %p7004 = pneg %p364
      $region94: #{_lambda_.1} parent=83 // pred_check_branch
        %7006 = sbr.rel (%p7004) target = $region96
      $region95: #{_lambda_.1} parent=83 // pred_region
        %s7007 = smul.u32 16, %s27
        %p7008 = scmp.lt.s32.totalorder %s7007, 31
        %s7009 = scalar_select %p7008, %s7007, 31
        %s7010 = smul.addr %s7009, 8
        %s7011 = scalar_lea.vmem %s14, %s7010
      $region96: #{_lambda_.1} parent=83 // pred_fallthru
        _
    $region84: #{_lambda_.1} parent=5 // pred_fallthru
      _
  $region6: #{_lambda_.1} parent=0 // loop_footer
    %s25 = sadd.s32 1, %s21
  $region7: #{_lambda_.1} parent=0 // loop_footer_branch
    %20 = sbr.rel target = $region3
  $region8: #{_lambda_.1} parent=0 // loop_exit
    _

</llo_original>
